<compile_context>
chip_gen: v7x
topology: tpu7x:2x2x1
jax: 0.10.0
libtpu: 0.0.40
codegen_flags: <defaults>
</compile_context>

<pallas_src>
import functools
import math

import jax
import jax.numpy as jnp
from jax.experimental import pallas as pl
from jax.experimental.pallas import tpu as pltpu

LN_EPS = 1e-5            # PyTorch nn.LayerNorm default
NEG_BIG = -1e30          # finite additive mask (avoids -inf/NaN edge cases)


# ----------------------------- chip probing ----------------------------------
def _device_kind():
    try:
        return jax.devices()[0].device_kind.lower()
    except Exception:
        return ""


def _tpu_vmem_capacity_bytes():
    try:
        return int(pltpu.get_tpu_info().vmem_capacity_bytes)
    except Exception:
        pass
    return (64 << 20) if "v7" in _device_kind() else (128 << 20)


def _vmem_limit_bytes():
    # ~25% headroom below physical VMEM, capped at 96 MiB (v5e/v6e); ~48 MiB on v7x.
    return min(_tpu_vmem_capacity_bytes() * 3 // 4, 96 << 20)


def _pick_batch_block(B):
    # v7x (2 TensorCores, 64 MiB VMEM): smaller blocks, prefer >=2 grid steps so
    # megacore sharding applies.  v5e/v6e (1 TC, 128 MiB): biggest block that fits.
    small_vmem = _tpu_vmem_capacity_bytes() <= (64 << 20)
    max_bt = 4 if small_vmem else 16
    divs = [d for d in range(1, min(B, max_bt) + 1) if B % d == 0]
    if "v7" in _device_kind():
        multi = [d for d in divs if B // d >= 2]
        if multi:
            return max(multi)
    return max(divs)


def _layernorm(x, gamma, beta):
    mu = jnp.mean(x, axis=-1, keepdims=True)
    var = jnp.mean(jnp.square(x - mu), axis=-1, keepdims=True)
    return (x - mu) * jax.lax.rsqrt(var + LN_EPS) * gamma + beta


# ----------------------------- kernels ----------------------------------------
def clip_layer_kernel(x_ref, ln1_g, ln1_b, wqkv, bqkv, wo, bo,
                      ln2_g, ln2_b, w1, b1, w2, b2, o_ref, *, n_head):
    Bt, T, D = x_ref.shape
    H = n_head
    dh = D // H
    scale = 1.0 / math.sqrt(dh)
    bf16 = jnp.bfloat16

    x = x_ref[...].reshape(Bt * T, D)                        # (Bt*T, D) f32

    # ---------------- causal multi-head self-attention ----------------
    h = _layernorm(x, ln1_g[...], ln1_b[...])
    qkv = jnp.dot(h.astype(bf16), wqkv[...],
                  preferred_element_type=jnp.float32) + bqkv[...]
    q = (qkv[:, :D] * scale).astype(bf16).reshape(Bt, T, D)
    k = qkv[:, D:2 * D].astype(bf16).reshape(Bt, T, D)
    v = qkv[:, 2 * D:].astype(bf16).reshape(Bt, T, D)

    rows = jax.lax.broadcasted_iota(jnp.int32, (T, T), 0)
    cols = jax.lax.broadcasted_iota(jnp.int32, (T, T), 1)
    bias = jnp.where(cols > rows, NEG_BIG, 0.0)[None]        # (1, T, T) f32

    # Per-head, batched over Bt (single-batch-dim einsums).  No VMEM scratch:
    # head outputs are merged by one lane concatenate feeding wo.
    head_outs = []
    for hd in range(H):
        sl = slice(hd * dh, (hd + 1) * dh)
        s = jnp.einsum("bqd,bkd->bqk", q[:, :, sl], k[:, :, sl],
                       preferred_element_type=jnp.float32) + bias
        m = jnp.max(s, axis=-1, keepdims=True)
        e = jnp.exp(s - m)
        l = jnp.sum(e, axis=-1, keepdims=True)
        p = (e * pl.reciprocal(l, approx=True)).astype(bf16)
        head_outs.append(jnp.einsum("bqk,bkd->bqd", p, v[:, :, sl],
                                    preferred_element_type=jnp.float32))
    attn = jnp.concatenate(head_outs, axis=-1).reshape(Bt * T, D)

    x = x + jnp.dot(attn.astype(bf16), wo[...],
                    preferred_element_type=jnp.float32) + bo[...]

    # ---------------- MLP block (quick-GELU) ----------------
    h = _layernorm(x, ln2_g[...], ln2_b[...])
    h = jnp.dot(h.astype(bf16), w1[...],
                preferred_element_type=jnp.float32) + b1[...]
    h = h * jax.nn.sigmoid(1.702 * h)
    h = jnp.dot(h.astype(bf16), w2[...],
                preferred_element_type=jnp.float32) + b2[...]
    o_ref[...] = (x + h).reshape(Bt, T, D)


def layernorm_kernel(x_ref, g_ref, b_ref, o_ref):
    Bt, T, D = x_ref.shape
    x = x_ref[...].reshape(Bt * T, D)
    o_ref[...] = _layernorm(x, g_ref[...], b_ref[...]).reshape(Bt, T, D)


# ----------------------------- wrappers ----------------------------------------
@functools.lru_cache(maxsize=None)
def _build_layer_call(B, Bt, T, D, n_head, single_buffer_weights):
    weight_shapes = [
        (1, D), (1, D),          # ln1 gamma / beta
        (D, 3 * D), (1, 3 * D),  # wqkv (bf16), bqkv
        (D, D), (1, D),          # wo (bf16), bo
        (1, D), (1, D),          # ln2 gamma / beta
        (D, 4 * D), (1, 4 * D),  # w1 (bf16), b1
        (4 * D, D), (1, D),      # w2 (bf16), b2
    ]

    def const_spec(shape):
        idx = lambda b, _n=len(shape): (0,) * _n
        if single_buffer_weights:
            # Block index never changes across the batch grid -> one resident copy.
            return pl.BlockSpec(shape, idx, pipeline_mode=pl.Buffered(1))
        return pl.BlockSpec(shape, idx)

    in_specs = [pl.BlockSpec((Bt, T, D), lambda b: (b, 0, 0))]
    in_specs += [const_spec(s) for s in weight_shapes]

    flops = 2 * B * T * D * (12 * D) + 4 * B * T * T * D
    transcendentals = B * n_head * T * T + B * T * 4 * D
    w_bytes = 2 * (12 * D * D) + 4 * (10 * D)
    bytes_accessed = w_bytes + 3 * B * T * D * 4

    return pl.pallas_call(
        functools.partial(clip_layer_kernel, n_head=n_head),
        out_shape=jax.ShapeDtypeStruct((B, T, D), jnp.float32),
        grid=(B // Bt,),
        in_specs=in_specs,
        out_specs=pl.BlockSpec((Bt, T, D), lambda b: (b, 0, 0)),
        compiler_params=pltpu.CompilerParams(
            dimension_semantics=("parallel",),
            vmem_limit_bytes=_vmem_limit_bytes()),
        cost_estimate=pl.CostEstimate(flops=int(flops),
                                      transcendentals=int(transcendentals),
                                      bytes_accessed=int(bytes_accessed)),
    )


# Probed once: does this Pallas build accept pipeline_mode=pl.Buffered(1)?
# (No input donation anywhere, so retrying after a failed probe is safe and a
# genuine failure in the fallback still surfaces.)
_SINGLE_BUFFER_OK = None


def clip_layer(x, p, n_head, Bt):
    global _SINGLE_BUFFER_OK
    B, T, D = x.shape
    weights = (p["ln1_g"], p["ln1_b"], p["wqkv"], p["bqkv"], p["wo"], p["bo"],
               p["ln2_g"], p["ln2_b"], p["w1"], p["b1"], p["w2"], p["b2"])
    if _SINGLE_BUFFER_OK is None:
        try:
            out = _build_layer_call(B, Bt, T, D, n_head, True)(x, *weights)
            jax.block_until_ready(out)
            _SINGLE_BUFFER_OK = True
            return out
        except Exception:
            _SINGLE_BUFFER_OK = False
    return _build_layer_call(B, Bt, T, D, n_head, _SINGLE_BUFFER_OK)(x, *weights)


def final_layernorm(x, g, b, Bt):
    # TODO(synk): could be fused into the last transformer layer's epilogue to
    # avoid one extra HBM round trip; kept as a separate blocked kernel here.
    B, T, D = x.shape
    return pl.pallas_call(
        layernorm_kernel,
        out_shape=jax.ShapeDtypeStruct((B, T, D), jnp.float32),
        grid=(B // Bt,),
        in_specs=[pl.BlockSpec((Bt, T, D), lambda i: (i, 0, 0)),
                  pl.BlockSpec((1, D), lambda i: (0, 0)),
                  pl.BlockSpec((1, D), lambda i: (0, 0))],
        out_specs=pl.BlockSpec((Bt, T, D), lambda i: (i, 0, 0)),
        compiler_params=pltpu.CompilerParams(
            dimension_semantics=("parallel",)),
    )(x, g, b)


def clip_forward(tokens, params, n_head):
    # Embedding gather + positional add: plain-JAX glue (HBM gather, not the hot path).
    tokens = tokens.astype(jnp.int32)
    state = params["tok_emb"][tokens] + params["pos_emb"][None]   # (B, T, D)
    B, T, D = state.shape

    # Pad the token axis to a sublane multiple (77 -> 80 at CLIP scale) so the
    # score / activation tiles are aligned; the causal mask keeps padded keys
    # out of real rows, and we unpad after the final LayerNorm.
    Tp = ((T + 7) // 8) * 8
    if Tp != T:
        state = jnp.pad(state, ((0, 0), (0, Tp - T), (0, 0)))

    Bt = _pick_batch_block(B)
    for layer_p in params["layers"]:
        state = clip_layer(state, layer_p, n_head, Bt)
    out = final_layernorm(state, params["ln_f_g"], params["ln_f_b"], Bt)
    return out[:, :T, :]


# ----------------------------- reference (pure JAX) ---------------------------
def _clip_layer_ref(x, p, n_head):
    B, T, D = x.shape
    dh = D // n_head
    scale = 1.0 / math.sqrt(dh)
    bf16 = jnp.bfloat16

    residue = x
    h = _layernorm(x, p["ln1_g"], p["ln1_b"])
    qkv = jnp.dot(h.reshape(B * T, D).astype(bf16), p["wqkv"],
                  preferred_element_type=jnp.float32) + p["bqkv"]
    q = (qkv[:, :D] * scale).astype(bf16).reshape(B, T, n_head, dh)
    k = qkv[:, D:2 * D].astype(bf16).reshape(B, T, n_head, dh)
    v = qkv[:, 2 * D:].astype(bf16).reshape(B, T, n_head, dh)
    s = jnp.einsum("bqhd,bkhd->bhqk", q, k, preferred_element_type=jnp.float32)
    mask = jnp.triu(jnp.ones((T, T), bool), k=1)
    s = s + jnp.where(mask, NEG_BIG, 0.0)
    p_attn = jax.nn.softmax(s, axis=-1)
    o = jnp.einsum("bhqk,bkhd->bqhd", p_attn.astype(bf16), v,
                   preferred_element_type=jnp.float32).reshape(B * T, D)
    o = jnp.dot(o.astype(bf16), p["wo"],
                preferred_element_type=jnp.float32) + p["bo"]
    x = o.reshape(B, T, D) + residue

    residue = x
    h = _layernorm(x, p["ln2_g"], p["ln2_b"])
    h = jnp.dot(h.reshape(B * T, D).astype(bf16), p["w1"],
                preferred_element_type=jnp.float32) + p["b1"]
    h = h * jax.nn.sigmoid(1.702 * h)
    h = jnp.dot(h.astype(bf16), p["w2"],
                preferred_element_type=jnp.float32) + p["b2"]
    return h.reshape(B, T, D) + residue


def clip_forward_ref(tokens, params, n_head):
    state = params["tok_emb"][tokens.astype(jnp.int32)] + params["pos_emb"][None]
    for layer_p in params["layers"]:
        state = _clip_layer_ref(state, layer_p, n_head)
    return _layernorm(state, params["ln_f_g"], params["ln_f_b"])


# ----------------------------- params ----------------------------------------
def init_params(key, n_vocab, n_embd, n_tokens, n_layers):
    D = n_embd
    std = 0.02
    keys = jax.random.split(key, 2 + n_layers)
    nrm = lambda k, shp, dt=jnp.float32: (std * jax.random.normal(k, shp)).astype(dt)
    bf16 = jnp.bfloat16
    params = {
        "tok_emb": nrm(keys[0], (n_vocab, D)),
        "pos_emb": nrm(keys[1], (n_tokens, D)),
        "ln_f_g": jnp.ones((1, D), jnp.float32),
        "ln_f_b": jnp.zeros((1, D), jnp.float32),
        "layers": [],
    }
    for l in range(n_layers):
        kk = jax.random.split(keys[2 + l], 6)
        params["layers"].append({
            "ln1_g": jnp.ones((1, D), jnp.float32),
            "ln1_b": jnp.zeros((1, D), jnp.float32),
            "wqkv": nrm(kk[0], (D, 3 * D), bf16),     # bf16 MXU weights
            "bqkv": nrm(kk[1], (1, 3 * D)),
            "wo": nrm(kk[2], (D, D), bf16),
            "bo": nrm(kk[3], (1, D)),
            "ln2_g": jnp.ones((1, D), jnp.float32),
            "ln2_b": jnp.zeros((1, D), jnp.float32),
            "w1": nrm(kk[4], (D, 4 * D), bf16),
            "b1": jnp.zeros((1, 4 * D), jnp.float32),
            "w2": nrm(kk[5], (4 * D, D), bf16),
            "b2": jnp.zeros((1, D), jnp.float32),
        })
    return params


# ----------------------------- main -------------------------------------------
if __name__ == "__main__":
    # Small, module-consistent shapes (the real CLIP uses 49408/768/77/12/12).
    N_VOCAB, N_EMBD, N_TOKENS, N_LAYERS, N_HEAD = 100, 64, 8, 2, 4
    B = 2

    key = jax.random.PRNGKey(0)
    k_params, k_tok = jax.random.split(key)
    params = init_params(k_params, N_VOCAB, N_EMBD, N_TOKENS, N_LAYERS)
    tokens = jax.random.randint(k_tok, (B, N_TOKENS), 0, N_VOCAB, dtype=jnp.int32)

    out = clip_forward(tokens, params, N_HEAD)
    out = jax.block_until_ready(out)

    ref = clip_forward_ref(tokens, params, N_HEAD)
    assert out.shape == (B, N_TOKENS, N_EMBD)
    assert jnp.allclose(out, ref, atol=1e-2, rtol=1e-2), "kernel/reference mismatch"

    print("KERNEL_OK")
</pallas_src>

<mosaic_0001>
module attributes {stable_mosaic.version = 11 : i64} {
  func.func @clip_layer_kernel(%arg0: i32, %arg1: memref<2x8x64xf32, #tpu.memory_space<vmem>>, %arg2: memref<1x64xf32, #tpu.memory_space<vmem>>, %arg3: memref<1x64xf32, #tpu.memory_space<vmem>>, %arg4: memref<64x192xbf16, #tpu.memory_space<vmem>>, %arg5: memref<1x192xf32, #tpu.memory_space<vmem>>, %arg6: memref<64x64xbf16, #tpu.memory_space<vmem>>, %arg7: memref<1x64xf32, #tpu.memory_space<vmem>>, %arg8: memref<1x64xf32, #tpu.memory_space<vmem>>, %arg9: memref<1x64xf32, #tpu.memory_space<vmem>>, %arg10: memref<64x256xbf16, #tpu.memory_space<vmem>>, %arg11: memref<1x256xf32, #tpu.memory_space<vmem>>, %arg12: memref<256x64xbf16, #tpu.memory_space<vmem>>, %arg13: memref<1x64xf32, #tpu.memory_space<vmem>>, %arg14: memref<2x8x64xf32, #tpu.memory_space<vmem>>) attributes {dimension_semantics = [#tpu.dimension_semantics<parallel>], iteration_bounds = array<i64: 1>, scalar_prefetch = 0 : i64, scratch_operands = 0 : i64, tpu.core_type = #tpu.core_type<tc>, window_params = [{transform_indices = @transform_0, window_bounds = array<i64: 2, 8, 64>}, {pipeline_mode = #tpu.pipeline_mode<synchronous>, transform_indices = @transform_1, window_bounds = array<i64: 1, 64>}, {pipeline_mode = #tpu.pipeline_mode<synchronous>, transform_indices = @transform_2, window_bounds = array<i64: 1, 64>}, {pipeline_mode = #tpu.pipeline_mode<synchronous>, transform_indices = @transform_3, window_bounds = array<i64: 64, 192>}, {pipeline_mode = #tpu.pipeline_mode<synchronous>, transform_indices = @transform_4, window_bounds = array<i64: 1, 192>}, {pipeline_mode = #tpu.pipeline_mode<synchronous>, transform_indices = @transform_5, window_bounds = array<i64: 64, 64>}, {pipeline_mode = #tpu.pipeline_mode<synchronous>, transform_indices = @transform_6, window_bounds = array<i64: 1, 64>}, {pipeline_mode = #tpu.pipeline_mode<synchronous>, transform_indices = @transform_7, window_bounds = array<i64: 1, 64>}, {pipeline_mode = #tpu.pipeline_mode<synchronous>, transform_indices = @transform_8, window_bounds = array<i64: 1, 64>}, {pipeline_mode = #tpu.pipeline_mode<synchronous>, transform_indices = @transform_9, window_bounds = array<i64: 64, 256>}, {pipeline_mode = #tpu.pipeline_mode<synchronous>, transform_indices = @transform_10, window_bounds = array<i64: 1, 256>}, {pipeline_mode = #tpu.pipeline_mode<synchronous>, transform_indices = @transform_11, window_bounds = array<i64: 256, 64>}, {pipeline_mode = #tpu.pipeline_mode<synchronous>, transform_indices = @transform_12, window_bounds = array<i64: 1, 64>}, {transform_indices = @transform_13, window_bounds = array<i64: 2, 8, 64>}]} {
    %c0 = arith.constant 0 : index
    %c0_0 = arith.constant 0 : index
    %c0_1 = arith.constant 0 : index
    %0 = vector.load %arg1[%c0, %c0_0, %c0_1] : memref<2x8x64xf32, #tpu.memory_space<vmem>>, vector<2x8x64xf32>
    %1 = vector.shape_cast %0 : vector<2x8x64xf32> to vector<16x64xf32>
    %c0_2 = arith.constant 0 : index
    %c0_3 = arith.constant 0 : index
    %2 = vector.load %arg2[%c0_2, %c0_3] : memref<1x64xf32, #tpu.memory_space<vmem>>, vector<1x64xf32>
    %c0_4 = arith.constant 0 : index
    %c0_5 = arith.constant 0 : index
    %3 = vector.load %arg3[%c0_4, %c0_5] : memref<1x64xf32, #tpu.memory_space<vmem>>, vector<1x64xf32>
    %cst = arith.constant dense<0.000000e+00> : vector<16xf32>
    %4 = vector.multi_reduction <add>, %1, %cst [1] : vector<16x64xf32> to vector<16xf32>
    %5 = vector.shape_cast %4 : vector<16xf32> to vector<16x1xf32>
    %cst_6 = arith.constant 6.400000e+01 : f32
    %6 = vector.broadcast %cst_6 : f32 to vector<16x1xf32>
    %7 = arith.divf %5, %6 : vector<16x1xf32>
    %8 = vector.broadcast %7 : vector<16x1xf32> to vector<16x64xf32>
    %9 = arith.subf %1, %8 : vector<16x64xf32>
    %10 = arith.mulf %9, %9 : vector<16x64xf32>
    %cst_7 = arith.constant dense<0.000000e+00> : vector<16xf32>
    %11 = vector.multi_reduction <add>, %10, %cst_7 [1] : vector<16x64xf32> to vector<16xf32>
    %12 = vector.shape_cast %11 : vector<16xf32> to vector<16x1xf32>
    %cst_8 = arith.constant 6.400000e+01 : f32
    %13 = vector.broadcast %cst_8 : f32 to vector<16x1xf32>
    %14 = arith.divf %12, %13 : vector<16x1xf32>
    %15 = vector.broadcast %7 : vector<16x1xf32> to vector<16x64xf32>
    %16 = arith.subf %1, %15 : vector<16x64xf32>
    %cst_9 = arith.constant 9.99999974E-6 : f32
    %17 = vector.broadcast %cst_9 : f32 to vector<16x1xf32>
    %18 = arith.addf %14, %17 : vector<16x1xf32>
    %19 = math.rsqrt %18 : vector<16x1xf32>
    %20 = vector.broadcast %19 : vector<16x1xf32> to vector<16x64xf32>
    %21 = arith.mulf %16, %20 : vector<16x64xf32>
    %22 = vector.broadcast %2 : vector<1x64xf32> to vector<16x64xf32>
    %23 = arith.mulf %21, %22 : vector<16x64xf32>
    %24 = vector.broadcast %3 : vector<1x64xf32> to vector<16x64xf32>
    %25 = arith.addf %23, %24 : vector<16x64xf32>
    %26 = arith.truncf %25 : vector<16x64xf32> to vector<16x64xbf16>
    %c0_10 = arith.constant 0 : index
    %c0_11 = arith.constant 0 : index
    %27 = vector.load %arg4[%c0_10, %c0_11] : memref<64x192xbf16, #tpu.memory_space<vmem>>, vector<64x192xbf16>
    %cst_12 = arith.constant dense<0.000000e+00> : vector<16x192xf32>
    %28 = tpu.matmul %26, %27, %cst_12 {dimension_numbers = #tpu.dot_dimension_numbers<[1], [0], [0], [1], [0, 0, 1, 1], [], []>} : vector<16x64xbf16>, vector<64x192xbf16>, vector<16x192xf32> -> vector<16x192xf32>
    %c0_13 = arith.constant 0 : index
    %c0_14 = arith.constant 0 : index
    %29 = vector.load %arg5[%c0_13, %c0_14] : memref<1x192xf32, #tpu.memory_space<vmem>>, vector<1x192xf32>
    %30 = vector.broadcast %29 : vector<1x192xf32> to vector<16x192xf32>
    %31 = arith.addf %28, %30 : vector<16x192xf32>
    %32 = vector.extract_strided_slice %31 {offsets = [0, 0], sizes = [16, 64], strides = [1, 1]} : vector<16x192xf32> to vector<16x64xf32>
    %cst_15 = arith.constant 2.500000e-01 : f32
    %33 = vector.broadcast %cst_15 : f32 to vector<16x64xf32>
    %34 = arith.mulf %32, %33 : vector<16x64xf32>
    %35 = arith.truncf %34 : vector<16x64xf32> to vector<16x64xbf16>
    %36 = vector.shape_cast %35 : vector<16x64xbf16> to vector<2x8x64xbf16>
    %37 = vector.extract_strided_slice %31 {offsets = [0, 64], sizes = [16, 64], strides = [1, 1]} : vector<16x192xf32> to vector<16x64xf32>
    %38 = arith.truncf %37 : vector<16x64xf32> to vector<16x64xbf16>
    %39 = vector.shape_cast %38 : vector<16x64xbf16> to vector<2x8x64xbf16>
    %40 = vector.extract_strided_slice %31 {offsets = [0, 128], sizes = [16, 64], strides = [1, 1]} : vector<16x192xf32> to vector<16x64xf32>
    %41 = arith.truncf %40 : vector<16x64xf32> to vector<16x64xbf16>
    %42 = vector.shape_cast %41 : vector<16x64xbf16> to vector<2x8x64xbf16>
    %43 = tpu.iota {dimensions = array<i32: 0>} : vector<8x8xi32>
    %44 = tpu.iota {dimensions = array<i32: 1>} : vector<8x8xi32>
    %45 = arith.cmpi sgt, %44, %43 : vector<8x8xi32>
    %cst_16 = arith.constant -1.000000e+30 : f32
    %cst_17 = arith.constant 0.000000e+00 : f32
    %46 = vector.broadcast %cst_16 : f32 to vector<8x8xf32>
    %47 = vector.broadcast %cst_17 : f32 to vector<8x8xf32>
    %48 = arith.select %45, %46, %47 : vector<8x8xi1>, vector<8x8xf32>
    %49 = vector.shape_cast %48 : vector<8x8xf32> to vector<1x8x8xf32>
    %50 = vector.extract_strided_slice %36 {offsets = [0, 0, 0], sizes = [2, 8, 16], strides = [1, 1, 1]} : vector<2x8x64xbf16> to vector<2x8x16xbf16>
    %51 = vector.extract_strided_slice %39 {offsets = [0, 0, 0], sizes = [2, 8, 16], strides = [1, 1, 1]} : vector<2x8x64xbf16> to vector<2x8x16xbf16>
    "tpu.trace_start"() <{level = 10 : i32, message = "bqd,bkd->bqk"}> : () -> ()
    %cst_18 = arith.constant dense<0.000000e+00> : vector<2x8x8xf32>
    %52 = tpu.matmul %50, %51, %cst_18 {dimension_numbers = #tpu.dot_dimension_numbers<[2], [2], [1], [1], [0, 0, 0, 1, 1, 1], [0], [0]>} : vector<2x8x16xbf16>, vector<2x8x16xbf16>, vector<2x8x8xf32> -> vector<2x8x8xf32>
    "tpu.trace_stop"() : () -> ()
    %53 = vector.broadcast %49 : vector<1x8x8xf32> to vector<2x8x8xf32>
    %54 = arith.addf %52, %53 : vector<2x8x8xf32>
    %cst_19 = arith.constant dense<0xFF800000> : vector<2x8xf32>
    %55 = vector.multi_reduction <maximumf>, %54, %cst_19 [2] : vector<2x8x8xf32> to vector<2x8xf32>
    %56 = vector.shape_cast %55 : vector<2x8xf32> to vector<2x8x1xf32>
    %57 = vector.broadcast %56 : vector<2x8x1xf32> to vector<2x8x8xf32>
    %58 = arith.subf %54, %57 : vector<2x8x8xf32>
    %59 = math.exp %58 : vector<2x8x8xf32>
    %cst_20 = arith.constant dense<0.000000e+00> : vector<2x8xf32>
    %60 = vector.multi_reduction <add>, %59, %cst_20 [2] : vector<2x8x8xf32> to vector<2x8xf32>
    %61 = vector.shape_cast %60 : vector<2x8xf32> to vector<2x8x1xf32>
    %62 = tpu.reciprocal %61 {approx = true} : vector<2x8x1xf32> -> vector<2x8x1xf32>
    %63 = vector.broadcast %62 : vector<2x8x1xf32> to vector<2x8x8xf32>
    %64 = arith.mulf %59, %63 : vector<2x8x8xf32>
    %65 = arith.truncf %64 : vector<2x8x8xf32> to vector<2x8x8xbf16>
    %66 = vector.extract_strided_slice %42 {offsets = [0, 0, 0], sizes = [2, 8, 16], strides = [1, 1, 1]} : vector<2x8x64xbf16> to vector<2x8x16xbf16>
    "tpu.trace_start"() <{level = 10 : i32, message = "bqk,bkd->bqd"}> : () -> ()
    %cst_21 = arith.constant dense<0.000000e+00> : vector<2x8x16xf32>
    %67 = tpu.matmul %65, %66, %cst_21 {dimension_numbers = #tpu.dot_dimension_numbers<[2], [1], [1], [2], [0, 0, 0, 1, 1, 2], [0], [0]>} : vector<2x8x8xbf16>, vector<2x8x16xbf16>, vector<2x8x16xf32> -> vector<2x8x16xf32>
    "tpu.trace_stop"() : () -> ()
    %68 = vector.extract_strided_slice %36 {offsets = [0, 0, 16], sizes = [2, 8, 16], strides = [1, 1, 1]} : vector<2x8x64xbf16> to vector<2x8x16xbf16>
    %69 = vector.extract_strided_slice %39 {offsets = [0, 0, 16], sizes = [2, 8, 16], strides = [1, 1, 1]} : vector<2x8x64xbf16> to vector<2x8x16xbf16>
    "tpu.trace_start"() <{level = 10 : i32, message = "bqd,bkd->bqk"}> : () -> ()
    %cst_22 = arith.constant dense<0.000000e+00> : vector<2x8x8xf32>
    %70 = tpu.matmul %68, %69, %cst_22 {dimension_numbers = #tpu.dot_dimension_numbers<[2], [2], [1], [1], [0, 0, 0, 1, 1, 1], [0], [0]>} : vector<2x8x16xbf16>, vector<2x8x16xbf16>, vector<2x8x8xf32> -> vector<2x8x8xf32>
    "tpu.trace_stop"() : () -> ()
    %71 = vector.broadcast %49 : vector<1x8x8xf32> to vector<2x8x8xf32>
    %72 = arith.addf %70, %71 : vector<2x8x8xf32>
    %cst_23 = arith.constant dense<0xFF800000> : vector<2x8xf32>
    %73 = vector.multi_reduction <maximumf>, %72, %cst_23 [2] : vector<2x8x8xf32> to vector<2x8xf32>
    %74 = vector.shape_cast %73 : vector<2x8xf32> to vector<2x8x1xf32>
    %75 = vector.broadcast %74 : vector<2x8x1xf32> to vector<2x8x8xf32>
    %76 = arith.subf %72, %75 : vector<2x8x8xf32>
    %77 = math.exp %76 : vector<2x8x8xf32>
    %cst_24 = arith.constant dense<0.000000e+00> : vector<2x8xf32>
    %78 = vector.multi_reduction <add>, %77, %cst_24 [2] : vector<2x8x8xf32> to vector<2x8xf32>
    %79 = vector.shape_cast %78 : vector<2x8xf32> to vector<2x8x1xf32>
    %80 = tpu.reciprocal %79 {approx = true} : vector<2x8x1xf32> -> vector<2x8x1xf32>
    %81 = vector.broadcast %80 : vector<2x8x1xf32> to vector<2x8x8xf32>
    %82 = arith.mulf %77, %81 : vector<2x8x8xf32>
    %83 = arith.truncf %82 : vector<2x8x8xf32> to vector<2x8x8xbf16>
    %84 = vector.extract_strided_slice %42 {offsets = [0, 0, 16], sizes = [2, 8, 16], strides = [1, 1, 1]} : vector<2x8x64xbf16> to vector<2x8x16xbf16>
    "tpu.trace_start"() <{level = 10 : i32, message = "bqk,bkd->bqd"}> : () -> ()
    %cst_25 = arith.constant dense<0.000000e+00> : vector<2x8x16xf32>
    %85 = tpu.matmul %83, %84, %cst_25 {dimension_numbers = #tpu.dot_dimension_numbers<[2], [1], [1], [2], [0, 0, 0, 1, 1, 2], [0], [0]>} : vector<2x8x8xbf16>, vector<2x8x16xbf16>, vector<2x8x16xf32> -> vector<2x8x16xf32>
    "tpu.trace_stop"() : () -> ()
    %86 = vector.extract_strided_slice %36 {offsets = [0, 0, 32], sizes = [2, 8, 16], strides = [1, 1, 1]} : vector<2x8x64xbf16> to vector<2x8x16xbf16>
    %87 = vector.extract_strided_slice %39 {offsets = [0, 0, 32], sizes = [2, 8, 16], strides = [1, 1, 1]} : vector<2x8x64xbf16> to vector<2x8x16xbf16>
    "tpu.trace_start"() <{level = 10 : i32, message = "bqd,bkd->bqk"}> : () -> ()
    %cst_26 = arith.constant dense<0.000000e+00> : vector<2x8x8xf32>
    %88 = tpu.matmul %86, %87, %cst_26 {dimension_numbers = #tpu.dot_dimension_numbers<[2], [2], [1], [1], [0, 0, 0, 1, 1, 1], [0], [0]>} : vector<2x8x16xbf16>, vector<2x8x16xbf16>, vector<2x8x8xf32> -> vector<2x8x8xf32>
    "tpu.trace_stop"() : () -> ()
    %89 = vector.broadcast %49 : vector<1x8x8xf32> to vector<2x8x8xf32>
    %90 = arith.addf %88, %89 : vector<2x8x8xf32>
    %cst_27 = arith.constant dense<0xFF800000> : vector<2x8xf32>
    %91 = vector.multi_reduction <maximumf>, %90, %cst_27 [2] : vector<2x8x8xf32> to vector<2x8xf32>
    %92 = vector.shape_cast %91 : vector<2x8xf32> to vector<2x8x1xf32>
    %93 = vector.broadcast %92 : vector<2x8x1xf32> to vector<2x8x8xf32>
    %94 = arith.subf %90, %93 : vector<2x8x8xf32>
    %95 = math.exp %94 : vector<2x8x8xf32>
    %cst_28 = arith.constant dense<0.000000e+00> : vector<2x8xf32>
    %96 = vector.multi_reduction <add>, %95, %cst_28 [2] : vector<2x8x8xf32> to vector<2x8xf32>
    %97 = vector.shape_cast %96 : vector<2x8xf32> to vector<2x8x1xf32>
    %98 = tpu.reciprocal %97 {approx = true} : vector<2x8x1xf32> -> vector<2x8x1xf32>
    %99 = vector.broadcast %98 : vector<2x8x1xf32> to vector<2x8x8xf32>
    %100 = arith.mulf %95, %99 : vector<2x8x8xf32>
    %101 = arith.truncf %100 : vector<2x8x8xf32> to vector<2x8x8xbf16>
    %102 = vector.extract_strided_slice %42 {offsets = [0, 0, 32], sizes = [2, 8, 16], strides = [1, 1, 1]} : vector<2x8x64xbf16> to vector<2x8x16xbf16>
    "tpu.trace_start"() <{level = 10 : i32, message = "bqk,bkd->bqd"}> : () -> ()
    %cst_29 = arith.constant dense<0.000000e+00> : vector<2x8x16xf32>
    %103 = tpu.matmul %101, %102, %cst_29 {dimension_numbers = #tpu.dot_dimension_numbers<[2], [1], [1], [2], [0, 0, 0, 1, 1, 2], [0], [0]>} : vector<2x8x8xbf16>, vector<2x8x16xbf16>, vector<2x8x16xf32> -> vector<2x8x16xf32>
    "tpu.trace_stop"() : () -> ()
    %104 = vector.extract_strided_slice %36 {offsets = [0, 0, 48], sizes = [2, 8, 16], strides = [1, 1, 1]} : vector<2x8x64xbf16> to vector<2x8x16xbf16>
    %105 = vector.extract_strided_slice %39 {offsets = [0, 0, 48], sizes = [2, 8, 16], strides = [1, 1, 1]} : vector<2x8x64xbf16> to vector<2x8x16xbf16>
    "tpu.trace_start"() <{level = 10 : i32, message = "bqd,bkd->bqk"}> : () -> ()
    %cst_30 = arith.constant dense<0.000000e+00> : vector<2x8x8xf32>
    %106 = tpu.matmul %104, %105, %cst_30 {dimension_numbers = #tpu.dot_dimension_numbers<[2], [2], [1], [1], [0, 0, 0, 1, 1, 1], [0], [0]>} : vector<2x8x16xbf16>, vector<2x8x16xbf16>, vector<2x8x8xf32> -> vector<2x8x8xf32>
    "tpu.trace_stop"() : () -> ()
    %107 = vector.broadcast %49 : vector<1x8x8xf32> to vector<2x8x8xf32>
    %108 = arith.addf %106, %107 : vector<2x8x8xf32>
    %cst_31 = arith.constant dense<0xFF800000> : vector<2x8xf32>
    %109 = vector.multi_reduction <maximumf>, %108, %cst_31 [2] : vector<2x8x8xf32> to vector<2x8xf32>
    %110 = vector.shape_cast %109 : vector<2x8xf32> to vector<2x8x1xf32>
    %111 = vector.broadcast %110 : vector<2x8x1xf32> to vector<2x8x8xf32>
    %112 = arith.subf %108, %111 : vector<2x8x8xf32>
    %113 = math.exp %112 : vector<2x8x8xf32>
    %cst_32 = arith.constant dense<0.000000e+00> : vector<2x8xf32>
    %114 = vector.multi_reduction <add>, %113, %cst_32 [2] : vector<2x8x8xf32> to vector<2x8xf32>
    %115 = vector.shape_cast %114 : vector<2x8xf32> to vector<2x8x1xf32>
    %116 = tpu.reciprocal %115 {approx = true} : vector<2x8x1xf32> -> vector<2x8x1xf32>
    %117 = vector.broadcast %116 : vector<2x8x1xf32> to vector<2x8x8xf32>
    %118 = arith.mulf %113, %117 : vector<2x8x8xf32>
    %119 = arith.truncf %118 : vector<2x8x8xf32> to vector<2x8x8xbf16>
    %120 = vector.extract_strided_slice %42 {offsets = [0, 0, 48], sizes = [2, 8, 16], strides = [1, 1, 1]} : vector<2x8x64xbf16> to vector<2x8x16xbf16>
    "tpu.trace_start"() <{level = 10 : i32, message = "bqk,bkd->bqd"}> : () -> ()
    %cst_33 = arith.constant dense<0.000000e+00> : vector<2x8x16xf32>
    %121 = tpu.matmul %119, %120, %cst_33 {dimension_numbers = #tpu.dot_dimension_numbers<[2], [1], [1], [2], [0, 0, 0, 1, 1, 2], [0], [0]>} : vector<2x8x8xbf16>, vector<2x8x16xbf16>, vector<2x8x16xf32> -> vector<2x8x16xf32>
    "tpu.trace_stop"() : () -> ()
    %122 = tpu.concatenate %67, %85, %103, %121 in 2 : vector<2x8x16xf32>, vector<2x8x16xf32>, vector<2x8x16xf32>, vector<2x8x16xf32> -> vector<2x8x64xf32>
    %123 = vector.shape_cast %122 : vector<2x8x64xf32> to vector<16x64xf32>
    %124 = arith.truncf %123 : vector<16x64xf32> to vector<16x64xbf16>
    %c0_34 = arith.constant 0 : index
    %c0_35 = arith.constant 0 : index
    %125 = vector.load %arg6[%c0_34, %c0_35] : memref<64x64xbf16, #tpu.memory_space<vmem>>, vector<64x64xbf16>
    %cst_36 = arith.constant dense<0.000000e+00> : vector<16x64xf32>
    %126 = tpu.matmul %124, %125, %cst_36 {dimension_numbers = #tpu.dot_dimension_numbers<[1], [0], [0], [1], [0, 0, 1, 1], [], []>} : vector<16x64xbf16>, vector<64x64xbf16>, vector<16x64xf32> -> vector<16x64xf32>
    %127 = arith.addf %1, %126 : vector<16x64xf32>
    %c0_37 = arith.constant 0 : index
    %c0_38 = arith.constant 0 : index
    %128 = vector.load %arg7[%c0_37, %c0_38] : memref<1x64xf32, #tpu.memory_space<vmem>>, vector<1x64xf32>
    %129 = vector.broadcast %128 : vector<1x64xf32> to vector<16x64xf32>
    %130 = arith.addf %127, %129 : vector<16x64xf32>
    %c0_39 = arith.constant 0 : index
    %c0_40 = arith.constant 0 : index
    %131 = vector.load %arg8[%c0_39, %c0_40] : memref<1x64xf32, #tpu.memory_space<vmem>>, vector<1x64xf32>
    %c0_41 = arith.constant 0 : index
    %c0_42 = arith.constant 0 : index
    %132 = vector.load %arg9[%c0_41, %c0_42] : memref<1x64xf32, #tpu.memory_space<vmem>>, vector<1x64xf32>
    %cst_43 = arith.constant dense<0.000000e+00> : vector<16xf32>
    %133 = vector.multi_reduction <add>, %130, %cst_43 [1] : vector<16x64xf32> to vector<16xf32>
    %134 = vector.shape_cast %133 : vector<16xf32> to vector<16x1xf32>
    %cst_44 = arith.constant 6.400000e+01 : f32
    %135 = vector.broadcast %cst_44 : f32 to vector<16x1xf32>
    %136 = arith.divf %134, %135 : vector<16x1xf32>
    %137 = vector.broadcast %136 : vector<16x1xf32> to vector<16x64xf32>
    %138 = arith.subf %130, %137 : vector<16x64xf32>
    %139 = arith.mulf %138, %138 : vector<16x64xf32>
    %cst_45 = arith.constant dense<0.000000e+00> : vector<16xf32>
    %140 = vector.multi_reduction <add>, %139, %cst_45 [1] : vector<16x64xf32> to vector<16xf32>
    %141 = vector.shape_cast %140 : vector<16xf32> to vector<16x1xf32>
    %cst_46 = arith.constant 6.400000e+01 : f32
    %142 = vector.broadcast %cst_46 : f32 to vector<16x1xf32>
    %143 = arith.divf %141, %142 : vector<16x1xf32>
    %144 = vector.broadcast %136 : vector<16x1xf32> to vector<16x64xf32>
    %145 = arith.subf %130, %144 : vector<16x64xf32>
    %cst_47 = arith.constant 9.99999974E-6 : f32
    %146 = vector.broadcast %cst_47 : f32 to vector<16x1xf32>
    %147 = arith.addf %143, %146 : vector<16x1xf32>
    %148 = math.rsqrt %147 : vector<16x1xf32>
    %149 = vector.broadcast %148 : vector<16x1xf32> to vector<16x64xf32>
    %150 = arith.mulf %145, %149 : vector<16x64xf32>
    %151 = vector.broadcast %131 : vector<1x64xf32> to vector<16x64xf32>
    %152 = arith.mulf %150, %151 : vector<16x64xf32>
    %153 = vector.broadcast %132 : vector<1x64xf32> to vector<16x64xf32>
    %154 = arith.addf %152, %153 : vector<16x64xf32>
    %155 = arith.truncf %154 : vector<16x64xf32> to vector<16x64xbf16>
    %c0_48 = arith.constant 0 : index
    %c0_49 = arith.constant 0 : index
    %156 = vector.load %arg10[%c0_48, %c0_49] : memref<64x256xbf16, #tpu.memory_space<vmem>>, vector<64x256xbf16>
    %cst_50 = arith.constant dense<0.000000e+00> : vector<16x256xf32>
    %157 = tpu.matmul %155, %156, %cst_50 {dimension_numbers = #tpu.dot_dimension_numbers<[1], [0], [0], [1], [0, 0, 1, 1], [], []>} : vector<16x64xbf16>, vector<64x256xbf16>, vector<16x256xf32> -> vector<16x256xf32>
    %c0_51 = arith.constant 0 : index
    %c0_52 = arith.constant 0 : index
    %158 = vector.load %arg11[%c0_51, %c0_52] : memref<1x256xf32, #tpu.memory_space<vmem>>, vector<1x256xf32>
    %159 = vector.broadcast %158 : vector<1x256xf32> to vector<16x256xf32>
    %160 = arith.addf %157, %159 : vector<16x256xf32>
    %cst_53 = arith.constant 1.702000e+00 : f32
    %161 = vector.broadcast %cst_53 : f32 to vector<16x256xf32>
    %162 = arith.mulf %161, %160 : vector<16x256xf32>
    %163 = arith.negf %162 : vector<16x256xf32>
    %164 = math.exp %163 : vector<16x256xf32>
    %cst_54 = arith.constant 1.000000e+00 : f32
    %165 = vector.broadcast %cst_54 : f32 to vector<16x256xf32>
    %166 = arith.addf %165, %164 : vector<16x256xf32>
    %167 = arith.divf %165, %166 : vector<16x256xf32>
    %168 = arith.mulf %160, %167 : vector<16x256xf32>
    %169 = arith.truncf %168 : vector<16x256xf32> to vector<16x256xbf16>
    %c0_55 = arith.constant 0 : index
    %c0_56 = arith.constant 0 : index
    %170 = vector.load %arg12[%c0_55, %c0_56] : memref<256x64xbf16, #tpu.memory_space<vmem>>, vector<256x64xbf16>
    %cst_57 = arith.constant dense<0.000000e+00> : vector<16x64xf32>
    %171 = tpu.matmul %169, %170, %cst_57 {dimension_numbers = #tpu.dot_dimension_numbers<[1], [0], [0], [1], [0, 0, 1, 1], [], []>} : vector<16x256xbf16>, vector<256x64xbf16>, vector<16x64xf32> -> vector<16x64xf32>
    %c0_58 = arith.constant 0 : index
    %c0_59 = arith.constant 0 : index
    %172 = vector.load %arg13[%c0_58, %c0_59] : memref<1x64xf32, #tpu.memory_space<vmem>>, vector<1x64xf32>
    %173 = vector.broadcast %172 : vector<1x64xf32> to vector<16x64xf32>
    %174 = arith.addf %171, %173 : vector<16x64xf32>
    %175 = arith.addf %130, %174 : vector<16x64xf32>
    %176 = vector.shape_cast %175 : vector<16x64xf32> to vector<2x8x64xf32>
    %c0_60 = arith.constant 0 : index
    %c0_61 = arith.constant 0 : index
    %c0_62 = arith.constant 0 : index
    %177 = vector.load %arg14[%c0_60, %c0_61, %c0_62] : memref<2x8x64xf32, #tpu.memory_space<vmem>>, vector<2x8x64xf32>
    tpu.vector_store %arg14[%c0_60, %c0_61, %c0_62], %176 {strides = array<i32>} : memref<2x8x64xf32, #tpu.memory_space<vmem>>, vector<2x8x64xf32>,
    return
  }
  func.func @transform_0(%arg0: i32) -> (i32, i32, i32) {
    %c0_i32 = arith.constant 0 : i32
    %c0_i32_0 = arith.constant 0 : i32
    %c0_i32_1 = arith.constant 0 : i32
    return %arg0, %c0_i32, %c0_i32_0 : i32, i32, i32
  }
  func.func @transform_1(%arg0: i32) -> (i32, i32) {
    %c0_i32 = arith.constant 0 : i32
    %c0_i32_0 = arith.constant 0 : i32
    %c0_i32_1 = arith.constant 0 : i32
    return %c0_i32, %c0_i32_0 : i32, i32
  }
  func.func @transform_2(%arg0: i32) -> (i32, i32) {
    %c0_i32 = arith.constant 0 : i32
    %c0_i32_0 = arith.constant 0 : i32
    %c0_i32_1 = arith.constant 0 : i32
    return %c0_i32, %c0_i32_0 : i32, i32
  }
  func.func @transform_3(%arg0: i32) -> (i32, i32) {
    %c0_i32 = arith.constant 0 : i32
    %c0_i32_0 = arith.constant 0 : i32
    %c0_i32_1 = arith.constant 0 : i32
    return %c0_i32, %c0_i32_0 : i32, i32
  }
  func.func @transform_4(%arg0: i32) -> (i32, i32) {
    %c0_i32 = arith.constant 0 : i32
    %c0_i32_0 = arith.constant 0 : i32
    %c0_i32_1 = arith.constant 0 : i32
    return %c0_i32, %c0_i32_0 : i32, i32
  }
  func.func @transform_5(%arg0: i32) -> (i32, i32) {
    %c0_i32 = arith.constant 0 : i32
    %c0_i32_0 = arith.constant 0 : i32
    %c0_i32_1 = arith.constant 0 : i32
    return %c0_i32, %c0_i32_0 : i32, i32
  }
  func.func @transform_6(%arg0: i32) -> (i32, i32) {
    %c0_i32 = arith.constant 0 : i32
    %c0_i32_0 = arith.constant 0 : i32
    %c0_i32_1 = arith.constant 0 : i32
    return %c0_i32, %c0_i32_0 : i32, i32
  }
  func.func @transform_7(%arg0: i32) -> (i32, i32) {
    %c0_i32 = arith.constant 0 : i32
    %c0_i32_0 = arith.constant 0 : i32
    %c0_i32_1 = arith.constant 0 : i32
    return %c0_i32, %c0_i32_0 : i32, i32
  }
  func.func @transform_8(%arg0: i32) -> (i32, i32) {
    %c0_i32 = arith.constant 0 : i32
    %c0_i32_0 = arith.constant 0 : i32
    %c0_i32_1 = arith.constant 0 : i32
    return %c0_i32, %c0_i32_0 : i32, i32
  }
  func.func @transform_9(%arg0: i32) -> (i32, i32) {
    %c0_i32 = arith.constant 0 : i32
    %c0_i32_0 = arith.constant 0 : i32
    %c0_i32_1 = arith.constant 0 : i32
    return %c0_i32, %c0_i32_0 : i32, i32
  }
  func.func @transform_10(%arg0: i32) -> (i32, i32) {
    %c0_i32 = arith.constant 0 : i32
    %c0_i32_0 = arith.constant 0 : i32
    %c0_i32_1 = arith.constant 0 : i32
    return %c0_i32, %c0_i32_0 : i32, i32
  }
  func.func @transform_11(%arg0: i32) -> (i32, i32) {
    %c0_i32 = arith.constant 0 : i32
    %c0_i32_0 = arith.constant 0 : i32
    %c0_i32_1 = arith.constant 0 : i32
    return %c0_i32, %c0_i32_0 : i32, i32
  }
  func.func @transform_12(%arg0: i32) -> (i32, i32) {
    %c0_i32 = arith.constant 0 : i32
    %c0_i32_0 = arith.constant 0 : i32
    %c0_i32_1 = arith.constant 0 : i32
    return %c0_i32, %c0_i32_0 : i32, i32
  }
  func.func @transform_13(%arg0: i32) -> (i32, i32, i32) {
    %c0_i32 = arith.constant 0 : i32
    %c0_i32_0 = arith.constant 0 : i32
    %c0_i32_1 = arith.constant 0 : i32
    return %arg0, %c0_i32, %c0_i32_0 : i32, i32, i32
  }
}

module attributes {stable_mosaic.version = 11 : i64} {
  func.func @clip_layer_kernel(%arg0: i32, %arg1: memref<2x8x64xf32, #tpu.memory_space<vmem>>, %arg2: memref<1x64xf32, #tpu.memory_space<vmem>>, %arg3: memref<1x64xf32, #tpu.memory_space<vmem>>, %arg4: memref<64x192xbf16, #tpu.memory_space<vmem>>, %arg5: memref<1x192xf32, #tpu.memory_space<vmem>>, %arg6: memref<64x64xbf16, #tpu.memory_space<vmem>>, %arg7: memref<1x64xf32, #tpu.memory_space<vmem>>, %arg8: memref<1x64xf32, #tpu.memory_space<vmem>>, %arg9: memref<1x64xf32, #tpu.memory_space<vmem>>, %arg10: memref<64x256xbf16, #tpu.memory_space<vmem>>, %arg11: memref<1x256xf32, #tpu.memory_space<vmem>>, %arg12: memref<256x64xbf16, #tpu.memory_space<vmem>>, %arg13: memref<1x64xf32, #tpu.memory_space<vmem>>, %arg14: memref<2x8x64xf32, #tpu.memory_space<vmem>>) attributes {dimension_semantics = [#tpu.dimension_semantics<parallel>], iteration_bounds = array<i64: 1>, scalar_prefetch = 0 : i64, scratch_operands = 0 : i64, tpu.core_type = #tpu.core_type<tc>, window_params = [{transform_indices = @transform_0, window_bounds = array<i64: 2, 8, 64>}, {pipeline_mode = #tpu.pipeline_mode<synchronous>, transform_indices = @transform_1, window_bounds = array<i64: 1, 64>}, {pipeline_mode = #tpu.pipeline_mode<synchronous>, transform_indices = @transform_2, window_bounds = array<i64: 1, 64>}, {pipeline_mode = #tpu.pipeline_mode<synchronous>, transform_indices = @transform_3, window_bounds = array<i64: 64, 192>}, {pipeline_mode = #tpu.pipeline_mode<synchronous>, transform_indices = @transform_4, window_bounds = array<i64: 1, 192>}, {pipeline_mode = #tpu.pipeline_mode<synchronous>, transform_indices = @transform_5, window_bounds = array<i64: 64, 64>}, {pipeline_mode = #tpu.pipeline_mode<synchronous>, transform_indices = @transform_6, window_bounds = array<i64: 1, 64>}, {pipeline_mode = #tpu.pipeline_mode<synchronous>, transform_indices = @transform_7, window_bounds = array<i64: 1, 64>}, {pipeline_mode = #tpu.pipeline_mode<synchronous>, transform_indices = @transform_8, window_bounds = array<i64: 1, 64>}, {pipeline_mode = #tpu.pipeline_mode<synchronous>, transform_indices = @transform_9, window_bounds = array<i64: 64, 256>}, {pipeline_mode = #tpu.pipeline_mode<synchronous>, transform_indices = @transform_10, window_bounds = array<i64: 1, 256>}, {pipeline_mode = #tpu.pipeline_mode<synchronous>, transform_indices = @transform_11, window_bounds = array<i64: 256, 64>}, {pipeline_mode = #tpu.pipeline_mode<synchronous>, transform_indices = @transform_12, window_bounds = array<i64: 1, 64>}, {transform_indices = @transform_13, window_bounds = array<i64: 2, 8, 64>}]} {
    %c0 = arith.constant 0 : index
    %c0_0 = arith.constant 0 : index
    %c0_1 = arith.constant 0 : index
    %0 = vector.load %arg1[%c0, %c0_0, %c0_1] : memref<2x8x64xf32, #tpu.memory_space<vmem>>, vector<2x8x64xf32>
    %1 = vector.shape_cast %0 : vector<2x8x64xf32> to vector<16x64xf32>
    %c0_2 = arith.constant 0 : index
    %c0_3 = arith.constant 0 : index
    %2 = vector.load %arg2[%c0_2, %c0_3] : memref<1x64xf32, #tpu.memory_space<vmem>>, vector<1x64xf32>
    %c0_4 = arith.constant 0 : index
    %c0_5 = arith.constant 0 : index
    %3 = vector.load %arg3[%c0_4, %c0_5] : memref<1x64xf32, #tpu.memory_space<vmem>>, vector<1x64xf32>
    %cst = arith.constant dense<0.000000e+00> : vector<16xf32>
    %4 = vector.multi_reduction <add>, %1, %cst [1] : vector<16x64xf32> to vector<16xf32>
    %5 = vector.shape_cast %4 : vector<16xf32> to vector<16x1xf32>
    %cst_6 = arith.constant 6.400000e+01 : f32
    %6 = vector.broadcast %cst_6 : f32 to vector<16x1xf32>
    %7 = arith.divf %5, %6 : vector<16x1xf32>
    %8 = vector.broadcast %7 : vector<16x1xf32> to vector<16x64xf32>
    %9 = arith.subf %1, %8 : vector<16x64xf32>
    %10 = arith.mulf %9, %9 : vector<16x64xf32>
    %cst_7 = arith.constant dense<0.000000e+00> : vector<16xf32>
    %11 = vector.multi_reduction <add>, %10, %cst_7 [1] : vector<16x64xf32> to vector<16xf32>
    %12 = vector.shape_cast %11 : vector<16xf32> to vector<16x1xf32>
    %cst_8 = arith.constant 6.400000e+01 : f32
    %13 = vector.broadcast %cst_8 : f32 to vector<16x1xf32>
    %14 = arith.divf %12, %13 : vector<16x1xf32>
    %15 = vector.broadcast %7 : vector<16x1xf32> to vector<16x64xf32>
    %16 = arith.subf %1, %15 : vector<16x64xf32>
    %cst_9 = arith.constant 9.99999974E-6 : f32
    %17 = vector.broadcast %cst_9 : f32 to vector<16x1xf32>
    %18 = arith.addf %14, %17 : vector<16x1xf32>
    %19 = math.rsqrt %18 : vector<16x1xf32>
    %20 = vector.broadcast %19 : vector<16x1xf32> to vector<16x64xf32>
    %21 = arith.mulf %16, %20 : vector<16x64xf32>
    %22 = vector.broadcast %2 : vector<1x64xf32> to vector<16x64xf32>
    %23 = arith.mulf %21, %22 : vector<16x64xf32>
    %24 = vector.broadcast %3 : vector<1x64xf32> to vector<16x64xf32>
    %25 = arith.addf %23, %24 : vector<16x64xf32>
    %26 = arith.truncf %25 : vector<16x64xf32> to vector<16x64xbf16>
    %c0_10 = arith.constant 0 : index
    %c0_11 = arith.constant 0 : index
    %27 = vector.load %arg4[%c0_10, %c0_11] : memref<64x192xbf16, #tpu.memory_space<vmem>>, vector<64x192xbf16>
    %cst_12 = arith.constant dense<0.000000e+00> : vector<16x192xf32>
    %28 = tpu.matmul %26, %27, %cst_12 {dimension_numbers = #tpu.dot_dimension_numbers<[1], [0], [0], [1], [0, 0, 1, 1], [], []>} : vector<16x64xbf16>, vector<64x192xbf16>, vector<16x192xf32> -> vector<16x192xf32>
    %c0_13 = arith.constant 0 : index
    %c0_14 = arith.constant 0 : index
    %29 = vector.load %arg5[%c0_13, %c0_14] : memref<1x192xf32, #tpu.memory_space<vmem>>, vector<1x192xf32>
    %30 = vector.broadcast %29 : vector<1x192xf32> to vector<16x192xf32>
    %31 = arith.addf %28, %30 : vector<16x192xf32>
    %32 = vector.extract_strided_slice %31 {offsets = [0, 0], sizes = [16, 64], strides = [1, 1]} : vector<16x192xf32> to vector<16x64xf32>
    %cst_15 = arith.constant 2.500000e-01 : f32
    %33 = vector.broadcast %cst_15 : f32 to vector<16x64xf32>
    %34 = arith.mulf %32, %33 : vector<16x64xf32>
    %35 = arith.truncf %34 : vector<16x64xf32> to vector<16x64xbf16>
    %36 = vector.shape_cast %35 : vector<16x64xbf16> to vector<2x8x64xbf16>
    %37 = vector.extract_strided_slice %31 {offsets = [0, 64], sizes = [16, 64], strides = [1, 1]} : vector<16x192xf32> to vector<16x64xf32>
    %38 = arith.truncf %37 : vector<16x64xf32> to vector<16x64xbf16>
    %39 = vector.shape_cast %38 : vector<16x64xbf16> to vector<2x8x64xbf16>
    %40 = vector.extract_strided_slice %31 {offsets = [0, 128], sizes = [16, 64], strides = [1, 1]} : vector<16x192xf32> to vector<16x64xf32>
    %41 = arith.truncf %40 : vector<16x64xf32> to vector<16x64xbf16>
    %42 = vector.shape_cast %41 : vector<16x64xbf16> to vector<2x8x64xbf16>
    %43 = tpu.iota {dimensions = array<i32: 0>} : vector<8x8xi32>
    %44 = tpu.iota {dimensions = array<i32: 1>} : vector<8x8xi32>
    %45 = arith.cmpi sgt, %44, %43 : vector<8x8xi32>
    %cst_16 = arith.constant -1.000000e+30 : f32
    %cst_17 = arith.constant 0.000000e+00 : f32
    %46 = vector.broadcast %cst_16 : f32 to vector<8x8xf32>
    %47 = vector.broadcast %cst_17 : f32 to vector<8x8xf32>
    %48 = arith.select %45, %46, %47 : vector<8x8xi1>, vector<8x8xf32>
    %49 = vector.shape_cast %48 : vector<8x8xf32> to vector<1x8x8xf32>
    %50 = vector.extract_strided_slice %36 {offsets = [0, 0, 0], sizes = [2, 8, 16], strides = [1, 1, 1]} : vector<2x8x64xbf16> to vector<2x8x16xbf16>
    %51 = vector.extract_strided_slice %39 {offsets = [0, 0, 0], sizes = [2, 8, 16], strides = [1, 1, 1]} : vector<2x8x64xbf16> to vector<2x8x16xbf16>
    "tpu.trace_start"() <{level = 10 : i32, message = "bqd,bkd->bqk"}> : () -> ()
    %cst_18 = arith.constant dense<0.000000e+00> : vector<2x8x8xf32>
    %52 = tpu.matmul %50, %51, %cst_18 {dimension_numbers = #tpu.dot_dimension_numbers<[2], [2], [1], [1], [0, 0, 0, 1, 1, 1], [0], [0]>} : vector<2x8x16xbf16>, vector<2x8x16xbf16>, vector<2x8x8xf32> -> vector<2x8x8xf32>
    "tpu.trace_stop"() : () -> ()
    %53 = vector.broadcast %49 : vector<1x8x8xf32> to vector<2x8x8xf32>
    %54 = arith.addf %52, %53 : vector<2x8x8xf32>
    %cst_19 = arith.constant dense<0xFF800000> : vector<2x8xf32>
    %55 = vector.multi_reduction <maximumf>, %54, %cst_19 [2] : vector<2x8x8xf32> to vector<2x8xf32>
    %56 = vector.shape_cast %55 : vector<2x8xf32> to vector<2x8x1xf32>
    %57 = vector.broadcast %56 : vector<2x8x1xf32> to vector<2x8x8xf32>
    %58 = arith.subf %54, %57 : vector<2x8x8xf32>
    %59 = math.exp %58 : vector<2x8x8xf32>
    %cst_20 = arith.constant dense<0.000000e+00> : vector<2x8xf32>
    %60 = vector.multi_reduction <add>, %59, %cst_20 [2] : vector<2x8x8xf32> to vector<2x8xf32>
    %61 = vector.shape_cast %60 : vector<2x8xf32> to vector<2x8x1xf32>
    %62 = tpu.reciprocal %61 {approx = true} : vector<2x8x1xf32> -> vector<2x8x1xf32>
    %63 = vector.broadcast %62 : vector<2x8x1xf32> to vector<2x8x8xf32>
    %64 = arith.mulf %59, %63 : vector<2x8x8xf32>
    %65 = arith.truncf %64 : vector<2x8x8xf32> to vector<2x8x8xbf16>
    %66 = vector.extract_strided_slice %42 {offsets = [0, 0, 0], sizes = [2, 8, 16], strides = [1, 1, 1]} : vector<2x8x64xbf16> to vector<2x8x16xbf16>
    "tpu.trace_start"() <{level = 10 : i32, message = "bqk,bkd->bqd"}> : () -> ()
    %cst_21 = arith.constant dense<0.000000e+00> : vector<2x8x16xf32>
    %67 = tpu.matmul %65, %66, %cst_21 {dimension_numbers = #tpu.dot_dimension_numbers<[2], [1], [1], [2], [0, 0, 0, 1, 1, 2], [0], [0]>} : vector<2x8x8xbf16>, vector<2x8x16xbf16>, vector<2x8x16xf32> -> vector<2x8x16xf32>
    "tpu.trace_stop"() : () -> ()
    %68 = vector.extract_strided_slice %36 {offsets = [0, 0, 16], sizes = [2, 8, 16], strides = [1, 1, 1]} : vector<2x8x64xbf16> to vector<2x8x16xbf16>
    %69 = vector.extract_strided_slice %39 {offsets = [0, 0, 16], sizes = [2, 8, 16], strides = [1, 1, 1]} : vector<2x8x64xbf16> to vector<2x8x16xbf16>
    "tpu.trace_start"() <{level = 10 : i32, message = "bqd,bkd->bqk"}> : () -> ()
    %cst_22 = arith.constant dense<0.000000e+00> : vector<2x8x8xf32>
    %70 = tpu.matmul %68, %69, %cst_22 {dimension_numbers = #tpu.dot_dimension_numbers<[2], [2], [1], [1], [0, 0, 0, 1, 1, 1], [0], [0]>} : vector<2x8x16xbf16>, vector<2x8x16xbf16>, vector<2x8x8xf32> -> vector<2x8x8xf32>
    "tpu.trace_stop"() : () -> ()
    %71 = vector.broadcast %49 : vector<1x8x8xf32> to vector<2x8x8xf32>
    %72 = arith.addf %70, %71 : vector<2x8x8xf32>
    %cst_23 = arith.constant dense<0xFF800000> : vector<2x8xf32>
    %73 = vector.multi_reduction <maximumf>, %72, %cst_23 [2] : vector<2x8x8xf32> to vector<2x8xf32>
    %74 = vector.shape_cast %73 : vector<2x8xf32> to vector<2x8x1xf32>
    %75 = vector.broadcast %74 : vector<2x8x1xf32> to vector<2x8x8xf32>
    %76 = arith.subf %72, %75 : vector<2x8x8xf32>
    %77 = math.exp %76 : vector<2x8x8xf32>
    %cst_24 = arith.constant dense<0.000000e+00> : vector<2x8xf32>
    %78 = vector.multi_reduction <add>, %77, %cst_24 [2] : vector<2x8x8xf32> to vector<2x8xf32>
    %79 = vector.shape_cast %78 : vector<2x8xf32> to vector<2x8x1xf32>
    %80 = tpu.reciprocal %79 {approx = true} : vector<2x8x1xf32> -> vector<2x8x1xf32>
    %81 = vector.broadcast %80 : vector<2x8x1xf32> to vector<2x8x8xf32>
    %82 = arith.mulf %77, %81 : vector<2x8x8xf32>
    %83 = arith.truncf %82 : vector<2x8x8xf32> to vector<2x8x8xbf16>
    %84 = vector.extract_strided_slice %42 {offsets = [0, 0, 16], sizes = [2, 8, 16], strides = [1, 1, 1]} : vector<2x8x64xbf16> to vector<2x8x16xbf16>
    "tpu.trace_start"() <{level = 10 : i32, message = "bqk,bkd->bqd"}> : () -> ()
    %cst_25 = arith.constant dense<0.000000e+00> : vector<2x8x16xf32>
    %85 = tpu.matmul %83, %84, %cst_25 {dimension_numbers = #tpu.dot_dimension_numbers<[2], [1], [1], [2], [0, 0, 0, 1, 1, 2], [0], [0]>} : vector<2x8x8xbf16>, vector<2x8x16xbf16>, vector<2x8x16xf32> -> vector<2x8x16xf32>
    "tpu.trace_stop"() : () -> ()
    %86 = vector.extract_strided_slice %36 {offsets = [0, 0, 32], sizes = [2, 8, 16], strides = [1, 1, 1]} : vector<2x8x64xbf16> to vector<2x8x16xbf16>
    %87 = vector.extract_strided_slice %39 {offsets = [0, 0, 32], sizes = [2, 8, 16], strides = [1, 1, 1]} : vector<2x8x64xbf16> to vector<2x8x16xbf16>
    "tpu.trace_start"() <{level = 10 : i32, message = "bqd,bkd->bqk"}> : () -> ()
    %cst_26 = arith.constant dense<0.000000e+00> : vector<2x8x8xf32>
    %88 = tpu.matmul %86, %87, %cst_26 {dimension_numbers = #tpu.dot_dimension_numbers<[2], [2], [1], [1], [0, 0, 0, 1, 1, 1], [0], [0]>} : vector<2x8x16xbf16>, vector<2x8x16xbf16>, vector<2x8x8xf32> -> vector<2x8x8xf32>
    "tpu.trace_stop"() : () -> ()
    %89 = vector.broadcast %49 : vector<1x8x8xf32> to vector<2x8x8xf32>
    %90 = arith.addf %88, %89 : vector<2x8x8xf32>
    %cst_27 = arith.constant dense<0xFF800000> : vector<2x8xf32>
    %91 = vector.multi_reduction <maximumf>, %90, %cst_27 [2] : vector<2x8x8xf32> to vector<2x8xf32>
    %92 = vector.shape_cast %91 : vector<2x8xf32> to vector<2x8x1xf32>
    %93 = vector.broadcast %92 : vector<2x8x1xf32> to vector<2x8x8xf32>
    %94 = arith.subf %90, %93 : vector<2x8x8xf32>
    %95 = math.exp %94 : vector<2x8x8xf32>
    %cst_28 = arith.constant dense<0.000000e+00> : vector<2x8xf32>
    %96 = vector.multi_reduction <add>, %95, %cst_28 [2] : vector<2x8x8xf32> to vector<2x8xf32>
    %97 = vector.shape_cast %96 : vector<2x8xf32> to vector<2x8x1xf32>
    %98 = tpu.reciprocal %97 {approx = true} : vector<2x8x1xf32> -> vector<2x8x1xf32>
    %99 = vector.broadcast %98 : vector<2x8x1xf32> to vector<2x8x8xf32>
    %100 = arith.mulf %95, %99 : vector<2x8x8xf32>
    %101 = arith.truncf %100 : vector<2x8x8xf32> to vector<2x8x8xbf16>
    %102 = vector.extract_strided_slice %42 {offsets = [0, 0, 32], sizes = [2, 8, 16], strides = [1, 1, 1]} : vector<2x8x64xbf16> to vector<2x8x16xbf16>
    "tpu.trace_start"() <{level = 10 : i32, message = "bqk,bkd->bqd"}> : () -> ()
    %cst_29 = arith.constant dense<0.000000e+00> : vector<2x8x16xf32>
    %103 = tpu.matmul %101, %102, %cst_29 {dimension_numbers = #tpu.dot_dimension_numbers<[2], [1], [1], [2], [0, 0, 0, 1, 1, 2], [0], [0]>} : vector<2x8x8xbf16>, vector<2x8x16xbf16>, vector<2x8x16xf32> -> vector<2x8x16xf32>
    "tpu.trace_stop"() : () -> ()
    %104 = vector.extract_strided_slice %36 {offsets = [0, 0, 48], sizes = [2, 8, 16], strides = [1, 1, 1]} : vector<2x8x64xbf16> to vector<2x8x16xbf16>
    %105 = vector.extract_strided_slice %39 {offsets = [0, 0, 48], sizes = [2, 8, 16], strides = [1, 1, 1]} : vector<2x8x64xbf16> to vector<2x8x16xbf16>
    "tpu.trace_start"() <{level = 10 : i32, message = "bqd,bkd->bqk"}> : () -> ()
    %cst_30 = arith.constant dense<0.000000e+00> : vector<2x8x8xf32>
    %106 = tpu.matmul %104, %105, %cst_30 {dimension_numbers = #tpu.dot_dimension_numbers<[2], [2], [1], [1], [0, 0, 0, 1, 1, 1], [0], [0]>} : vector<2x8x16xbf16>, vector<2x8x16xbf16>, vector<2x8x8xf32> -> vector<2x8x8xf32>
    "tpu.trace_stop"() : () -> ()
    %107 = vector.broadcast %49 : vector<1x8x8xf32> to vector<2x8x8xf32>
    %108 = arith.addf %106, %107 : vector<2x8x8xf32>
    %cst_31 = arith.constant dense<0xFF800000> : vector<2x8xf32>
    %109 = vector.multi_reduction <maximumf>, %108, %cst_31 [2] : vector<2x8x8xf32> to vector<2x8xf32>
    %110 = vector.shape_cast %109 : vector<2x8xf32> to vector<2x8x1xf32>
    %111 = vector.broadcast %110 : vector<2x8x1xf32> to vector<2x8x8xf32>
    %112 = arith.subf %108, %111 : vector<2x8x8xf32>
    %113 = math.exp %112 : vector<2x8x8xf32>
    %cst_32 = arith.constant dense<0.000000e+00> : vector<2x8xf32>
    %114 = vector.multi_reduction <add>, %113, %cst_32 [2] : vector<2x8x8xf32> to vector<2x8xf32>
    %115 = vector.shape_cast %114 : vector<2x8xf32> to vector<2x8x1xf32>
    %116 = tpu.reciprocal %115 {approx = true} : vector<2x8x1xf32> -> vector<2x8x1xf32>
    %117 = vector.broadcast %116 : vector<2x8x1xf32> to vector<2x8x8xf32>
    %118 = arith.mulf %113, %117 : vector<2x8x8xf32>
    %119 = arith.truncf %118 : vector<2x8x8xf32> to vector<2x8x8xbf16>
    %120 = vector.extract_strided_slice %42 {offsets = [0, 0, 48], sizes = [2, 8, 16], strides = [1, 1, 1]} : vector<2x8x64xbf16> to vector<2x8x16xbf16>
    "tpu.trace_start"() <{level = 10 : i32, message = "bqk,bkd->bqd"}> : () -> ()
    %cst_33 = arith.constant dense<0.000000e+00> : vector<2x8x16xf32>
    %121 = tpu.matmul %119, %120, %cst_33 {dimension_numbers = #tpu.dot_dimension_numbers<[2], [1], [1], [2], [0, 0, 0, 1, 1, 2], [0], [0]>} : vector<2x8x8xbf16>, vector<2x8x16xbf16>, vector<2x8x16xf32> -> vector<2x8x16xf32>
    "tpu.trace_stop"() : () -> ()
    %122 = tpu.concatenate %67, %85, %103, %121 in 2 : vector<2x8x16xf32>, vector<2x8x16xf32>, vector<2x8x16xf32>, vector<2x8x16xf32> -> vector<2x8x64xf32>
    %123 = vector.shape_cast %122 : vector<2x8x64xf32> to vector<16x64xf32>
    %124 = arith.truncf %123 : vector<16x64xf32> to vector<16x64xbf16>
    %c0_34 = arith.constant 0 : index
    %c0_35 = arith.constant 0 : index
    %125 = vector.load %arg6[%c0_34, %c0_35] : memref<64x64xbf16, #tpu.memory_space<vmem>>, vector<64x64xbf16>
    %cst_36 = arith.constant dense<0.000000e+00> : vector<16x64xf32>
    %126 = tpu.matmul %124, %125, %cst_36 {dimension_numbers = #tpu.dot_dimension_numbers<[1], [0], [0], [1], [0, 0, 1, 1], [], []>} : vector<16x64xbf16>, vector<64x64xbf16>, vector<16x64xf32> -> vector<16x64xf32>
    %127 = arith.addf %1, %126 : vector<16x64xf32>
    %c0_37 = arith.constant 0 : index
    %c0_38 = arith.constant 0 : index
    %128 = vector.load %arg7[%c0_37, %c0_38] : memref<1x64xf32, #tpu.memory_space<vmem>>, vector<1x64xf32>
    %129 = vector.broadcast %128 : vector<1x64xf32> to vector<16x64xf32>
    %130 = arith.addf %127, %129 : vector<16x64xf32>
    %c0_39 = arith.constant 0 : index
    %c0_40 = arith.constant 0 : index
    %131 = vector.load %arg8[%c0_39, %c0_40] : memref<1x64xf32, #tpu.memory_space<vmem>>, vector<1x64xf32>
    %c0_41 = arith.constant 0 : index
    %c0_42 = arith.constant 0 : index
    %132 = vector.load %arg9[%c0_41, %c0_42] : memref<1x64xf32, #tpu.memory_space<vmem>>, vector<1x64xf32>
    %cst_43 = arith.constant dense<0.000000e+00> : vector<16xf32>
    %133 = vector.multi_reduction <add>, %130, %cst_43 [1] : vector<16x64xf32> to vector<16xf32>
    %134 = vector.shape_cast %133 : vector<16xf32> to vector<16x1xf32>
    %cst_44 = arith.constant 6.400000e+01 : f32
    %135 = vector.broadcast %cst_44 : f32 to vector<16x1xf32>
    %136 = arith.divf %134, %135 : vector<16x1xf32>
    %137 = vector.broadcast %136 : vector<16x1xf32> to vector<16x64xf32>
    %138 = arith.subf %130, %137 : vector<16x64xf32>
    %139 = arith.mulf %138, %138 : vector<16x64xf32>
    %cst_45 = arith.constant dense<0.000000e+00> : vector<16xf32>
    %140 = vector.multi_reduction <add>, %139, %cst_45 [1] : vector<16x64xf32> to vector<16xf32>
    %141 = vector.shape_cast %140 : vector<16xf32> to vector<16x1xf32>
    %cst_46 = arith.constant 6.400000e+01 : f32
    %142 = vector.broadcast %cst_46 : f32 to vector<16x1xf32>
    %143 = arith.divf %141, %142 : vector<16x1xf32>
    %144 = vector.broadcast %136 : vector<16x1xf32> to vector<16x64xf32>
    %145 = arith.subf %130, %144 : vector<16x64xf32>
    %cst_47 = arith.constant 9.99999974E-6 : f32
    %146 = vector.broadcast %cst_47 : f32 to vector<16x1xf32>
    %147 = arith.addf %143, %146 : vector<16x1xf32>
    %148 = math.rsqrt %147 : vector<16x1xf32>
    %149 = vector.broadcast %148 : vector<16x1xf32> to vector<16x64xf32>
    %150 = arith.mulf %145, %149 : vector<16x64xf32>
    %151 = vector.broadcast %131 : vector<1x64xf32> to vector<16x64xf32>
    %152 = arith.mulf %150, %151 : vector<16x64xf32>
    %153 = vector.broadcast %132 : vector<1x64xf32> to vector<16x64xf32>
    %154 = arith.addf %152, %153 : vector<16x64xf32>
    %155 = arith.truncf %154 : vector<16x64xf32> to vector<16x64xbf16>
    %c0_48 = arith.constant 0 : index
    %c0_49 = arith.constant 0 : index
    %156 = vector.load %arg10[%c0_48, %c0_49] : memref<64x256xbf16, #tpu.memory_space<vmem>>, vector<64x256xbf16>
    %cst_50 = arith.constant dense<0.000000e+00> : vector<16x256xf32>
    %157 = tpu.matmul %155, %156, %cst_50 {dimension_numbers = #tpu.dot_dimension_numbers<[1], [0], [0], [1], [0, 0, 1, 1], [], []>} : vector<16x64xbf16>, vector<64x256xbf16>, vector<16x256xf32> -> vector<16x256xf32>
    %c0_51 = arith.constant 0 : index
    %c0_52 = arith.constant 0 : index
    %158 = vector.load %arg11[%c0_51, %c0_52] : memref<1x256xf32, #tpu.memory_space<vmem>>, vector<1x256xf32>
    %159 = vector.broadcast %158 : vector<1x256xf32> to vector<16x256xf32>
    %160 = arith.addf %157, %159 : vector<16x256xf32>
    %cst_53 = arith.constant 1.702000e+00 : f32
    %161 = vector.broadcast %cst_53 : f32 to vector<16x256xf32>
    %162 = arith.mulf %161, %160 : vector<16x256xf32>
    %163 = arith.negf %162 : vector<16x256xf32>
    %164 = math.exp %163 : vector<16x256xf32>
    %cst_54 = arith.constant 1.000000e+00 : f32
    %165 = vector.broadcast %cst_54 : f32 to vector<16x256xf32>
    %166 = arith.addf %165, %164 : vector<16x256xf32>
    %167 = arith.divf %165, %166 : vector<16x256xf32>
    %168 = arith.mulf %160, %167 : vector<16x256xf32>
    %169 = arith.truncf %168 : vector<16x256xf32> to vector<16x256xbf16>
    %c0_55 = arith.constant 0 : index
    %c0_56 = arith.constant 0 : index
    %170 = vector.load %arg12[%c0_55, %c0_56] : memref<256x64xbf16, #tpu.memory_space<vmem>>, vector<256x64xbf16>
    %cst_57 = arith.constant dense<0.000000e+00> : vector<16x64xf32>
    %171 = tpu.matmul %169, %170, %cst_57 {dimension_numbers = #tpu.dot_dimension_numbers<[1], [0], [0], [1], [0, 0, 1, 1], [], []>} : vector<16x256xbf16>, vector<256x64xbf16>, vector<16x64xf32> -> vector<16x64xf32>
    %c0_58 = arith.constant 0 : index
    %c0_59 = arith.constant 0 : index
    %172 = vector.load %arg13[%c0_58, %c0_59] : memref<1x64xf32, #tpu.memory_space<vmem>>, vector<1x64xf32>
    %173 = vector.broadcast %172 : vector<1x64xf32> to vector<16x64xf32>
    %174 = arith.addf %171, %173 : vector<16x64xf32>
    %175 = arith.addf %130, %174 : vector<16x64xf32>
    %176 = vector.shape_cast %175 : vector<16x64xf32> to vector<2x8x64xf32>
    %c0_60 = arith.constant 0 : index
    %c0_61 = arith.constant 0 : index
    %c0_62 = arith.constant 0 : index
    %177 = vector.load %arg14[%c0_60, %c0_61, %c0_62] : memref<2x8x64xf32, #tpu.memory_space<vmem>>, vector<2x8x64xf32>
    tpu.vector_store %arg14[%c0_60, %c0_61, %c0_62], %176 {strides = array<i32>} : memref<2x8x64xf32, #tpu.memory_space<vmem>>, vector<2x8x64xf32>,
    return
  }
  func.func @transform_0(%arg0: i32) -> (i32, i32, i32) {
    %c0_i32 = arith.constant 0 : i32
    %c0_i32_0 = arith.constant 0 : i32
    %c0_i32_1 = arith.constant 0 : i32
    return %arg0, %c0_i32, %c0_i32_0 : i32, i32, i32
  }
  func.func @transform_1(%arg0: i32) -> (i32, i32) {
    %c0_i32 = arith.constant 0 : i32
    %c0_i32_0 = arith.constant 0 : i32
    %c0_i32_1 = arith.constant 0 : i32
    return %c0_i32, %c0_i32_0 : i32, i32
  }
  func.func @transform_2(%arg0: i32) -> (i32, i32) {
    %c0_i32 = arith.constant 0 : i32
    %c0_i32_0 = arith.constant 0 : i32
    %c0_i32_1 = arith.constant 0 : i32
    return %c0_i32, %c0_i32_0 : i32, i32
  }
  func.func @transform_3(%arg0: i32) -> (i32, i32) {
    %c0_i32 = arith.constant 0 : i32
    %c0_i32_0 = arith.constant 0 : i32
    %c0_i32_1 = arith.constant 0 : i32
    return %c0_i32, %c0_i32_0 : i32, i32
  }
  func.func @transform_4(%arg0: i32) -> (i32, i32) {
    %c0_i32 = arith.constant 0 : i32
    %c0_i32_0 = arith.constant 0 : i32
    %c0_i32_1 = arith.constant 0 : i32
    return %c0_i32, %c0_i32_0 : i32, i32
  }
  func.func @transform_5(%arg0: i32) -> (i32, i32) {
    %c0_i32 = arith.constant 0 : i32
    %c0_i32_0 = arith.constant 0 : i32
    %c0_i32_1 = arith.constant 0 : i32
    return %c0_i32, %c0_i32_0 : i32, i32
  }
  func.func @transform_6(%arg0: i32) -> (i32, i32) {
    %c0_i32 = arith.constant 0 : i32
    %c0_i32_0 = arith.constant 0 : i32
    %c0_i32_1 = arith.constant 0 : i32
    return %c0_i32, %c0_i32_0 : i32, i32
  }
  func.func @transform_7(%arg0: i32) -> (i32, i32) {
    %c0_i32 = arith.constant 0 : i32
    %c0_i32_0 = arith.constant 0 : i32
    %c0_i32_1 = arith.constant 0 : i32
    return %c0_i32, %c0_i32_0 : i32, i32
  }
  func.func @transform_8(%arg0: i32) -> (i32, i32) {
    %c0_i32 = arith.constant 0 : i32
    %c0_i32_0 = arith.constant 0 : i32
    %c0_i32_1 = arith.constant 0 : i32
    return %c0_i32, %c0_i32_0 : i32, i32
  }
  func.func @transform_9(%arg0: i32) -> (i32, i32) {
    %c0_i32 = arith.constant 0 : i32
    %c0_i32_0 = arith.constant 0 : i32
    %c0_i32_1 = arith.constant 0 : i32
    return %c0_i32, %c0_i32_0 : i32, i32
  }
  func.func @transform_10(%arg0: i32) -> (i32, i32) {
    %c0_i32 = arith.constant 0 : i32
    %c0_i32_0 = arith.constant 0 : i32
    %c0_i32_1 = arith.constant 0 : i32
    return %c0_i32, %c0_i32_0 : i32, i32
  }
  func.func @transform_11(%arg0: i32) -> (i32, i32) {
    %c0_i32 = arith.constant 0 : i32
    %c0_i32_0 = arith.constant 0 : i32
    %c0_i32_1 = arith.constant 0 : i32
    return %c0_i32, %c0_i32_0 : i32, i32
  }
  func.func @transform_12(%arg0: i32) -> (i32, i32) {
    %c0_i32 = arith.constant 0 : i32
    %c0_i32_0 = arith.constant 0 : i32
    %c0_i32_1 = arith.constant 0 : i32
    return %c0_i32, %c0_i32_0 : i32, i32
  }
  func.func @transform_13(%arg0: i32) -> (i32, i32, i32) {
    %c0_i32 = arith.constant 0 : i32
    %c0_i32_0 = arith.constant 0 : i32
    %c0_i32_1 = arith.constant 0 : i32
    return %arg0, %c0_i32, %c0_i32_0 : i32, i32, i32
  }
}

</mosaic_0001>

<llo_original>
// kernel: tpu_custom_call.1
$region0: #{tpu_custom_call.1}
  #allocation0 [shape = 'u32[]', space=smem, size = 0x4, offset = 0x4, fixed_abs, tag = 'smem constant byte address 0x4 - core index']
  #allocation1 [shape = 'u32[144,128]{1,0:T(1,128)}', space=vmem, size = 0x12000, scoped, tag = 'internal scratch']
  %s0 = inlined_call_operand.hbm [shape: f32[2,8,64], index: 0, kind: input, shape index: {}]
  %s1 = inlined_call_operand.hbm [shape: f32[1,64], index: 1, kind: input, shape index: {}]
  %s2 = inlined_call_operand.hbm [shape: f32[1,64], index: 2, kind: input, shape index: {}]
  %s3 = inlined_call_operand.hbm [shape: bf16[64,192], index: 3, kind: input, shape index: {}]
  %s4 = inlined_call_operand.hbm [shape: f32[1,192], index: 4, kind: input, shape index: {}]
  %s5 = inlined_call_operand.hbm [shape: bf16[64,64], index: 5, kind: input, shape index: {}]
  %s6 = inlined_call_operand.hbm [shape: f32[1,64], index: 6, kind: input, shape index: {}]
  %s7 = inlined_call_operand.hbm [shape: f32[1,64], index: 7, kind: input, shape index: {}]
  %s8 = inlined_call_operand.hbm [shape: f32[1,64], index: 8, kind: input, shape index: {}]
  %s9 = inlined_call_operand.hbm [shape: bf16[64,256], index: 9, kind: input, shape index: {}]
  %s10 = inlined_call_operand.hbm [shape: f32[1,256], index: 10, kind: input, shape index: {}]
  %s11 = inlined_call_operand.hbm [shape: bf16[256,64], index: 11, kind: input, shape index: {}]
  %s12 = inlined_call_operand.hbm [shape: f32[1,64], index: 12, kind: input, shape index: {}]
  %s13 = inlined_call_operand.hbm [shape: f32[2,8,64], index: 13, kind: output, shape index: {}]
  %s14 = sld [smem:[#allocation0]]
  $region114: #{tpu_custom_call.1} parent=0
    _
  %s16 = ssub.s32 1, %s14
  %s17 = scalar_select 0, %s16, %s14
  $region1: #{tpu_custom_call.1} parent=0
    #allocation2 [shape = 'u8[8192]{0}', space=vmem, size = 0x2000, scoped, tag = 'input window, operand 0, single buffered']
    #allocation3 [shape = 's32[1]{0}', space=sflag, size = 0x4, scoped, tag = 'scoped memory for tpu_custom_call.1']
    #allocation4 [shape = 's32[1]{0}', space=sflag, size = 0x4, scoped, tag = 'scoped memory for tpu_custom_call.1']
    #allocation5 [shape = 'u8[512]{0}', space=vmem, size = 0x400, scoped, tag = 'input window, operand 1, single buffered']
    #allocation6 [shape = 's32[1]{0}', space=sflag, size = 0x4, scoped, tag = 'scoped memory for tpu_custom_call.1']
    #allocation7 [shape = 'u8[512]{0}', space=vmem, size = 0x400, scoped, tag = 'input window, operand 2, single buffered']
    #allocation8 [shape = 'u8[32768]{0}', space=vmem, size = 0x8000, scoped, tag = 'input window, operand 3, single buffered']
    #allocation9 [shape = 's32[1]{0}', space=sflag, size = 0x4, scoped, tag = 'scoped memory for tpu_custom_call.1']
    #allocation10 [shape = 'u8[1024]{0}', space=vmem, size = 0x400, scoped, tag = 'input window, operand 4, single buffered']
    #allocation11 [shape = 'u8[16384]{0}', space=vmem, size = 0x4000, scoped, tag = 'input window, operand 5, single buffered']
    #allocation12 [shape = 's32[1]{0}', space=sflag, size = 0x4, scoped, tag = 'scoped memory for tpu_custom_call.1']
    #allocation13 [shape = 'u8[512]{0}', space=vmem, size = 0x400, scoped, tag = 'input window, operand 6, single buffered']
    #allocation14 [shape = 'u8[512]{0}', space=vmem, size = 0x400, scoped, tag = 'input window, operand 7, single buffered']
    #allocation15 [shape = 's32[1]{0}', space=sflag, size = 0x4, scoped, tag = 'scoped memory for tpu_custom_call.1']
    #allocation16 [shape = 'u8[512]{0}', space=vmem, size = 0x400, scoped, tag = 'input window, operand 8, single buffered']
    #allocation17 [shape = 'u8[32768]{0}', space=vmem, size = 0x8000, scoped, tag = 'input window, operand 9, single buffered']
    #allocation18 [shape = 's32[1]{0}', space=sflag, size = 0x4, scoped, tag = 'scoped memory for tpu_custom_call.1']
    #allocation19 [shape = 'u8[1024]{0}', space=vmem, size = 0x400, scoped, tag = 'input window, operand 10, single buffered']
    #allocation20 [shape = 'u8[65536]{0}', space=vmem, size = 0x10000, scoped, tag = 'input window, operand 11, single buffered']
    #allocation21 [shape = 's32[1]{0}', space=sflag, size = 0x4, scoped, tag = 'scoped memory for tpu_custom_call.1']
    #allocation22 [shape = 'u8[512]{0}', space=vmem, size = 0x400, scoped, tag = 'input window, operand 12, single buffered']
    #allocation23 [shape = 'u8[8192]{0}', space=vmem, size = 0x2000, scoped, tag = 'output window, operand 0, single buffered']
    %18 = vsyncpa [#allocation3], 0
    %19 = vsyncpa [#allocation6], 0
    %20 = vsyncpa [#allocation9], 0
    %21 = vsyncpa [#allocation12], 0
    %22 = vsyncpa [#allocation15], 0
    %23 = vsyncpa [#allocation18], 0
    %24 = vsyncpa [#allocation21], 0
    %25 = vsyncpa [#allocation4], 0
    // Predicated region
    $region2: #{tpu_custom_call.1} parent=1 // pred_check
      _
    $region3: #{tpu_custom_call.1} parent=1 // pred_check_branch
      %27 = sbr.rel (0) target = $region5
    $region4: #{tpu_custom_call.1} parent=1 // pred_region
      %s29 = ssub.s32 256, 256
      %30 = vsyncadd [#allocation3], %s29
      %s31 = sshll.u32 [#allocation2], 4
      %s32 = int_to_ptr.vmem [resolvable:$true] %s31
      %37 = dma.hbm_to_vmem [thread:$0]  %s0, 256, %s32, [#allocation3], 128, 128, 8
    $region5: #{tpu_custom_call.1} parent=1 // pred_fallthru
      _
    // Predicated region
    $region6: #{tpu_custom_call.1} parent=1 // pred_check
      _
    $region7: #{tpu_custom_call.1} parent=1 // pred_check_branch
      %39 = sbr.rel (0) target = $region9
    $region8: #{tpu_custom_call.1} parent=1 // pred_region
      %s41 = ssub.s32 16, 16
      %42 = vsyncadd [#allocation6], %s41
      %s44 = sshll.u32 [#allocation5], 4
      %s45 = int_to_ptr.vmem [resolvable:$true] %s44
      %47 = dma.hbm_to_vmem [thread:$0]  %s1, 16, %s45, [#allocation6]
    $region9: #{tpu_custom_call.1} parent=1 // pred_fallthru
      _
    // Predicated region
    $region10: #{tpu_custom_call.1} parent=1 // pred_check
      _
    $region11: #{tpu_custom_call.1} parent=1 // pred_check_branch
      %49 = sbr.rel (0) target = $region13
    $region12: #{tpu_custom_call.1} parent=1 // pred_region
      %s51 = ssub.s32 16, 16
      %52 = vsyncadd [#allocation6], %s51
      %s54 = sshll.u32 [#allocation7], 4
      %s55 = int_to_ptr.vmem [resolvable:$true] %s54
      %57 = dma.hbm_to_vmem [thread:$0]  %s2, 16, %s55, [#allocation6]
    $region13: #{tpu_custom_call.1} parent=1 // pred_fallthru
      _
    // Predicated region
    $region14: #{tpu_custom_call.1} parent=1 // pred_check
      _
    $region15: #{tpu_custom_call.1} parent=1 // pred_check_branch
      %59 = sbr.rel (0) target = $region17
    $region16: #{tpu_custom_call.1} parent=1 // pred_region
      %s61 = ssub.s32 1024, 1024
      %62 = vsyncadd [#allocation9], %s61
      %s63 = sshll.u32 [#allocation8], 4
      %s64 = int_to_ptr.vmem [resolvable:$true] %s63
      %69 = dma.hbm_to_vmem [thread:$0]  %s3, 1024, %s64, [#allocation9], 128, 128, 8
    $region17: #{tpu_custom_call.1} parent=1 // pred_fallthru
      _
    // Predicated region
    $region18: #{tpu_custom_call.1} parent=1 // pred_check
      _
    $region19: #{tpu_custom_call.1} parent=1 // pred_check_branch
      %71 = sbr.rel (0) target = $region21
    $region20: #{tpu_custom_call.1} parent=1 // pred_region
      %s73 = ssub.s32 32, 32
      %74 = vsyncadd [#allocation9], %s73
      %s76 = sshll.u32 [#allocation10], 4
      %s77 = int_to_ptr.vmem [resolvable:$true] %s76
      %79 = dma.hbm_to_vmem [thread:$0]  %s4, 32, %s77, [#allocation9]
    $region21: #{tpu_custom_call.1} parent=1 // pred_fallthru
      _
    // Predicated region
    $region22: #{tpu_custom_call.1} parent=1 // pred_check
      _
    $region23: #{tpu_custom_call.1} parent=1 // pred_check_branch
      %81 = sbr.rel (0) target = $region25
    $region24: #{tpu_custom_call.1} parent=1 // pred_region
      %s83 = ssub.s32 512, 512
      %84 = vsyncadd [#allocation12], %s83
      %s85 = sshll.u32 [#allocation11], 4
      %s86 = int_to_ptr.vmem [resolvable:$true] %s85
      %91 = dma.hbm_to_vmem [thread:$0]  %s5, 512, %s86, [#allocation12], 64, 64, 4
    $region25: #{tpu_custom_call.1} parent=1 // pred_fallthru
      _
    // Predicated region
    $region26: #{tpu_custom_call.1} parent=1 // pred_check
      _
    $region27: #{tpu_custom_call.1} parent=1 // pred_check_branch
      %93 = sbr.rel (0) target = $region29
    $region28: #{tpu_custom_call.1} parent=1 // pred_region
      %s95 = ssub.s32 16, 16
      %96 = vsyncadd [#allocation12], %s95
      %s98 = sshll.u32 [#allocation13], 4
      %s99 = int_to_ptr.vmem [resolvable:$true] %s98
      %101 = dma.hbm_to_vmem [thread:$0]  %s6, 16, %s99, [#allocation12]
    $region29: #{tpu_custom_call.1} parent=1 // pred_fallthru
      _
    // Predicated region
    $region30: #{tpu_custom_call.1} parent=1 // pred_check
      _
    $region31: #{tpu_custom_call.1} parent=1 // pred_check_branch
      %103 = sbr.rel (0) target = $region33
    $region32: #{tpu_custom_call.1} parent=1 // pred_region
      %s105 = ssub.s32 16, 16
      %106 = vsyncadd [#allocation15], %s105
      %s108 = sshll.u32 [#allocation14], 4
      %s109 = int_to_ptr.vmem [resolvable:$true] %s108
      %111 = dma.hbm_to_vmem [thread:$0]  %s7, 16, %s109, [#allocation15]
    $region33: #{tpu_custom_call.1} parent=1 // pred_fallthru
      _
    // Predicated region
    $region34: #{tpu_custom_call.1} parent=1 // pred_check
      _
    $region35: #{tpu_custom_call.1} parent=1 // pred_check_branch
      %113 = sbr.rel (0) target = $region37
    $region36: #{tpu_custom_call.1} parent=1 // pred_region
      %s115 = ssub.s32 16, 16
      %116 = vsyncadd [#allocation15], %s115
      %s118 = sshll.u32 [#allocation16], 4
      %s119 = int_to_ptr.vmem [resolvable:$true] %s118
      %121 = dma.hbm_to_vmem [thread:$0]  %s8, 16, %s119, [#allocation15]
    $region37: #{tpu_custom_call.1} parent=1 // pred_fallthru
      _
    // Predicated region
    $region38: #{tpu_custom_call.1} parent=1 // pred_check
      _
    $region39: #{tpu_custom_call.1} parent=1 // pred_check_branch
      %123 = sbr.rel (0) target = $region41
    $region40: #{tpu_custom_call.1} parent=1 // pred_region
      %s125 = ssub.s32 1024, 1024
      %126 = vsyncadd [#allocation18], %s125
      %s127 = sshll.u32 [#allocation17], 4
      %s128 = int_to_ptr.vmem [resolvable:$true] %s127
      %133 = dma.hbm_to_vmem [thread:$0]  %s9, 1024, %s128, [#allocation18], 128, 128, 8
    $region41: #{tpu_custom_call.1} parent=1 // pred_fallthru
      _
    // Predicated region
    $region42: #{tpu_custom_call.1} parent=1 // pred_check
      _
    $region43: #{tpu_custom_call.1} parent=1 // pred_check_branch
      %135 = sbr.rel (0) target = $region45
    $region44: #{tpu_custom_call.1} parent=1 // pred_region
      %s137 = ssub.s32 32, 32
      %138 = vsyncadd [#allocation18], %s137
      %s140 = sshll.u32 [#allocation19], 4
      %s141 = int_to_ptr.vmem [resolvable:$true] %s140
      %143 = dma.hbm_to_vmem [thread:$0]  %s10, 32, %s141, [#allocation18]
    $region45: #{tpu_custom_call.1} parent=1 // pred_fallthru
      _
    // Predicated region
    $region46: #{tpu_custom_call.1} parent=1 // pred_check
      _
    $region47: #{tpu_custom_call.1} parent=1 // pred_check_branch
      %145 = sbr.rel (0) target = $region49
    $region48: #{tpu_custom_call.1} parent=1 // pred_region
      %s147 = ssub.s32 2048, 2048
      %148 = vsyncadd [#allocation21], %s147
      %s149 = sshll.u32 [#allocation20], 4
      %s150 = int_to_ptr.vmem [resolvable:$true] %s149
      %155 = dma.hbm_to_vmem [thread:$0]  %s11, 2048, %s150, [#allocation21], 64, 64, 4
    $region49: #{tpu_custom_call.1} parent=1 // pred_fallthru
      _
    // Predicated region
    $region50: #{tpu_custom_call.1} parent=1 // pred_check
      _
    $region51: #{tpu_custom_call.1} parent=1 // pred_check_branch
      %157 = sbr.rel (0) target = $region53
    $region52: #{tpu_custom_call.1} parent=1 // pred_region
      %s159 = ssub.s32 16, 16
      %160 = vsyncadd [#allocation21], %s159
      %s162 = sshll.u32 [#allocation22], 4
      %s163 = int_to_ptr.vmem [resolvable:$true] %s162
      %165 = dma.hbm_to_vmem [thread:$0]  %s12, 16, %s163, [#allocation21]
    $region53: #{tpu_custom_call.1} parent=1 // pred_fallthru
      _
    // Predicated region
    $region54: #{tpu_custom_call.1} parent=1 // pred_check
      _
    $region55: #{tpu_custom_call.1} parent=1 // pred_check_branch
      %167 = sbr.rel (0) target = $region57
    $region56: #{tpu_custom_call.1} parent=1 // pred_region
      %168 = dma.done [#allocation3], 256
    $region57: #{tpu_custom_call.1} parent=1 // pred_fallthru
      _
    // Predicated region
    $region58: #{tpu_custom_call.1} parent=1 // pred_check
      _
    $region59: #{tpu_custom_call.1} parent=1 // pred_check_branch
      %170 = sbr.rel (0) target = $region61
    $region60: #{tpu_custom_call.1} parent=1 // pred_region
      %171 = dma.done [#allocation6], 16
    $region61: #{tpu_custom_call.1} parent=1 // pred_fallthru
      _
    // Predicated region
    $region62: #{tpu_custom_call.1} parent=1 // pred_check
      _
    $region63: #{tpu_custom_call.1} parent=1 // pred_check_branch
      %173 = sbr.rel (0) target = $region65
    $region64: #{tpu_custom_call.1} parent=1 // pred_region
      %174 = dma.done [#allocation6], 16
    $region65: #{tpu_custom_call.1} parent=1 // pred_fallthru
      _
    // Predicated region
    $region66: #{tpu_custom_call.1} parent=1 // pred_check
      _
    $region67: #{tpu_custom_call.1} parent=1 // pred_check_branch
      %176 = sbr.rel (0) target = $region69
    $region68: #{tpu_custom_call.1} parent=1 // pred_region
      %177 = dma.done [#allocation9], 1024
    $region69: #{tpu_custom_call.1} parent=1 // pred_fallthru
      _
    // Predicated region
    $region70: #{tpu_custom_call.1} parent=1 // pred_check
      _
    $region71: #{tpu_custom_call.1} parent=1 // pred_check_branch
      %179 = sbr.rel (0) target = $region73
    $region72: #{tpu_custom_call.1} parent=1 // pred_region
      %180 = dma.done [#allocation9], 32
    $region73: #{tpu_custom_call.1} parent=1 // pred_fallthru
      _
    // Predicated region
    $region74: #{tpu_custom_call.1} parent=1 // pred_check
      _
    $region75: #{tpu_custom_call.1} parent=1 // pred_check_branch
      %182 = sbr.rel (0) target = $region77
    $region76: #{tpu_custom_call.1} parent=1 // pred_region
      %183 = dma.done [#allocation12], 512
    $region77: #{tpu_custom_call.1} parent=1 // pred_fallthru
      _
    // Predicated region
    $region78: #{tpu_custom_call.1} parent=1 // pred_check
      _
    $region79: #{tpu_custom_call.1} parent=1 // pred_check_branch
      %185 = sbr.rel (0) target = $region81
    $region80: #{tpu_custom_call.1} parent=1 // pred_region
      %186 = dma.done [#allocation12], 16
    $region81: #{tpu_custom_call.1} parent=1 // pred_fallthru
      _
    // Predicated region
    $region82: #{tpu_custom_call.1} parent=1 // pred_check
      _
    $region83: #{tpu_custom_call.1} parent=1 // pred_check_branch
      %188 = sbr.rel (0) target = $region85
    $region84: #{tpu_custom_call.1} parent=1 // pred_region
      %189 = dma.done [#allocation15], 16
    $region85: #{tpu_custom_call.1} parent=1 // pred_fallthru
      _
    // Predicated region
    $region86: #{tpu_custom_call.1} parent=1 // pred_check
      _
    $region87: #{tpu_custom_call.1} parent=1 // pred_check_branch
      %191 = sbr.rel (0) target = $region89
    $region88: #{tpu_custom_call.1} parent=1 // pred_region
      %192 = dma.done [#allocation15], 16
    $region89: #{tpu_custom_call.1} parent=1 // pred_fallthru
      _
    // Predicated region
    $region90: #{tpu_custom_call.1} parent=1 // pred_check
      _
    $region91: #{tpu_custom_call.1} parent=1 // pred_check_branch
      %194 = sbr.rel (0) target = $region93
    $region92: #{tpu_custom_call.1} parent=1 // pred_region
      %195 = dma.done [#allocation18], 1024
    $region93: #{tpu_custom_call.1} parent=1 // pred_fallthru
      _
    // Predicated region
    $region94: #{tpu_custom_call.1} parent=1 // pred_check
      _
    $region95: #{tpu_custom_call.1} parent=1 // pred_check_branch
      %197 = sbr.rel (0) target = $region97
    $region96: #{tpu_custom_call.1} parent=1 // pred_region
      %198 = dma.done [#allocation18], 32
    $region97: #{tpu_custom_call.1} parent=1 // pred_fallthru
      _
    // Predicated region
    $region98: #{tpu_custom_call.1} parent=1 // pred_check
      _
    $region99: #{tpu_custom_call.1} parent=1 // pred_check_branch
      %200 = sbr.rel (0) target = $region101
    $region100: #{tpu_custom_call.1} parent=1 // pred_region
      %201 = dma.done [#allocation21], 2048
    $region101: #{tpu_custom_call.1} parent=1 // pred_fallthru
      _
    // Predicated region
    $region102: #{tpu_custom_call.1} parent=1 // pred_check
      _
    $region103: #{tpu_custom_call.1} parent=1 // pred_check_branch
      %203 = sbr.rel (0) target = $region105
    $region104: #{tpu_custom_call.1} parent=1 // pred_region
      %204 = dma.done [#allocation21], 16
    $region105: #{tpu_custom_call.1} parent=1 // pred_fallthru
      _
    %v206 = vld [vmem:[#allocation2] sm:$0xff]
    %v207 = vld [vmem:[#allocation2 + $0x8] sm:$0xff]
    %v208 = vld [vmem:[#allocation5] sm:$0x1]
    %v209 = vld [vmem:[#allocation7] sm:$0x1]
    %vm210 = vcmask 523264
    %v211 = vsel %vm210, %v206, 0.0
    %212 = vadd.xlane.f32.xlu0 %v211
    %v213 = vpop.xlane.xlu0 %212
    %v214 = vsel %vm210, %v207, 0.0
    %215 = vadd.xlane.f32.xlu0 %v214
    %v216 = vpop.xlane.xlu0 %215
    %v217 = vrcp.pop 64.0
    %v218 = vmul.f32 %v213, %v217
    %v219 = vmul.f32 %v216, %v217
    %v220 = vsub.f32 %v206, %v218
    %v221 = vsub.f32 %v207, %v219
    %v222 = vmul.f32 %v220, %v220
    %v223 = vmul.f32 %v221, %v221
    %v224 = vsel %vm210, %v222, 0.0
    %225 = vadd.xlane.f32.xlu0 %v224
    %v226 = vpop.xlane.xlu0 %225
    %v227 = vsel %vm210, %v223, 0.0
    %228 = vadd.xlane.f32.xlu0 %v227
    %v229 = vpop.xlane.xlu0 %228
    %v230 = vmul.f32 %v226, %v217
    %v231 = vmul.f32 %v229, %v217
    %v232 = vadd.f32 %v230, 1e-05
    %v233 = vadd.f32 %v231, 1e-05
    %v234 = vrsqrt.pop %v232
    %v235 = vrsqrt.pop %v233
    %v236 = vmul.f32 %v220, %v234
    %v237 = vmul.f32 %v221, %v235
    %v239 = vlaneseq
    %v240 = vshrl.u32 %v239, 7
    %v241 = vsub.s32 0, %v240
    %v242 = vrot.slane %v208, %v241
    %v244 = vmul.f32 %v236, %v242
    %v245 = vmul.f32 %v237, %v242
    %v247 = vlaneseq
    %v248 = vshrl.u32 %v247, 7
    %v249 = vsub.s32 0, %v248
    %v250 = vrot.slane %v209, %v249
    %v252 = vadd.f32 %v244, %v250
    %v253 = vadd.f32 %v245, %v250
    %v254 = vpack.c.bf16 %v253, %v252
    %v255 = vld [vmem:[#allocation8] sm:$0xff]
    %v256 = vld [vmem:[#allocation8 + $0x8] sm:$0xff]
    %v257 = vld [vmem:[#allocation8 + $0x10] sm:$0xff]
    %v258 = vld [vmem:[#allocation8 + $0x18] sm:$0xff]
    %v259 = vld [vmem:[#allocation8 + $0x20] sm:$0xff]
    %v260 = vld [vmem:[#allocation8 + $0x28] sm:$0xff]
    %v261 = vld [vmem:[#allocation8 + $0x30] sm:$0xff]
    %v262 = vld [vmem:[#allocation8 + $0x38] sm:$0xff]
    %v263 = vld [vmem:[#allocation10] sm:$0x3]
    %v265 = vlaneseq
    %v266 = vshrl.u32 %v265, 7
    %v267 = vsub.s32 0, %v266
    %v268 = vrot.slane %v263, %v267
    %v269 = vlaneseq
    %v270 = vshrl.u32 %v269, 7
    %v271 = vsub.s32 1, %v270
    %v272 = vrot.slane %v263, %v271
    %v283 = vunpack.c.l.b16 %v255
    %v284 = vunpack.c.h.b16 %v255
    %v285 = vunpack.c.l.b16 %v256
    %v286 = vunpack.c.h.b16 %v256
    %v287 = vunpack.c.l.b16 %v257
    %v288 = vunpack.c.h.b16 %v257
    %v289 = vunpack.c.l.b16 %v258
    %v290 = vunpack.c.h.b16 %v258
    %v291 = vunpack.c.l.b16 %v259
    %v292 = vunpack.c.h.b16 %v259
    %v293 = vunpack.c.l.b16 %v260
    %v294 = vunpack.c.h.b16 %v260
    %v295 = vunpack.c.l.b16 %v261
    %v296 = vunpack.c.h.b16 %v261
    %v297 = vunpack.c.l.b16 %v262
    %v298 = vunpack.c.h.b16 %v262
    %v299 = vpack.c.b16 %v285, %v283
    %v300 = vpack.c.b16 %v286, %v284
    %v301 = vpack.c.b16 %v289, %v287
    %v302 = vpack.c.b16 %v290, %v288
    %v303 = vpack.c.b16 %v293, %v291
    %v304 = vpack.c.b16 %v294, %v292
    %v305 = vpack.c.b16 %v297, %v295
    %v306 = vpack.c.b16 %v298, %v296
    %v316 = vsel %vm210, %v254, 0
    %318 = vmatprep.subr.bf16.mxu0 %v300
    %319 = vmatpush1.bf16.msra.mxu0 %v299
    %320 = vmatprep.subr.bf16.mxu0 %v302
    %321 = vmatpush1.bf16.msra.mxu0 %v301
    %322 = vmatprep.subr.bf16.mxu0 %v304
    %323 = vmatpush1.bf16.msra.mxu0 %v303
    %324 = vmatprep.subr.bf16.mxu0 %v306
    %325 = vmatpush1.bf16.msra.mxu0 %v305
    %326 = vmatprep.subr.bf16.mxu0 0
    %327 = vmatpush1.bf16.msra.mxu0 0
    %328 = vmatprep.subr.bf16.mxu0 0
    %329 = vmatpush1.bf16.msra.mxu0 0
    %330 = vmatprep.subr.bf16.mxu0 0
    %331 = vmatpush1.bf16.msra.mxu0 0
    %332 = vmatprep.subr.bf16.mxu0 0
    %333 = vmatpush1.bf16.msra.mxu0 0
    %334 = vmatprep.subr.bf16.mxu0 0
    %335 = vmatpush1.bf16.msra.mxu0 0
    %336 = vmatprep.subr.bf16.mxu0 0
    %337 = vmatpush1.bf16.msra.mxu0 0
    %338 = vmatprep.subr.bf16.mxu0 0
    %339 = vmatpush1.bf16.msra.mxu0 0
    %340 = vmatprep.subr.bf16.mxu0 0
    %341 = vmatpush1.bf16.msra.mxu0 0
    %342 = vmatprep.subr.bf16.mxu0 0
    %343 = vmatpush1.bf16.msra.mxu0 0
    %344 = vmatprep.subr.bf16.mxu0 0
    %345 = vmatpush1.bf16.msra.mxu0 0
    %346 = vmatprep.subr.bf16.mxu0 0
    %347 = vmatpush1.bf16.msra.mxu0 0
    %348 = vmatprep.subr.bf16.mxu0 0
    %349 = vmatpush1.bf16.msra.mxu0 0
    %350 = vmatprep.mubr.bf16.mxu0 0
    %351 = vmatmul.mubr.bf16.gmra.mrb[0].mxu0 %v316
    %v352 = vpop.f32.mrb[0].mxu0
    %v353 = vadd.f32 %v268, %v352
    %v354 = vpop.f32.mrb[0].mxu0
    %v355 = vadd.f32 %v272, %v354
    %v356 = vpop.f32.mrb[0].mxu0
    %v357 = vadd.f32 %v268, %v356
    %v358 = vpop.f32.mrb[0].mxu0
    %v359 = vadd.f32 %v272, %v358
    %360 = vdwg.mxu0
    %v361 = vmul.f32 %v353, 0.25
    %v362 = vmul.f32 %v357, 0.25
    %v363 = vpack.c.bf16 %v362, %v361
    %v365 = vunpack.c.l.b16 %v363
    %v366 = vunpack.c.h.b16 %v363
    %v367 = vpack.c.b16 %v365, %v365
    %v368 = vpack.c.b16 %v366, %v366
    %v369 = vpack.c.bf16 %v357, %v353
    %v371 = vunpack.c.l.b16 %v369
    %v372 = vunpack.c.h.b16 %v369
    %v373 = vpack.c.bf16 %v359, %v355
    %v375 = vunpack.c.l.b16 %v373
    %v376 = vunpack.c.h.b16 %v373
    %v377 = vpack.c.b16 %v375, %v375
    %v378 = vpack.c.b16 %v376, %v376
    %v379 = vlaneseq
    %v380 = vshrl.u32 %v379, 7
    %v381 = vlaneseq
    %v382 = vand.u32 %v381, 127
    %vm383 = vcmp.gt.s32.totalorder %v382, %v380
    %v384 = vsel %vm383, -1e+30, 0.0
    %v385 = vpack.c.b16 %v371, %v371
    %386 = vrot.lane.b32.xlu0 %v385, 64
    %v387 = vpop.permute.xlu0 %386
    %vm388 = vcmask 130048
    %v390 = vsel %vm388, %v367, 0
    %v393 = vsel %vm388, %v387, 0
    %395 = vmatprep.subr.bf16.mxu0 0
    %396 = vmatpush1.bf16.xpose.msra.mxu0 %v393
    %397 = vmatprep.subr.bf16.mxu0 0
    %398 = vmatpush1.bf16.xpose.msra.mxu0 0
    %399 = vmatprep.subr.bf16.mxu0 0
    %400 = vmatpush1.bf16.xpose.msra.mxu0 0
    %401 = vmatprep.subr.bf16.mxu0 0
    %402 = vmatpush1.bf16.xpose.msra.mxu0 0
    %403 = vmatprep.subr.bf16.mxu0 0
    %404 = vmatpush1.bf16.xpose.msra.mxu0 0
    %405 = vmatprep.subr.bf16.mxu0 0
    %406 = vmatpush1.bf16.xpose.msra.mxu0 0
    %407 = vmatprep.subr.bf16.mxu0 0
    %408 = vmatpush1.bf16.xpose.msra.mxu0 0
    %409 = vmatprep.subr.bf16.mxu0 0
    %410 = vmatpush1.bf16.xpose.msra.mxu0 0
    %411 = vmatprep.subr.bf16.mxu0 0
    %412 = vmatpush1.bf16.xpose.msra.mxu0 0
    %413 = vmatprep.subr.bf16.mxu0 0
    %414 = vmatpush1.bf16.xpose.msra.mxu0 0
    %415 = vmatprep.subr.bf16.mxu0 0
    %416 = vmatpush1.bf16.xpose.msra.mxu0 0
    %417 = vmatprep.subr.bf16.mxu0 0
    %418 = vmatpush1.bf16.xpose.msra.mxu0 0
    %419 = vmatprep.subr.bf16.mxu0 0
    %420 = vmatpush1.bf16.xpose.msra.mxu0 0
    %421 = vmatprep.subr.bf16.mxu0 0
    %422 = vmatpush1.bf16.xpose.msra.mxu0 0
    %423 = vmatprep.subr.bf16.mxu0 0
    %424 = vmatpush1.bf16.xpose.msra.mxu0 0
    %425 = vmatprep.subr.bf16.mxu0 0
    %426 = vmatpush1.bf16.xpose.msra.mxu0 0
    %427 = vmatprep.mubr.bf16.mxu0 0
    %428 = vmatmul.mubr.bf16.gmra.mrb[0].mxu0 %v390
    %v429 = vpop.f32.mrb[0].mxu0
    %v430 = vadd.f32 %v384, %v429
    %v431 = vpop.f32.mrb[0].mxu0
    %v432 = vpop.f32.mrb[0].mxu0
    %v433 = vpop.f32.mrb[0].mxu0
    %434 = vdwg.mxu0
    %v435 = vpack.c.b16 %v372, %v372
    %436 = vrot.lane.b32.xlu0 %v435, 64
    %v437 = vpop.permute.xlu0 %436
    %v439 = vsel %vm388, %v368, 0
    %v442 = vsel %vm388, %v437, 0
    %444 = vmatprep.subr.bf16.mxu0 0
    %445 = vmatpush1.bf16.xpose.msra.mxu0 %v442
    %446 = vmatprep.subr.bf16.mxu0 0
    %447 = vmatpush1.bf16.xpose.msra.mxu0 0
    %448 = vmatprep.subr.bf16.mxu0 0
    %449 = vmatpush1.bf16.xpose.msra.mxu0 0
    %450 = vmatprep.subr.bf16.mxu0 0
    %451 = vmatpush1.bf16.xpose.msra.mxu0 0
    %452 = vmatprep.subr.bf16.mxu0 0
    %453 = vmatpush1.bf16.xpose.msra.mxu0 0
    %454 = vmatprep.subr.bf16.mxu0 0
    %455 = vmatpush1.bf16.xpose.msra.mxu0 0
    %456 = vmatprep.subr.bf16.mxu0 0
    %457 = vmatpush1.bf16.xpose.msra.mxu0 0
    %458 = vmatprep.subr.bf16.mxu0 0
    %459 = vmatpush1.bf16.xpose.msra.mxu0 0
    %460 = vmatprep.subr.bf16.mxu0 0
    %461 = vmatpush1.bf16.xpose.msra.mxu0 0
    %462 = vmatprep.subr.bf16.mxu0 0
    %463 = vmatpush1.bf16.xpose.msra.mxu0 0
    %464 = vmatprep.subr.bf16.mxu0 0
    %465 = vmatpush1.bf16.xpose.msra.mxu0 0
    %466 = vmatprep.subr.bf16.mxu0 0
    %467 = vmatpush1.bf16.xpose.msra.mxu0 0
    %468 = vmatprep.subr.bf16.mxu0 0
    %469 = vmatpush1.bf16.xpose.msra.mxu0 0
    %470 = vmatprep.subr.bf16.mxu0 0
    %471 = vmatpush1.bf16.xpose.msra.mxu0 0
    %472 = vmatprep.subr.bf16.mxu0 0
    %473 = vmatpush1.bf16.xpose.msra.mxu0 0
    %474 = vmatprep.subr.bf16.mxu0 0
    %475 = vmatpush1.bf16.xpose.msra.mxu0 0
    %476 = vmatprep.mubr.bf16.mxu0 0
    %477 = vmatmul.mubr.bf16.gmra.mrb[0].mxu0 %v439
    %v478 = vpop.f32.mrb[0].mxu0
    %v479 = vadd.f32 %v384, %v478
    %v480 = vpop.f32.mrb[0].mxu0
    %v481 = vpop.f32.mrb[0].mxu0
    %v482 = vpop.f32.mrb[0].mxu0
    %483 = vdwg.mxu0
    %vm484 = vcmask 64512
    %v485 = vsel %vm484, %v430, -inf
    %486 = vmax.xlane.f32.xlu0 %v485
    %v487 = vpop.xlane.xlu0 %486
    %v488 = vsel %vm484, %v479, -inf
    %489 = vmax.xlane.f32.xlu0 %v488
    %v490 = vpop.xlane.xlu0 %489
    %v491 = vsub.f32 %v430, %v487
    %v492 = vsub.f32 %v479, %v490
    %v493 = vmul.f32 %v491, 1.442695
    %v494 = vpow.pop %v493
    %v495 = vmul.f32 %v492, 1.442695
    %v496 = vpow.pop %v495
    %v497 = vsel %vm484, %v494, 0.0
    %498 = vadd.xlane.f32.xlu0 %v497
    %v499 = vpop.xlane.xlu0 %498
    %v500 = vsel %vm484, %v496, 0.0
    %501 = vadd.xlane.f32.xlu0 %v500
    %v502 = vpop.xlane.xlu0 %501
    %v503 = vrcp.pop %v499
    %v504 = vrcp.pop %v502
    %v505 = vmul.f32 %v494, %v503
    %v506 = vmul.f32 %v496, %v504
    %v507 = vpack.c.bf16 %v505, %v505
    %v508 = vpack.c.bf16 %v506, %v506
    %v510 = vsel %vm484, %v507, 0
    %vm512 = vcmask 1043456
    %v514 = vsel %vm512, %v377, 0
    %516 = vmatprep.subr.bf16.mxu0 0
    %517 = vmatpush1.bf16.msra.mxu0 %v514
    %518 = vmatprep.subr.bf16.mxu0 0
    %519 = vmatpush1.bf16.msra.mxu0 0
    %520 = vmatprep.subr.bf16.mxu0 0
    %521 = vmatpush1.bf16.msra.mxu0 0
    %522 = vmatprep.subr.bf16.mxu0 0
    %523 = vmatpush1.bf16.msra.mxu0 0
    %524 = vmatprep.subr.bf16.mxu0 0
    %525 = vmatpush1.bf16.msra.mxu0 0
    %526 = vmatprep.subr.bf16.mxu0 0
    %527 = vmatpush1.bf16.msra.mxu0 0
    %528 = vmatprep.subr.bf16.mxu0 0
    %529 = vmatpush1.bf16.msra.mxu0 0
    %530 = vmatprep.subr.bf16.mxu0 0
    %531 = vmatpush1.bf16.msra.mxu0 0
    %532 = vmatprep.subr.bf16.mxu0 0
    %533 = vmatpush1.bf16.msra.mxu0 0
    %534 = vmatprep.subr.bf16.mxu0 0
    %535 = vmatpush1.bf16.msra.mxu0 0
    %536 = vmatprep.subr.bf16.mxu0 0
    %537 = vmatpush1.bf16.msra.mxu0 0
    %538 = vmatprep.subr.bf16.mxu0 0
    %539 = vmatpush1.bf16.msra.mxu0 0
    %540 = vmatprep.subr.bf16.mxu0 0
    %541 = vmatpush1.bf16.msra.mxu0 0
    %542 = vmatprep.subr.bf16.mxu0 0
    %543 = vmatpush1.bf16.msra.mxu0 0
    %544 = vmatprep.subr.bf16.mxu0 0
    %545 = vmatpush1.bf16.msra.mxu0 0
    %546 = vmatprep.subr.bf16.mxu0 0
    %547 = vmatpush1.bf16.msra.mxu0 0
    %548 = vmatprep.mubr.bf16.mxu0 0
    %549 = vmatmul.mubr.bf16.gmra.mrb[0].mxu0 %v510
    %v550 = vpop.f32.mrb[0].mxu0
    %v551 = vadd.f32 0.0, %v550
    %v552 = vpop.f32.mrb[0].mxu0
    %v553 = vpop.f32.mrb[0].mxu0
    %v554 = vpop.f32.mrb[0].mxu0
    %555 = vdwg.mxu0
    %v557 = vsel %vm484, %v508, 0
    %v560 = vsel %vm512, %v378, 0
    %562 = vmatprep.subr.bf16.mxu0 0
    %563 = vmatpush1.bf16.msra.mxu0 %v560
    %564 = vmatprep.subr.bf16.mxu0 0
    %565 = vmatpush1.bf16.msra.mxu0 0
    %566 = vmatprep.subr.bf16.mxu0 0
    %567 = vmatpush1.bf16.msra.mxu0 0
    %568 = vmatprep.subr.bf16.mxu0 0
    %569 = vmatpush1.bf16.msra.mxu0 0
    %570 = vmatprep.subr.bf16.mxu0 0
    %571 = vmatpush1.bf16.msra.mxu0 0
    %572 = vmatprep.subr.bf16.mxu0 0
    %573 = vmatpush1.bf16.msra.mxu0 0
    %574 = vmatprep.subr.bf16.mxu0 0
    %575 = vmatpush1.bf16.msra.mxu0 0
    %576 = vmatprep.subr.bf16.mxu0 0
    %577 = vmatpush1.bf16.msra.mxu0 0
    %578 = vmatprep.subr.bf16.mxu0 0
    %579 = vmatpush1.bf16.msra.mxu0 0
    %580 = vmatprep.subr.bf16.mxu0 0
    %581 = vmatpush1.bf16.msra.mxu0 0
    %582 = vmatprep.subr.bf16.mxu0 0
    %583 = vmatpush1.bf16.msra.mxu0 0
    %584 = vmatprep.subr.bf16.mxu0 0
    %585 = vmatpush1.bf16.msra.mxu0 0
    %586 = vmatprep.subr.bf16.mxu0 0
    %587 = vmatpush1.bf16.msra.mxu0 0
    %588 = vmatprep.subr.bf16.mxu0 0
    %589 = vmatpush1.bf16.msra.mxu0 0
    %590 = vmatprep.subr.bf16.mxu0 0
    %591 = vmatpush1.bf16.msra.mxu0 0
    %592 = vmatprep.subr.bf16.mxu0 0
    %593 = vmatpush1.bf16.msra.mxu0 0
    %594 = vmatprep.mubr.bf16.mxu0 0
    %595 = vmatmul.mubr.bf16.gmra.mrb[0].mxu0 %v557
    %v596 = vpop.f32.mrb[0].mxu0
    %v597 = vadd.f32 0.0, %v596
    %v598 = vpop.f32.mrb[0].mxu0
    %v599 = vpop.f32.mrb[0].mxu0
    %v600 = vpop.f32.mrb[0].mxu0
    %601 = vdwg.mxu0
    %602 = vrot.lane.b32.xlu0 %v367, 112
    %v603 = vpop.permute.xlu0 %602
    %604 = vrot.lane.b32.xlu0 %v385, 48
    %v605 = vpop.permute.xlu0 %604
    %v607 = vsel %vm388, %v603, 0
    %v610 = vsel %vm388, %v605, 0
    %612 = vmatprep.subr.bf16.mxu0 0
    %613 = vmatpush1.bf16.xpose.msra.mxu0 %v610
    %614 = vmatprep.subr.bf16.mxu0 0
    %615 = vmatpush1.bf16.xpose.msra.mxu0 0
    %616 = vmatprep.subr.bf16.mxu0 0
    %617 = vmatpush1.bf16.xpose.msra.mxu0 0
    %618 = vmatprep.subr.bf16.mxu0 0
    %619 = vmatpush1.bf16.xpose.msra.mxu0 0
    %620 = vmatprep.subr.bf16.mxu0 0
    %621 = vmatpush1.bf16.xpose.msra.mxu0 0
    %622 = vmatprep.subr.bf16.mxu0 0
    %623 = vmatpush1.bf16.xpose.msra.mxu0 0
    %624 = vmatprep.subr.bf16.mxu0 0
    %625 = vmatpush1.bf16.xpose.msra.mxu0 0
    %626 = vmatprep.subr.bf16.mxu0 0
    %627 = vmatpush1.bf16.xpose.msra.mxu0 0
    %628 = vmatprep.subr.bf16.mxu0 0
    %629 = vmatpush1.bf16.xpose.msra.mxu0 0
    %630 = vmatprep.subr.bf16.mxu0 0
    %631 = vmatpush1.bf16.xpose.msra.mxu0 0
    %632 = vmatprep.subr.bf16.mxu0 0
    %633 = vmatpush1.bf16.xpose.msra.mxu0 0
    %634 = vmatprep.subr.bf16.mxu0 0
    %635 = vmatpush1.bf16.xpose.msra.mxu0 0
    %636 = vmatprep.subr.bf16.mxu0 0
    %637 = vmatpush1.bf16.xpose.msra.mxu0 0
    %638 = vmatprep.subr.bf16.mxu0 0
    %639 = vmatpush1.bf16.xpose.msra.mxu0 0
    %640 = vmatprep.subr.bf16.mxu0 0
    %641 = vmatpush1.bf16.xpose.msra.mxu0 0
    %642 = vmatprep.subr.bf16.mxu0 0
    %643 = vmatpush1.bf16.xpose.msra.mxu0 0
    %644 = vmatprep.mubr.bf16.mxu0 0
    %645 = vmatmul.mubr.bf16.gmra.mrb[0].mxu0 %v607
    %v646 = vpop.f32.mrb[0].mxu0
    %v647 = vadd.f32 %v384, %v646
    %v648 = vpop.f32.mrb[0].mxu0
    %v649 = vpop.f32.mrb[0].mxu0
    %v650 = vpop.f32.mrb[0].mxu0
    %651 = vdwg.mxu0
    %652 = vrot.lane.b32.xlu0 %v368, 112
    %v653 = vpop.permute.xlu0 %652
    %654 = vrot.lane.b32.xlu0 %v435, 48
    %v655 = vpop.permute.xlu0 %654
    %v657 = vsel %vm388, %v653, 0
    %v660 = vsel %vm388, %v655, 0
    %662 = vmatprep.subr.bf16.mxu0 0
    %663 = vmatpush1.bf16.xpose.msra.mxu0 %v660
    %664 = vmatprep.subr.bf16.mxu0 0
    %665 = vmatpush1.bf16.xpose.msra.mxu0 0
    %666 = vmatprep.subr.bf16.mxu0 0
    %667 = vmatpush1.bf16.xpose.msra.mxu0 0
    %668 = vmatprep.subr.bf16.mxu0 0
    %669 = vmatpush1.bf16.xpose.msra.mxu0 0
    %670 = vmatprep.subr.bf16.mxu0 0
    %671 = vmatpush1.bf16.xpose.msra.mxu0 0
    %672 = vmatprep.subr.bf16.mxu0 0
    %673 = vmatpush1.bf16.xpose.msra.mxu0 0
    %674 = vmatprep.subr.bf16.mxu0 0
    %675 = vmatpush1.bf16.xpose.msra.mxu0 0
    %676 = vmatprep.subr.bf16.mxu0 0
    %677 = vmatpush1.bf16.xpose.msra.mxu0 0
    %678 = vmatprep.subr.bf16.mxu0 0
    %679 = vmatpush1.bf16.xpose.msra.mxu0 0
    %680 = vmatprep.subr.bf16.mxu0 0
    %681 = vmatpush1.bf16.xpose.msra.mxu0 0
    %682 = vmatprep.subr.bf16.mxu0 0
    %683 = vmatpush1.bf16.xpose.msra.mxu0 0
    %684 = vmatprep.subr.bf16.mxu0 0
    %685 = vmatpush1.bf16.xpose.msra.mxu0 0
    %686 = vmatprep.subr.bf16.mxu0 0
    %687 = vmatpush1.bf16.xpose.msra.mxu0 0
    %688 = vmatprep.subr.bf16.mxu0 0
    %689 = vmatpush1.bf16.xpose.msra.mxu0 0
    %690 = vmatprep.subr.bf16.mxu0 0
    %691 = vmatpush1.bf16.xpose.msra.mxu0 0
    %692 = vmatprep.subr.bf16.mxu0 0
    %693 = vmatpush1.bf16.xpose.msra.mxu0 0
    %694 = vmatprep.mubr.bf16.mxu0 0
    %695 = vmatmul.mubr.bf16.gmra.mrb[0].mxu0 %v657
    %v696 = vpop.f32.mrb[0].mxu0
    %v697 = vadd.f32 %v384, %v696
    %v698 = vpop.f32.mrb[0].mxu0
    %v699 = vpop.f32.mrb[0].mxu0
    %v700 = vpop.f32.mrb[0].mxu0
    %701 = vdwg.mxu0
    %v702 = vsel %vm484, %v647, -inf
    %703 = vmax.xlane.f32.xlu0 %v702
    %v704 = vpop.xlane.xlu0 %703
    %v705 = vsel %vm484, %v697, -inf
    %706 = vmax.xlane.f32.xlu0 %v705
    %v707 = vpop.xlane.xlu0 %706
    %v708 = vsub.f32 %v647, %v704
    %v709 = vsub.f32 %v697, %v707
    %v710 = vmul.f32 %v708, 1.442695
    %v711 = vpow.pop %v710
    %v712 = vmul.f32 %v709, 1.442695
    %v713 = vpow.pop %v712
    %v714 = vsel %vm484, %v711, 0.0
    %715 = vadd.xlane.f32.xlu0 %v714
    %v716 = vpop.xlane.xlu0 %715
    %v717 = vsel %vm484, %v713, 0.0
    %718 = vadd.xlane.f32.xlu0 %v717
    %v719 = vpop.xlane.xlu0 %718
    %v720 = vrcp.pop %v716
    %v721 = vrcp.pop %v719
    %v722 = vmul.f32 %v711, %v720
    %v723 = vmul.f32 %v713, %v721
    %v724 = vpack.c.bf16 %v722, %v722
    %v725 = vpack.c.bf16 %v723, %v723
    %726 = vrot.lane.b32.xlu0 %v377, 112
    %v727 = vpop.permute.xlu0 %726
    %v729 = vsel %vm484, %v724, 0
    %v732 = vsel %vm512, %v727, 0
    %734 = vmatprep.subr.bf16.mxu0 0
    %735 = vmatpush1.bf16.msra.mxu0 %v732
    %736 = vmatprep.subr.bf16.mxu0 0
    %737 = vmatpush1.bf16.msra.mxu0 0
    %738 = vmatprep.subr.bf16.mxu0 0
    %739 = vmatpush1.bf16.msra.mxu0 0
    %740 = vmatprep.subr.bf16.mxu0 0
    %741 = vmatpush1.bf16.msra.mxu0 0
    %742 = vmatprep.subr.bf16.mxu0 0
    %743 = vmatpush1.bf16.msra.mxu0 0
    %744 = vmatprep.subr.bf16.mxu0 0
    %745 = vmatpush1.bf16.msra.mxu0 0
    %746 = vmatprep.subr.bf16.mxu0 0
    %747 = vmatpush1.bf16.msra.mxu0 0
    %748 = vmatprep.subr.bf16.mxu0 0
    %749 = vmatpush1.bf16.msra.mxu0 0
    %750 = vmatprep.subr.bf16.mxu0 0
    %751 = vmatpush1.bf16.msra.mxu0 0
    %752 = vmatprep.subr.bf16.mxu0 0
    %753 = vmatpush1.bf16.msra.mxu0 0
    %754 = vmatprep.subr.bf16.mxu0 0
    %755 = vmatpush1.bf16.msra.mxu0 0
    %756 = vmatprep.subr.bf16.mxu0 0
    %757 = vmatpush1.bf16.msra.mxu0 0
    %758 = vmatprep.subr.bf16.mxu0 0
    %759 = vmatpush1.bf16.msra.mxu0 0
    %760 = vmatprep.subr.bf16.mxu0 0
    %761 = vmatpush1.bf16.msra.mxu0 0
    %762 = vmatprep.subr.bf16.mxu0 0
    %763 = vmatpush1.bf16.msra.mxu0 0
    %764 = vmatprep.subr.bf16.mxu0 0
    %765 = vmatpush1.bf16.msra.mxu0 0
    %766 = vmatprep.mubr.bf16.mxu0 0
    %767 = vmatmul.mubr.bf16.gmra.mrb[0].mxu0 %v729
    %v768 = vpop.f32.mrb[0].mxu0
    %v769 = vadd.f32 0.0, %v768
    %v770 = vpop.f32.mrb[0].mxu0
    %v771 = vpop.f32.mrb[0].mxu0
    %v772 = vpop.f32.mrb[0].mxu0
    %773 = vdwg.mxu0
    %774 = vrot.lane.b32.xlu0 %v378, 112
    %v775 = vpop.permute.xlu0 %774
    %v777 = vsel %vm484, %v725, 0
    %v780 = vsel %vm512, %v775, 0
    %782 = vmatprep.subr.bf16.mxu0 0
    %783 = vmatpush1.bf16.msra.mxu0 %v780
    %784 = vmatprep.subr.bf16.mxu0 0
    %785 = vmatpush1.bf16.msra.mxu0 0
    %786 = vmatprep.subr.bf16.mxu0 0
    %787 = vmatpush1.bf16.msra.mxu0 0
    %788 = vmatprep.subr.bf16.mxu0 0
    %789 = vmatpush1.bf16.msra.mxu0 0
    %790 = vmatprep.subr.bf16.mxu0 0
    %791 = vmatpush1.bf16.msra.mxu0 0
    %792 = vmatprep.subr.bf16.mxu0 0
    %793 = vmatpush1.bf16.msra.mxu0 0
    %794 = vmatprep.subr.bf16.mxu0 0
    %795 = vmatpush1.bf16.msra.mxu0 0
    %796 = vmatprep.subr.bf16.mxu0 0
    %797 = vmatpush1.bf16.msra.mxu0 0
    %798 = vmatprep.subr.bf16.mxu0 0
    %799 = vmatpush1.bf16.msra.mxu0 0
    %800 = vmatprep.subr.bf16.mxu0 0
    %801 = vmatpush1.bf16.msra.mxu0 0
    %802 = vmatprep.subr.bf16.mxu0 0
    %803 = vmatpush1.bf16.msra.mxu0 0
    %804 = vmatprep.subr.bf16.mxu0 0
    %805 = vmatpush1.bf16.msra.mxu0 0
    %806 = vmatprep.subr.bf16.mxu0 0
    %807 = vmatpush1.bf16.msra.mxu0 0
    %808 = vmatprep.subr.bf16.mxu0 0
    %809 = vmatpush1.bf16.msra.mxu0 0
    %810 = vmatprep.subr.bf16.mxu0 0
    %811 = vmatpush1.bf16.msra.mxu0 0
    %812 = vmatprep.subr.bf16.mxu0 0
    %813 = vmatpush1.bf16.msra.mxu0 0
    %814 = vmatprep.mubr.bf16.mxu0 0
    %815 = vmatmul.mubr.bf16.gmra.mrb[0].mxu0 %v777
    %v816 = vpop.f32.mrb[0].mxu0
    %v817 = vadd.f32 0.0, %v816
    %v818 = vpop.f32.mrb[0].mxu0
    %v819 = vpop.f32.mrb[0].mxu0
    %v820 = vpop.f32.mrb[0].mxu0
    %821 = vdwg.mxu0
    %822 = vrot.lane.b32.xlu0 %v367, 96
    %v823 = vpop.permute.xlu0 %822
    %824 = vrot.lane.b32.xlu0 %v385, 32
    %v825 = vpop.permute.xlu0 %824
    %v827 = vsel %vm388, %v823, 0
    %v830 = vsel %vm388, %v825, 0
    %832 = vmatprep.subr.bf16.mxu0 0
    %833 = vmatpush1.bf16.xpose.msra.mxu0 %v830
    %834 = vmatprep.subr.bf16.mxu0 0
    %835 = vmatpush1.bf16.xpose.msra.mxu0 0
    %836 = vmatprep.subr.bf16.mxu0 0
    %837 = vmatpush1.bf16.xpose.msra.mxu0 0
    %838 = vmatprep.subr.bf16.mxu0 0
    %839 = vmatpush1.bf16.xpose.msra.mxu0 0
    %840 = vmatprep.subr.bf16.mxu0 0
    %841 = vmatpush1.bf16.xpose.msra.mxu0 0
    %842 = vmatprep.subr.bf16.mxu0 0
    %843 = vmatpush1.bf16.xpose.msra.mxu0 0
    %844 = vmatprep.subr.bf16.mxu0 0
    %845 = vmatpush1.bf16.xpose.msra.mxu0 0
    %846 = vmatprep.subr.bf16.mxu0 0
    %847 = vmatpush1.bf16.xpose.msra.mxu0 0
    %848 = vmatprep.subr.bf16.mxu0 0
    %849 = vmatpush1.bf16.xpose.msra.mxu0 0
    %850 = vmatprep.subr.bf16.mxu0 0
    %851 = vmatpush1.bf16.xpose.msra.mxu0 0
    %852 = vmatprep.subr.bf16.mxu0 0
    %853 = vmatpush1.bf16.xpose.msra.mxu0 0
    %854 = vmatprep.subr.bf16.mxu0 0
    %855 = vmatpush1.bf16.xpose.msra.mxu0 0
    %856 = vmatprep.subr.bf16.mxu0 0
    %857 = vmatpush1.bf16.xpose.msra.mxu0 0
    %858 = vmatprep.subr.bf16.mxu0 0
    %859 = vmatpush1.bf16.xpose.msra.mxu0 0
    %860 = vmatprep.subr.bf16.mxu0 0
    %861 = vmatpush1.bf16.xpose.msra.mxu0 0
    %862 = vmatprep.subr.bf16.mxu0 0
    %863 = vmatpush1.bf16.xpose.msra.mxu0 0
    %864 = vmatprep.mubr.bf16.mxu0 0
    %865 = vmatmul.mubr.bf16.gmra.mrb[0].mxu0 %v827
    %v866 = vpop.f32.mrb[0].mxu0
    %v867 = vadd.f32 %v384, %v866
    %v868 = vpop.f32.mrb[0].mxu0
    %v869 = vpop.f32.mrb[0].mxu0
    %v870 = vpop.f32.mrb[0].mxu0
    %871 = vdwg.mxu0
    %872 = vrot.lane.b32.xlu0 %v368, 96
    %v873 = vpop.permute.xlu0 %872
    %874 = vrot.lane.b32.xlu0 %v435, 32
    %v875 = vpop.permute.xlu0 %874
    %v877 = vsel %vm388, %v873, 0
    %v880 = vsel %vm388, %v875, 0
    %882 = vmatprep.subr.bf16.mxu0 0
    %883 = vmatpush1.bf16.xpose.msra.mxu0 %v880
    %884 = vmatprep.subr.bf16.mxu0 0
    %885 = vmatpush1.bf16.xpose.msra.mxu0 0
    %886 = vmatprep.subr.bf16.mxu0 0
    %887 = vmatpush1.bf16.xpose.msra.mxu0 0
    %888 = vmatprep.subr.bf16.mxu0 0
    %889 = vmatpush1.bf16.xpose.msra.mxu0 0
    %890 = vmatprep.subr.bf16.mxu0 0
    %891 = vmatpush1.bf16.xpose.msra.mxu0 0
    %892 = vmatprep.subr.bf16.mxu0 0
    %893 = vmatpush1.bf16.xpose.msra.mxu0 0
    %894 = vmatprep.subr.bf16.mxu0 0
    %895 = vmatpush1.bf16.xpose.msra.mxu0 0
    %896 = vmatprep.subr.bf16.mxu0 0
    %897 = vmatpush1.bf16.xpose.msra.mxu0 0
    %898 = vmatprep.subr.bf16.mxu0 0
    %899 = vmatpush1.bf16.xpose.msra.mxu0 0
    %900 = vmatprep.subr.bf16.mxu0 0
    %901 = vmatpush1.bf16.xpose.msra.mxu0 0
    %902 = vmatprep.subr.bf16.mxu0 0
    %903 = vmatpush1.bf16.xpose.msra.mxu0 0
    %904 = vmatprep.subr.bf16.mxu0 0
    %905 = vmatpush1.bf16.xpose.msra.mxu0 0
    %906 = vmatprep.subr.bf16.mxu0 0
    %907 = vmatpush1.bf16.xpose.msra.mxu0 0
    %908 = vmatprep.subr.bf16.mxu0 0
    %909 = vmatpush1.bf16.xpose.msra.mxu0 0
    %910 = vmatprep.subr.bf16.mxu0 0
    %911 = vmatpush1.bf16.xpose.msra.mxu0 0
    %912 = vmatprep.subr.bf16.mxu0 0
    %913 = vmatpush1.bf16.xpose.msra.mxu0 0
    %914 = vmatprep.mubr.bf16.mxu0 0
    %915 = vmatmul.mubr.bf16.gmra.mrb[0].mxu0 %v877
    %v916 = vpop.f32.mrb[0].mxu0
    %v917 = vadd.f32 %v384, %v916
    %v918 = vpop.f32.mrb[0].mxu0
    %v919 = vpop.f32.mrb[0].mxu0
    %v920 = vpop.f32.mrb[0].mxu0
    %921 = vdwg.mxu0
    %v922 = vsel %vm484, %v867, -inf
    %923 = vmax.xlane.f32.xlu0 %v922
    %v924 = vpop.xlane.xlu0 %923
    %v925 = vsel %vm484, %v917, -inf
    %926 = vmax.xlane.f32.xlu0 %v925
    %v927 = vpop.xlane.xlu0 %926
    %v928 = vsub.f32 %v867, %v924
    %v929 = vsub.f32 %v917, %v927
    %v930 = vmul.f32 %v928, 1.442695
    %v931 = vpow.pop %v930
    %v932 = vmul.f32 %v929, 1.442695
    %v933 = vpow.pop %v932
    %v934 = vsel %vm484, %v931, 0.0
    %935 = vadd.xlane.f32.xlu0 %v934
    %v936 = vpop.xlane.xlu0 %935
    %v937 = vsel %vm484, %v933, 0.0
    %938 = vadd.xlane.f32.xlu0 %v937
    %v939 = vpop.xlane.xlu0 %938
    %v940 = vrcp.pop %v936
    %v941 = vrcp.pop %v939
    %v942 = vmul.f32 %v931, %v940
    %v943 = vmul.f32 %v933, %v941
    %v944 = vpack.c.bf16 %v942, %v942
    %v945 = vpack.c.bf16 %v943, %v943
    %946 = vrot.lane.b32.xlu0 %v377, 96
    %v947 = vpop.permute.xlu0 %946
    %v949 = vsel %vm484, %v944, 0
    %v952 = vsel %vm512, %v947, 0
    %954 = vmatprep.subr.bf16.mxu0 0
    %955 = vmatpush1.bf16.msra.mxu0 %v952
    %956 = vmatprep.subr.bf16.mxu0 0
    %957 = vmatpush1.bf16.msra.mxu0 0
    %958 = vmatprep.subr.bf16.mxu0 0
    %959 = vmatpush1.bf16.msra.mxu0 0
    %960 = vmatprep.subr.bf16.mxu0 0
    %961 = vmatpush1.bf16.msra.mxu0 0
    %962 = vmatprep.subr.bf16.mxu0 0
    %963 = vmatpush1.bf16.msra.mxu0 0
    %964 = vmatprep.subr.bf16.mxu0 0
    %965 = vmatpush1.bf16.msra.mxu0 0
    %966 = vmatprep.subr.bf16.mxu0 0
    %967 = vmatpush1.bf16.msra.mxu0 0
    %968 = vmatprep.subr.bf16.mxu0 0
    %969 = vmatpush1.bf16.msra.mxu0 0
    %970 = vmatprep.subr.bf16.mxu0 0
    %971 = vmatpush1.bf16.msra.mxu0 0
    %972 = vmatprep.subr.bf16.mxu0 0
    %973 = vmatpush1.bf16.msra.mxu0 0
    %974 = vmatprep.subr.bf16.mxu0 0
    %975 = vmatpush1.bf16.msra.mxu0 0
    %976 = vmatprep.subr.bf16.mxu0 0
    %977 = vmatpush1.bf16.msra.mxu0 0
    %978 = vmatprep.subr.bf16.mxu0 0
    %979 = vmatpush1.bf16.msra.mxu0 0
    %980 = vmatprep.subr.bf16.mxu0 0
    %981 = vmatpush1.bf16.msra.mxu0 0
    %982 = vmatprep.subr.bf16.mxu0 0
    %983 = vmatpush1.bf16.msra.mxu0 0
    %984 = vmatprep.subr.bf16.mxu0 0
    %985 = vmatpush1.bf16.msra.mxu0 0
    %986 = vmatprep.mubr.bf16.mxu0 0
    %987 = vmatmul.mubr.bf16.gmra.mrb[0].mxu0 %v949
    %v988 = vpop.f32.mrb[0].mxu0
    %v989 = vadd.f32 0.0, %v988
    %v990 = vpop.f32.mrb[0].mxu0
    %v991 = vpop.f32.mrb[0].mxu0
    %v992 = vpop.f32.mrb[0].mxu0
    %993 = vdwg.mxu0
    %994 = vrot.lane.b32.xlu0 %v378, 96
    %v995 = vpop.permute.xlu0 %994
    %v997 = vsel %vm484, %v945, 0
    %v1000 = vsel %vm512, %v995, 0
    %1002 = vmatprep.subr.bf16.mxu0 0
    %1003 = vmatpush1.bf16.msra.mxu0 %v1000
    %1004 = vmatprep.subr.bf16.mxu0 0
    %1005 = vmatpush1.bf16.msra.mxu0 0
    %1006 = vmatprep.subr.bf16.mxu0 0
    %1007 = vmatpush1.bf16.msra.mxu0 0
    %1008 = vmatprep.subr.bf16.mxu0 0
    %1009 = vmatpush1.bf16.msra.mxu0 0
    %1010 = vmatprep.subr.bf16.mxu0 0
    %1011 = vmatpush1.bf16.msra.mxu0 0
    %1012 = vmatprep.subr.bf16.mxu0 0
    %1013 = vmatpush1.bf16.msra.mxu0 0
    %1014 = vmatprep.subr.bf16.mxu0 0
    %1015 = vmatpush1.bf16.msra.mxu0 0
    %1016 = vmatprep.subr.bf16.mxu0 0
    %1017 = vmatpush1.bf16.msra.mxu0 0
    %1018 = vmatprep.subr.bf16.mxu0 0
    %1019 = vmatpush1.bf16.msra.mxu0 0
    %1020 = vmatprep.subr.bf16.mxu0 0
    %1021 = vmatpush1.bf16.msra.mxu0 0
    %1022 = vmatprep.subr.bf16.mxu0 0
    %1023 = vmatpush1.bf16.msra.mxu0 0
    %1024 = vmatprep.subr.bf16.mxu0 0
    %1025 = vmatpush1.bf16.msra.mxu0 0
    %1026 = vmatprep.subr.bf16.mxu0 0
    %1027 = vmatpush1.bf16.msra.mxu0 0
    %1028 = vmatprep.subr.bf16.mxu0 0
    %1029 = vmatpush1.bf16.msra.mxu0 0
    %1030 = vmatprep.subr.bf16.mxu0 0
    %1031 = vmatpush1.bf16.msra.mxu0 0
    %1032 = vmatprep.subr.bf16.mxu0 0
    %1033 = vmatpush1.bf16.msra.mxu0 0
    %1034 = vmatprep.mubr.bf16.mxu0 0
    %1035 = vmatmul.mubr.bf16.gmra.mrb[0].mxu0 %v997
    %v1036 = vpop.f32.mrb[0].mxu0
    %v1037 = vadd.f32 0.0, %v1036
    %v1038 = vpop.f32.mrb[0].mxu0
    %v1039 = vpop.f32.mrb[0].mxu0
    %v1040 = vpop.f32.mrb[0].mxu0
    %1041 = vdwg.mxu0
    %1042 = vrot.lane.b32.xlu0 %v367, 80
    %v1043 = vpop.permute.xlu0 %1042
    %1044 = vrot.lane.b32.xlu0 %v385, 16
    %v1045 = vpop.permute.xlu0 %1044
    %v1047 = vsel %vm388, %v1043, 0
    %v1050 = vsel %vm388, %v1045, 0
    %1052 = vmatprep.subr.bf16.mxu0 0
    %1053 = vmatpush1.bf16.xpose.msra.mxu0 %v1050
    %1054 = vmatprep.subr.bf16.mxu0 0
    %1055 = vmatpush1.bf16.xpose.msra.mxu0 0
    %1056 = vmatprep.subr.bf16.mxu0 0
    %1057 = vmatpush1.bf16.xpose.msra.mxu0 0
    %1058 = vmatprep.subr.bf16.mxu0 0
    %1059 = vmatpush1.bf16.xpose.msra.mxu0 0
    %1060 = vmatprep.subr.bf16.mxu0 0
    %1061 = vmatpush1.bf16.xpose.msra.mxu0 0
    %1062 = vmatprep.subr.bf16.mxu0 0
    %1063 = vmatpush1.bf16.xpose.msra.mxu0 0
    %1064 = vmatprep.subr.bf16.mxu0 0
    %1065 = vmatpush1.bf16.xpose.msra.mxu0 0
    %1066 = vmatprep.subr.bf16.mxu0 0
    %1067 = vmatpush1.bf16.xpose.msra.mxu0 0
    %1068 = vmatprep.subr.bf16.mxu0 0
    %1069 = vmatpush1.bf16.xpose.msra.mxu0 0
    %1070 = vmatprep.subr.bf16.mxu0 0
    %1071 = vmatpush1.bf16.xpose.msra.mxu0 0
    %1072 = vmatprep.subr.bf16.mxu0 0
    %1073 = vmatpush1.bf16.xpose.msra.mxu0 0
    %1074 = vmatprep.subr.bf16.mxu0 0
    %1075 = vmatpush1.bf16.xpose.msra.mxu0 0
    %1076 = vmatprep.subr.bf16.mxu0 0
    %1077 = vmatpush1.bf16.xpose.msra.mxu0 0
    %1078 = vmatprep.subr.bf16.mxu0 0
    %1079 = vmatpush1.bf16.xpose.msra.mxu0 0
    %1080 = vmatprep.subr.bf16.mxu0 0
    %1081 = vmatpush1.bf16.xpose.msra.mxu0 0
    %1082 = vmatprep.subr.bf16.mxu0 0
    %1083 = vmatpush1.bf16.xpose.msra.mxu0 0
    %1084 = vmatprep.mubr.bf16.mxu0 0
    %1085 = vmatmul.mubr.bf16.gmra.mrb[0].mxu0 %v1047
    %v1086 = vpop.f32.mrb[0].mxu0
    %v1087 = vadd.f32 %v384, %v1086
    %v1088 = vpop.f32.mrb[0].mxu0
    %v1089 = vpop.f32.mrb[0].mxu0
    %v1090 = vpop.f32.mrb[0].mxu0
    %1091 = vdwg.mxu0
    %1092 = vrot.lane.b32.xlu0 %v368, 80
    %v1093 = vpop.permute.xlu0 %1092
    %1094 = vrot.lane.b32.xlu0 %v435, 16
    %v1095 = vpop.permute.xlu0 %1094
    %v1097 = vsel %vm388, %v1093, 0
    %v1100 = vsel %vm388, %v1095, 0
    %1102 = vmatprep.subr.bf16.mxu0 0
    %1103 = vmatpush1.bf16.xpose.msra.mxu0 %v1100
    %1104 = vmatprep.subr.bf16.mxu0 0
    %1105 = vmatpush1.bf16.xpose.msra.mxu0 0
    %1106 = vmatprep.subr.bf16.mxu0 0
    %1107 = vmatpush1.bf16.xpose.msra.mxu0 0
    %1108 = vmatprep.subr.bf16.mxu0 0
    %1109 = vmatpush1.bf16.xpose.msra.mxu0 0
    %1110 = vmatprep.subr.bf16.mxu0 0
    %1111 = vmatpush1.bf16.xpose.msra.mxu0 0
    %1112 = vmatprep.subr.bf16.mxu0 0
    %1113 = vmatpush1.bf16.xpose.msra.mxu0 0
    %1114 = vmatprep.subr.bf16.mxu0 0
    %1115 = vmatpush1.bf16.xpose.msra.mxu0 0
    %1116 = vmatprep.subr.bf16.mxu0 0
    %1117 = vmatpush1.bf16.xpose.msra.mxu0 0
    %1118 = vmatprep.subr.bf16.mxu0 0
    %1119 = vmatpush1.bf16.xpose.msra.mxu0 0
    %1120 = vmatprep.subr.bf16.mxu0 0
    %1121 = vmatpush1.bf16.xpose.msra.mxu0 0
    %1122 = vmatprep.subr.bf16.mxu0 0
    %1123 = vmatpush1.bf16.xpose.msra.mxu0 0
    %1124 = vmatprep.subr.bf16.mxu0 0
    %1125 = vmatpush1.bf16.xpose.msra.mxu0 0
    %1126 = vmatprep.subr.bf16.mxu0 0
    %1127 = vmatpush1.bf16.xpose.msra.mxu0 0
    %1128 = vmatprep.subr.bf16.mxu0 0
    %1129 = vmatpush1.bf16.xpose.msra.mxu0 0
    %1130 = vmatprep.subr.bf16.mxu0 0
    %1131 = vmatpush1.bf16.xpose.msra.mxu0 0
    %1132 = vmatprep.subr.bf16.mxu0 0
    %1133 = vmatpush1.bf16.xpose.msra.mxu0 0
    %1134 = vmatprep.mubr.bf16.mxu0 0
    %1135 = vmatmul.mubr.bf16.gmra.mrb[0].mxu0 %v1097
    %v1136 = vpop.f32.mrb[0].mxu0
    %v1137 = vadd.f32 %v384, %v1136
    %v1138 = vpop.f32.mrb[0].mxu0
    %v1139 = vpop.f32.mrb[0].mxu0
    %v1140 = vpop.f32.mrb[0].mxu0
    %1141 = vdwg.mxu0
    %v1142 = vsel %vm484, %v1087, -inf
    %1143 = vmax.xlane.f32.xlu0 %v1142
    %v1144 = vpop.xlane.xlu0 %1143
    %v1145 = vsel %vm484, %v1137, -inf
    %1146 = vmax.xlane.f32.xlu0 %v1145
    %v1147 = vpop.xlane.xlu0 %1146
    %v1148 = vsub.f32 %v1087, %v1144
    %v1149 = vsub.f32 %v1137, %v1147
    %v1150 = vmul.f32 %v1148, 1.442695
    %v1151 = vpow.pop %v1150
    %v1152 = vmul.f32 %v1149, 1.442695
    %v1153 = vpow.pop %v1152
    %v1154 = vsel %vm484, %v1151, 0.0
    %1155 = vadd.xlane.f32.xlu0 %v1154
    %v1156 = vpop.xlane.xlu0 %1155
    %v1157 = vsel %vm484, %v1153, 0.0
    %1158 = vadd.xlane.f32.xlu0 %v1157
    %v1159 = vpop.xlane.xlu0 %1158
    %v1160 = vrcp.pop %v1156
    %v1161 = vrcp.pop %v1159
    %v1162 = vmul.f32 %v1151, %v1160
    %v1163 = vmul.f32 %v1153, %v1161
    %v1164 = vpack.c.bf16 %v1162, %v1162
    %v1165 = vpack.c.bf16 %v1163, %v1163
    %1166 = vrot.lane.b32.xlu0 %v377, 80
    %v1167 = vpop.permute.xlu0 %1166
    %v1169 = vsel %vm484, %v1164, 0
    %v1172 = vsel %vm512, %v1167, 0
    %1174 = vmatprep.subr.bf16.mxu0 0
    %1175 = vmatpush1.bf16.msra.mxu0 %v1172
    %1176 = vmatprep.subr.bf16.mxu0 0
    %1177 = vmatpush1.bf16.msra.mxu0 0
    %1178 = vmatprep.subr.bf16.mxu0 0
    %1179 = vmatpush1.bf16.msra.mxu0 0
    %1180 = vmatprep.subr.bf16.mxu0 0
    %1181 = vmatpush1.bf16.msra.mxu0 0
    %1182 = vmatprep.subr.bf16.mxu0 0
    %1183 = vmatpush1.bf16.msra.mxu0 0
    %1184 = vmatprep.subr.bf16.mxu0 0
    %1185 = vmatpush1.bf16.msra.mxu0 0
    %1186 = vmatprep.subr.bf16.mxu0 0
    %1187 = vmatpush1.bf16.msra.mxu0 0
    %1188 = vmatprep.subr.bf16.mxu0 0
    %1189 = vmatpush1.bf16.msra.mxu0 0
    %1190 = vmatprep.subr.bf16.mxu0 0
    %1191 = vmatpush1.bf16.msra.mxu0 0
    %1192 = vmatprep.subr.bf16.mxu0 0
    %1193 = vmatpush1.bf16.msra.mxu0 0
    %1194 = vmatprep.subr.bf16.mxu0 0
    %1195 = vmatpush1.bf16.msra.mxu0 0
    %1196 = vmatprep.subr.bf16.mxu0 0
    %1197 = vmatpush1.bf16.msra.mxu0 0
    %1198 = vmatprep.subr.bf16.mxu0 0
    %1199 = vmatpush1.bf16.msra.mxu0 0
    %1200 = vmatprep.subr.bf16.mxu0 0
    %1201 = vmatpush1.bf16.msra.mxu0 0
    %1202 = vmatprep.subr.bf16.mxu0 0
    %1203 = vmatpush1.bf16.msra.mxu0 0
    %1204 = vmatprep.subr.bf16.mxu0 0
    %1205 = vmatpush1.bf16.msra.mxu0 0
    %1206 = vmatprep.mubr.bf16.mxu0 0
    %1207 = vmatmul.mubr.bf16.gmra.mrb[0].mxu0 %v1169
    %v1208 = vpop.f32.mrb[0].mxu0
    %v1209 = vadd.f32 0.0, %v1208
    %v1210 = vpop.f32.mrb[0].mxu0
    %v1211 = vpop.f32.mrb[0].mxu0
    %v1212 = vpop.f32.mrb[0].mxu0
    %1213 = vdwg.mxu0
    %1214 = vrot.lane.b32.xlu0 %v378, 80
    %v1215 = vpop.permute.xlu0 %1214
    %v1217 = vsel %vm484, %v1165, 0
    %v1220 = vsel %vm512, %v1215, 0
    %1222 = vmatprep.subr.bf16.mxu0 0
    %1223 = vmatpush1.bf16.msra.mxu0 %v1220
    %1224 = vmatprep.subr.bf16.mxu0 0
    %1225 = vmatpush1.bf16.msra.mxu0 0
    %1226 = vmatprep.subr.bf16.mxu0 0
    %1227 = vmatpush1.bf16.msra.mxu0 0
    %1228 = vmatprep.subr.bf16.mxu0 0
    %1229 = vmatpush1.bf16.msra.mxu0 0
    %1230 = vmatprep.subr.bf16.mxu0 0
    %1231 = vmatpush1.bf16.msra.mxu0 0
    %1232 = vmatprep.subr.bf16.mxu0 0
    %1233 = vmatpush1.bf16.msra.mxu0 0
    %1234 = vmatprep.subr.bf16.mxu0 0
    %1235 = vmatpush1.bf16.msra.mxu0 0
    %1236 = vmatprep.subr.bf16.mxu0 0
    %1237 = vmatpush1.bf16.msra.mxu0 0
    %1238 = vmatprep.subr.bf16.mxu0 0
    %1239 = vmatpush1.bf16.msra.mxu0 0
    %1240 = vmatprep.subr.bf16.mxu0 0
    %1241 = vmatpush1.bf16.msra.mxu0 0
    %1242 = vmatprep.subr.bf16.mxu0 0
    %1243 = vmatpush1.bf16.msra.mxu0 0
    %1244 = vmatprep.subr.bf16.mxu0 0
    %1245 = vmatpush1.bf16.msra.mxu0 0
    %1246 = vmatprep.subr.bf16.mxu0 0
    %1247 = vmatpush1.bf16.msra.mxu0 0
    %1248 = vmatprep.subr.bf16.mxu0 0
    %1249 = vmatpush1.bf16.msra.mxu0 0
    %1250 = vmatprep.subr.bf16.mxu0 0
    %1251 = vmatpush1.bf16.msra.mxu0 0
    %1252 = vmatprep.subr.bf16.mxu0 0
    %1253 = vmatpush1.bf16.msra.mxu0 0
    %1254 = vmatprep.mubr.bf16.mxu0 0
    %1255 = vmatmul.mubr.bf16.gmra.mrb[0].mxu0 %v1217
    %v1256 = vpop.f32.mrb[0].mxu0
    %v1257 = vadd.f32 0.0, %v1256
    %v1258 = vpop.f32.mrb[0].mxu0
    %v1259 = vpop.f32.mrb[0].mxu0
    %v1260 = vpop.f32.mrb[0].mxu0
    %1261 = vdwg.mxu0
    %1264 = vrot.lane.b32.xlu0 %v769, 16
    %v1265 = vpop.permute.xlu0 %1264
    %1266 = vrot.lane.b32.xlu0 %v817, 16
    %v1267 = vpop.permute.xlu0 %1266
    %1272 = vrot.lane.b32.xlu0 %v989, 32
    %v1273 = vpop.permute.xlu0 %1272
    %1274 = vrot.lane.b32.xlu0 %v1037, 32
    %v1275 = vpop.permute.xlu0 %1274
    %1280 = vrot.lane.b32.xlu0 %v1209, 48
    %v1281 = vpop.permute.xlu0 %1280
    %1282 = vrot.lane.b32.xlu0 %v1257, 48
    %v1283 = vpop.permute.xlu0 %1282
    %v1286 = vsel %vm388, %v551, %v1265
    %v1287 = vsel %vm388, %v597, %v1267
    %vm1288 = vcmask 261120
    %v1289 = vsel %vm1288, %v1286, %v1273
    %v1290 = vsel %vm1288, %v1287, %v1275
    %vm1291 = vcmask 392192
    %v1292 = vsel %vm1291, %v1289, %v1281
    %v1293 = vsel %vm1291, %v1290, %v1283
    %v1294 = vpack.c.bf16 %v1293, %v1292
    %v1295 = vld [vmem:[#allocation11] sm:$0xf]
    %v1296 = vld [vmem:[#allocation11 + $0x4] sm:$0xf]
    %v1297 = vld [vmem:[#allocation11 + $0x8] sm:$0xf]
    %v1298 = vld [vmem:[#allocation11 + $0xc] sm:$0xf]
    %v1299 = vld [vmem:[#allocation11 + $0x10] sm:$0xf]
    %v1300 = vld [vmem:[#allocation11 + $0x14] sm:$0xf]
    %v1301 = vld [vmem:[#allocation11 + $0x18] sm:$0xf]
    %v1302 = vld [vmem:[#allocation11 + $0x1c] sm:$0xf]
    %v1311 = vunpack.c.l.b16 %v1295
    %v1312 = vunpack.c.l.b16 %v1296
    %v1313 = vunpack.c.l.b16 %v1297
    %v1314 = vunpack.c.l.b16 %v1298
    %v1315 = vunpack.c.l.b16 %v1299
    %v1316 = vunpack.c.l.b16 %v1300
    %v1317 = vunpack.c.l.b16 %v1301
    %v1318 = vunpack.c.l.b16 %v1302
    %v1319 = vpack.c.b16 %v1312, %v1311
    %v1320 = vpack.c.b16 %v1314, %v1313
    %v1321 = vpack.c.b16 %v1316, %v1315
    %v1322 = vpack.c.b16 %v1318, %v1317
    %v1328 = vsel %vm210, %v1294, 0
    %1330 = vmatprep.subr.bf16.mxu0 0
    %1331 = vmatpush1.bf16.msra.mxu0 %v1319
    %1332 = vmatprep.subr.bf16.mxu0 0
    %1333 = vmatpush1.bf16.msra.mxu0 %v1320
    %1334 = vmatprep.subr.bf16.mxu0 0
    %1335 = vmatpush1.bf16.msra.mxu0 %v1321
    %1336 = vmatprep.subr.bf16.mxu0 0
    %1337 = vmatpush1.bf16.msra.mxu0 %v1322
    %1338 = vmatprep.subr.bf16.mxu0 0
    %1339 = vmatpush1.bf16.msra.mxu0 0
    %1340 = vmatprep.subr.bf16.mxu0 0
    %1341 = vmatpush1.bf16.msra.mxu0 0
    %1342 = vmatprep.subr.bf16.mxu0 0
    %1343 = vmatpush1.bf16.msra.mxu0 0
    %1344 = vmatprep.subr.bf16.mxu0 0
    %1345 = vmatpush1.bf16.msra.mxu0 0
    %1346 = vmatprep.subr.bf16.mxu0 0
    %1347 = vmatpush1.bf16.msra.mxu0 0
    %1348 = vmatprep.subr.bf16.mxu0 0
    %1349 = vmatpush1.bf16.msra.mxu0 0
    %1350 = vmatprep.subr.bf16.mxu0 0
    %1351 = vmatpush1.bf16.msra.mxu0 0
    %1352 = vmatprep.subr.bf16.mxu0 0
    %1353 = vmatpush1.bf16.msra.mxu0 0
    %1354 = vmatprep.subr.bf16.mxu0 0
    %1355 = vmatpush1.bf16.msra.mxu0 0
    %1356 = vmatprep.subr.bf16.mxu0 0
    %1357 = vmatpush1.bf16.msra.mxu0 0
    %1358 = vmatprep.subr.bf16.mxu0 0
    %1359 = vmatpush1.bf16.msra.mxu0 0
    %1360 = vmatprep.subr.bf16.mxu0 0
    %1361 = vmatpush1.bf16.msra.mxu0 0
    %1362 = vmatprep.mubr.bf16.mxu0 0
    %1363 = vmatmul.mubr.bf16.gmra.mrb[0].mxu0 %v1328
    %v1364 = vpop.f32.mrb[0].mxu0
    %v1365 = vadd.f32 0.0, %v1364
    %v1366 = vpop.f32.mrb[0].mxu0
    %v1367 = vpop.f32.mrb[0].mxu0
    %v1368 = vadd.f32 0.0, %v1367
    %v1369 = vpop.f32.mrb[0].mxu0
    %1370 = vdwg.mxu0
    %v1371 = vadd.f32 %v206, %v1365
    %v1372 = vadd.f32 %v207, %v1368
    %v1373 = vld [vmem:[#allocation13] sm:$0x1]
    %v1375 = vlaneseq
    %v1376 = vshrl.u32 %v1375, 7
    %v1377 = vsub.s32 0, %v1376
    %v1378 = vrot.slane %v1373, %v1377
    %v1380 = vadd.f32 %v1371, %v1378
    %v1381 = vadd.f32 %v1372, %v1378
    %v1382 = vld [vmem:[#allocation14] sm:$0x1]
    %v1383 = vld [vmem:[#allocation16] sm:$0x1]
    %v1384 = vsel %vm210, %v1380, 0.0
    %1385 = vadd.xlane.f32.xlu0 %v1384
    %v1386 = vpop.xlane.xlu0 %1385
    %v1387 = vsel %vm210, %v1381, 0.0
    %1388 = vadd.xlane.f32.xlu0 %v1387
    %v1389 = vpop.xlane.xlu0 %1388
    %v1390 = vmul.f32 %v1386, %v217
    %v1391 = vmul.f32 %v1389, %v217
    %v1392 = vsub.f32 %v1380, %v1390
    %v1393 = vsub.f32 %v1381, %v1391
    %v1394 = vmul.f32 %v1392, %v1392
    %v1395 = vmul.f32 %v1393, %v1393
    %v1396 = vsel %vm210, %v1394, 0.0
    %1397 = vadd.xlane.f32.xlu0 %v1396
    %v1398 = vpop.xlane.xlu0 %1397
    %v1399 = vsel %vm210, %v1395, 0.0
    %1400 = vadd.xlane.f32.xlu0 %v1399
    %v1401 = vpop.xlane.xlu0 %1400
    %v1402 = vmul.f32 %v1398, %v217
    %v1403 = vmul.f32 %v1401, %v217
    %v1404 = vadd.f32 %v1402, 1e-05
    %v1405 = vadd.f32 %v1403, 1e-05
    %v1406 = vrsqrt.pop %v1404
    %v1407 = vrsqrt.pop %v1405
    %v1408 = vmul.f32 %v1392, %v1406
    %v1409 = vmul.f32 %v1393, %v1407
    %v1411 = vlaneseq
    %v1412 = vshrl.u32 %v1411, 7
    %v1413 = vsub.s32 0, %v1412
    %v1414 = vrot.slane %v1382, %v1413
    %v1416 = vmul.f32 %v1408, %v1414
    %v1417 = vmul.f32 %v1409, %v1414
    %v1419 = vlaneseq
    %v1420 = vshrl.u32 %v1419, 7
    %v1421 = vsub.s32 0, %v1420
    %v1422 = vrot.slane %v1383, %v1421
    %v1424 = vadd.f32 %v1416, %v1422
    %v1425 = vadd.f32 %v1417, %v1422
    %v1426 = vpack.c.bf16 %v1425, %v1424
    %v1427 = vld [vmem:[#allocation17] sm:$0xff]
    %v1428 = vld [vmem:[#allocation17 + $0x8] sm:$0xff]
    %v1429 = vld [vmem:[#allocation17 + $0x10] sm:$0xff]
    %v1430 = vld [vmem:[#allocation17 + $0x18] sm:$0xff]
    %v1431 = vld [vmem:[#allocation17 + $0x20] sm:$0xff]
    %v1432 = vld [vmem:[#allocation17 + $0x28] sm:$0xff]
    %v1433 = vld [vmem:[#allocation17 + $0x30] sm:$0xff]
    %v1434 = vld [vmem:[#allocation17 + $0x38] sm:$0xff]
    %v1435 = vld [vmem:[#allocation19] sm:$0x3]
    %v1437 = vlaneseq
    %v1438 = vshrl.u32 %v1437, 7
    %v1439 = vsub.s32 0, %v1438
    %v1440 = vrot.slane %v1435, %v1439
    %v1441 = vlaneseq
    %v1442 = vshrl.u32 %v1441, 7
    %v1443 = vsub.s32 1, %v1442
    %v1444 = vrot.slane %v1435, %v1443
    %v1455 = vunpack.c.l.b16 %v1427
    %v1456 = vunpack.c.h.b16 %v1427
    %v1457 = vunpack.c.l.b16 %v1428
    %v1458 = vunpack.c.h.b16 %v1428
    %v1459 = vunpack.c.l.b16 %v1429
    %v1460 = vunpack.c.h.b16 %v1429
    %v1461 = vunpack.c.l.b16 %v1430
    %v1462 = vunpack.c.h.b16 %v1430
    %v1463 = vunpack.c.l.b16 %v1431
    %v1464 = vunpack.c.h.b16 %v1431
    %v1465 = vunpack.c.l.b16 %v1432
    %v1466 = vunpack.c.h.b16 %v1432
    %v1467 = vunpack.c.l.b16 %v1433
    %v1468 = vunpack.c.h.b16 %v1433
    %v1469 = vunpack.c.l.b16 %v1434
    %v1470 = vunpack.c.h.b16 %v1434
    %v1471 = vpack.c.b16 %v1457, %v1455
    %v1472 = vpack.c.b16 %v1458, %v1456
    %v1473 = vpack.c.b16 %v1461, %v1459
    %v1474 = vpack.c.b16 %v1462, %v1460
    %v1475 = vpack.c.b16 %v1465, %v1463
    %v1476 = vpack.c.b16 %v1466, %v1464
    %v1477 = vpack.c.b16 %v1469, %v1467
    %v1478 = vpack.c.b16 %v1470, %v1468
    %v1488 = vsel %vm210, %v1426, 0
    %1490 = vmatprep.subr.bf16.mxu0 %v1472
    %1491 = vmatpush1.bf16.msra.mxu0 %v1471
    %1492 = vmatprep.subr.bf16.mxu0 %v1474
    %1493 = vmatpush1.bf16.msra.mxu0 %v1473
    %1494 = vmatprep.subr.bf16.mxu0 %v1476
    %1495 = vmatpush1.bf16.msra.mxu0 %v1475
    %1496 = vmatprep.subr.bf16.mxu0 %v1478
    %1497 = vmatpush1.bf16.msra.mxu0 %v1477
    %1498 = vmatprep.subr.bf16.mxu0 0
    %1499 = vmatpush1.bf16.msra.mxu0 0
    %1500 = vmatprep.subr.bf16.mxu0 0
    %1501 = vmatpush1.bf16.msra.mxu0 0
    %1502 = vmatprep.subr.bf16.mxu0 0
    %1503 = vmatpush1.bf16.msra.mxu0 0
    %1504 = vmatprep.subr.bf16.mxu0 0
    %1505 = vmatpush1.bf16.msra.mxu0 0
    %1506 = vmatprep.subr.bf16.mxu0 0
    %1507 = vmatpush1.bf16.msra.mxu0 0
    %1508 = vmatprep.subr.bf16.mxu0 0
    %1509 = vmatpush1.bf16.msra.mxu0 0
    %1510 = vmatprep.subr.bf16.mxu0 0
    %1511 = vmatpush1.bf16.msra.mxu0 0
    %1512 = vmatprep.subr.bf16.mxu0 0
    %1513 = vmatpush1.bf16.msra.mxu0 0
    %1514 = vmatprep.subr.bf16.mxu0 0
    %1515 = vmatpush1.bf16.msra.mxu0 0
    %1516 = vmatprep.subr.bf16.mxu0 0
    %1517 = vmatpush1.bf16.msra.mxu0 0
    %1518 = vmatprep.subr.bf16.mxu0 0
    %1519 = vmatpush1.bf16.msra.mxu0 0
    %1520 = vmatprep.subr.bf16.mxu0 0
    %1521 = vmatpush1.bf16.msra.mxu0 0
    %1522 = vmatprep.mubr.bf16.mxu0 0
    %1523 = vmatmul.mubr.bf16.gmra.mrb[0].mxu0 %v1488
    %v1524 = vpop.f32.mrb[0].mxu0
    %v1525 = vadd.f32 %v1440, %v1524
    %v1526 = vpop.f32.mrb[0].mxu0
    %v1527 = vadd.f32 %v1444, %v1526
    %v1528 = vpop.f32.mrb[0].mxu0
    %v1529 = vadd.f32 %v1440, %v1528
    %v1530 = vpop.f32.mrb[0].mxu0
    %v1531 = vadd.f32 %v1444, %v1530
    %1532 = vdwg.mxu0
    %v1533 = vmul.f32 %v1525, 1.702
    %v1534 = vmul.f32 %v1527, 1.702
    %v1535 = vmul.f32 %v1529, 1.702
    %v1536 = vmul.f32 %v1531, 1.702
    %v1537 = vxor.u32 %v1533, 2147483648
    %v1538 = vxor.u32 %v1534, 2147483648
    %v1539 = vxor.u32 %v1535, 2147483648
    %v1540 = vxor.u32 %v1536, 2147483648
    %v1541 = vmul.f32 %v1537, 1.442695
    %v1542 = vpow.pop %v1541
    %v1543 = vmul.f32 %v1538, 1.442695
    %v1544 = vpow.pop %v1543
    %v1545 = vmul.f32 %v1539, 1.442695
    %v1546 = vpow.pop %v1545
    %v1547 = vmul.f32 %v1540, 1.442695
    %v1548 = vpow.pop %v1547
    %v1549 = vadd.f32 %v1542, 1.0
    %v1550 = vadd.f32 %v1544, 1.0
    %v1551 = vadd.f32 %v1546, 1.0
    %v1552 = vadd.f32 %v1548, 1.0
    %v1553 = vrcp.pop %v1549
    %v1554 = vmul.f32 1.0, %v1553
    %v1555 = vrcp.pop %v1550
    %v1556 = vmul.f32 1.0, %v1555
    %v1557 = vrcp.pop %v1551
    %v1558 = vmul.f32 1.0, %v1557
    %v1559 = vrcp.pop %v1552
    %v1560 = vmul.f32 1.0, %v1559
    %v1561 = vmul.f32 %v1525, %v1554
    %v1562 = vmul.f32 %v1527, %v1556
    %v1563 = vmul.f32 %v1529, %v1558
    %v1564 = vmul.f32 %v1531, %v1560
    %v1565 = vpack.c.bf16 %v1563, %v1561
    %v1566 = vpack.c.bf16 %v1564, %v1562
    %v1567 = vld [vmem:[#allocation20] sm:$0xf]
    %v1568 = vld [vmem:[#allocation20 + $0x4] sm:$0xf]
    %v1569 = vld [vmem:[#allocation20 + $0x8] sm:$0xf]
    %v1570 = vld [vmem:[#allocation20 + $0xc] sm:$0xf]
    %v1571 = vld [vmem:[#allocation20 + $0x10] sm:$0xf]
    %v1572 = vld [vmem:[#allocation20 + $0x14] sm:$0xf]
    %v1573 = vld [vmem:[#allocation20 + $0x18] sm:$0xf]
    %v1574 = vld [vmem:[#allocation20 + $0x1c] sm:$0xf]
    %v1575 = vld [vmem:[#allocation20 + $0x20] sm:$0xf]
    %v1576 = vld [vmem:[#allocation20 + $0x24] sm:$0xf]
    %v1577 = vld [vmem:[#allocation20 + $0x28] sm:$0xf]
    %v1578 = vld [vmem:[#allocation20 + $0x2c] sm:$0xf]
    %v1579 = vld [vmem:[#allocation20 + $0x30] sm:$0xf]
    %v1580 = vld [vmem:[#allocation20 + $0x34] sm:$0xf]
    %v1581 = vld [vmem:[#allocation20 + $0x38] sm:$0xf]
    %v1582 = vld [vmem:[#allocation20 + $0x3c] sm:$0xf]
    %v1583 = vld [vmem:[#allocation20 + $0x40] sm:$0xf]
    %v1584 = vld [vmem:[#allocation20 + $0x44] sm:$0xf]
    %v1585 = vld [vmem:[#allocation20 + $0x48] sm:$0xf]
    %v1586 = vld [vmem:[#allocation20 + $0x4c] sm:$0xf]
    %v1587 = vld [vmem:[#allocation20 + $0x50] sm:$0xf]
    %v1588 = vld [vmem:[#allocation20 + $0x54] sm:$0xf]
    %v1589 = vld [vmem:[#allocation20 + $0x58] sm:$0xf]
    %v1590 = vld [vmem:[#allocation20 + $0x5c] sm:$0xf]
    %v1591 = vld [vmem:[#allocation20 + $0x60] sm:$0xf]
    %v1592 = vld [vmem:[#allocation20 + $0x64] sm:$0xf]
    %v1593 = vld [vmem:[#allocation20 + $0x68] sm:$0xf]
    %v1594 = vld [vmem:[#allocation20 + $0x6c] sm:$0xf]
    %v1595 = vld [vmem:[#allocation20 + $0x70] sm:$0xf]
    %v1596 = vld [vmem:[#allocation20 + $0x74] sm:$0xf]
    %v1597 = vld [vmem:[#allocation20 + $0x78] sm:$0xf]
    %v1598 = vld [vmem:[#allocation20 + $0x7c] sm:$0xf]
    %v1599 = vld [vmem:[#allocation22] sm:$0x1]
    %v1601 = vlaneseq
    %v1602 = vshrl.u32 %v1601, 7
    %v1603 = vsub.s32 0, %v1602
    %v1604 = vrot.slane %v1599, %v1603
    %v1638 = vunpack.c.l.b16 %v1567
    %v1639 = vunpack.c.l.b16 %v1568
    %v1640 = vunpack.c.l.b16 %v1569
    %v1641 = vunpack.c.l.b16 %v1570
    %v1642 = vunpack.c.l.b16 %v1571
    %v1643 = vunpack.c.l.b16 %v1572
    %v1644 = vunpack.c.l.b16 %v1573
    %v1645 = vunpack.c.l.b16 %v1574
    %v1646 = vunpack.c.l.b16 %v1575
    %v1647 = vunpack.c.l.b16 %v1576
    %v1648 = vunpack.c.l.b16 %v1577
    %v1649 = vunpack.c.l.b16 %v1578
    %v1650 = vunpack.c.l.b16 %v1579
    %v1651 = vunpack.c.l.b16 %v1580
    %v1652 = vunpack.c.l.b16 %v1581
    %v1653 = vunpack.c.l.b16 %v1582
    %v1654 = vunpack.c.l.b16 %v1583
    %v1655 = vunpack.c.l.b16 %v1584
    %v1656 = vunpack.c.l.b16 %v1585
    %v1657 = vunpack.c.l.b16 %v1586
    %v1658 = vunpack.c.l.b16 %v1587
    %v1659 = vunpack.c.l.b16 %v1588
    %v1660 = vunpack.c.l.b16 %v1589
    %v1661 = vunpack.c.l.b16 %v1590
    %v1662 = vunpack.c.l.b16 %v1591
    %v1663 = vunpack.c.l.b16 %v1592
    %v1664 = vunpack.c.l.b16 %v1593
    %v1665 = vunpack.c.l.b16 %v1594
    %v1666 = vunpack.c.l.b16 %v1595
    %v1667 = vunpack.c.l.b16 %v1596
    %v1668 = vunpack.c.l.b16 %v1597
    %v1669 = vunpack.c.l.b16 %v1598
    %v1670 = vpack.c.b16 %v1639, %v1638
    %v1671 = vpack.c.b16 %v1641, %v1640
    %v1672 = vpack.c.b16 %v1643, %v1642
    %v1673 = vpack.c.b16 %v1645, %v1644
    %v1674 = vpack.c.b16 %v1647, %v1646
    %v1675 = vpack.c.b16 %v1649, %v1648
    %v1676 = vpack.c.b16 %v1651, %v1650
    %v1677 = vpack.c.b16 %v1653, %v1652
    %v1678 = vpack.c.b16 %v1655, %v1654
    %v1679 = vpack.c.b16 %v1657, %v1656
    %v1680 = vpack.c.b16 %v1659, %v1658
    %v1681 = vpack.c.b16 %v1661, %v1660
    %v1682 = vpack.c.b16 %v1663, %v1662
    %v1683 = vpack.c.b16 %v1665, %v1664
    %v1684 = vpack.c.b16 %v1667, %v1666
    %v1685 = vpack.c.b16 %v1669, %v1668
    %1702 = vmatprep.subr.bf16.mxu0 0
    %1703 = vmatpush1.bf16.msra.mxu0 %v1670
    %1704 = vmatprep.subr.bf16.mxu0 0
    %1705 = vmatpush1.bf16.msra.mxu0 %v1671
    %1706 = vmatprep.subr.bf16.mxu0 0
    %1707 = vmatpush1.bf16.msra.mxu0 %v1672
    %1708 = vmatprep.subr.bf16.mxu0 0
    %1709 = vmatpush1.bf16.msra.mxu0 %v1673
    %1710 = vmatprep.subr.bf16.mxu0 0
    %1711 = vmatpush1.bf16.msra.mxu0 %v1674
    %1712 = vmatprep.subr.bf16.mxu0 0
    %1713 = vmatpush1.bf16.msra.mxu0 %v1675
    %1714 = vmatprep.subr.bf16.mxu0 0
    %1715 = vmatpush1.bf16.msra.mxu0 %v1676
    %1716 = vmatprep.subr.bf16.mxu0 0
    %1717 = vmatpush1.bf16.msra.mxu0 %v1677
    %1718 = vmatprep.subr.bf16.mxu0 0
    %1719 = vmatpush1.bf16.msra.mxu0 %v1678
    %1720 = vmatprep.subr.bf16.mxu0 0
    %1721 = vmatpush1.bf16.msra.mxu0 %v1679
    %1722 = vmatprep.subr.bf16.mxu0 0
    %1723 = vmatpush1.bf16.msra.mxu0 %v1680
    %1724 = vmatprep.subr.bf16.mxu0 0
    %1725 = vmatpush1.bf16.msra.mxu0 %v1681
    %1726 = vmatprep.subr.bf16.mxu0 0
    %1727 = vmatpush1.bf16.msra.mxu0 %v1682
    %1728 = vmatprep.subr.bf16.mxu0 0
    %1729 = vmatpush1.bf16.msra.mxu0 %v1683
    %1730 = vmatprep.subr.bf16.mxu0 0
    %1731 = vmatpush1.bf16.msra.mxu0 %v1684
    %1732 = vmatprep.subr.bf16.mxu0 0
    %1733 = vmatpush1.bf16.msra.mxu0 %v1685
    %1734 = vmatprep.mubr.bf16.mxu0 %v1566
    %1735 = vmatmul.mubr.bf16.gmra.mrb[0].mxu0 %v1565
    %v1736 = vpop.f32.mrb[0].mxu0
    %v1737 = vadd.f32 %v1604, %v1736
    %v1738 = vpop.f32.mrb[0].mxu0
    %v1739 = vpop.f32.mrb[0].mxu0
    %v1740 = vadd.f32 %v1604, %v1739
    %v1741 = vpop.f32.mrb[0].mxu0
    %1742 = vdwg.mxu0
    %v1743 = vadd.f32 %v1380, %v1737
    %v1744 = vadd.f32 %v1381, %v1740
    %1745 = vst.msk [vmem:[#allocation23] sm:$0xff] %vm210, %v1743
    %1746 = vst.msk [vmem:[#allocation23 + $0x8] sm:$0xff] %vm210, %v1744
    // Predicated region
    $region106: #{tpu_custom_call.1} parent=1 // pred_check
      _
    $region107: #{tpu_custom_call.1} parent=1 // pred_check_branch
      %1748 = sbr.rel (0) target = $region109
    $region108: #{tpu_custom_call.1} parent=1 // pred_region
      %s1750 = ssub.s32 256, 256
      %1751 = vsyncadd [#allocation4], %s1750
      %s1752 = sshll.u32 [#allocation23], 4
      %s1753 = int_to_ptr.vmem [resolvable:$true] %s1752
      %1758 = dma.vmem_to_hbm [thread:$0]  %s1753, 256, %s13, [#allocation4], 128, 128, 8
    $region109: #{tpu_custom_call.1} parent=1 // pred_fallthru
      _
    // Predicated region
    $region110: #{tpu_custom_call.1} parent=1 // pred_check
      _
    $region111: #{tpu_custom_call.1} parent=1 // pred_check_branch
      %1760 = sbr.rel (0) target = $region113
    $region112: #{tpu_custom_call.1} parent=1 // pred_region
      %1761 = dma.done [#allocation4], 256
    $region113: #{tpu_custom_call.1} parent=1 // pred_fallthru
      _
    %1762 = vsyncpa [#allocation3], 1
    %1763 = vsyncpa [#allocation6], 1
    %1764 = vsyncpa [#allocation9], 1
    %1765 = vsyncpa [#allocation12], 1
    %1766 = vsyncpa [#allocation15], 1
    %1767 = vsyncpa [#allocation18], 1
    %1768 = vsyncpa [#allocation21], 1
    %1769 = vsyncpa [#allocation4], 1

// kernel: tpu_custom_call.1
$region0: #{tpu_custom_call.1}
  #allocation0 [shape = 'u32[]', space=smem, size = 0x4, offset = 0x4, fixed_abs, tag = 'smem constant byte address 0x4 - core index']
  #allocation1 [shape = 'u32[144,128]{1,0:T(1,128)}', space=vmem, size = 0x12000, scoped, tag = 'internal scratch']
  %s0 = inlined_call_operand.hbm [shape: f32[2,8,64], index: 0, kind: input, shape index: {}]
  %s1 = inlined_call_operand.hbm [shape: f32[1,64], index: 1, kind: input, shape index: {}]
  %s2 = inlined_call_operand.hbm [shape: f32[1,64], index: 2, kind: input, shape index: {}]
  %s3 = inlined_call_operand.hbm [shape: bf16[64,192], index: 3, kind: input, shape index: {}]
  %s4 = inlined_call_operand.hbm [shape: f32[1,192], index: 4, kind: input, shape index: {}]
  %s5 = inlined_call_operand.hbm [shape: bf16[64,64], index: 5, kind: input, shape index: {}]
  %s6 = inlined_call_operand.hbm [shape: f32[1,64], index: 6, kind: input, shape index: {}]
  %s7 = inlined_call_operand.hbm [shape: f32[1,64], index: 7, kind: input, shape index: {}]
  %s8 = inlined_call_operand.hbm [shape: f32[1,64], index: 8, kind: input, shape index: {}]
  %s9 = inlined_call_operand.hbm [shape: bf16[64,256], index: 9, kind: input, shape index: {}]
  %s10 = inlined_call_operand.hbm [shape: f32[1,256], index: 10, kind: input, shape index: {}]
  %s11 = inlined_call_operand.hbm [shape: bf16[256,64], index: 11, kind: input, shape index: {}]
  %s12 = inlined_call_operand.hbm [shape: f32[1,64], index: 12, kind: input, shape index: {}]
  %s13 = inlined_call_operand.hbm [shape: f32[2,8,64], index: 13, kind: output, shape index: {}]
  %s14 = sld [smem:[#allocation0]]
  $region114: #{tpu_custom_call.1} parent=0
    _
  %s16 = ssub.s32 1, %s14
  %s17 = scalar_select 0, %s16, %s14
  $region1: #{tpu_custom_call.1} parent=0
    #allocation2 [shape = 'u8[8192]{0}', space=vmem, size = 0x2000, scoped, tag = 'input window, operand 0, single buffered']
    #allocation3 [shape = 's32[1]{0}', space=sflag, size = 0x4, scoped, tag = 'scoped memory for tpu_custom_call.1']
    #allocation4 [shape = 's32[1]{0}', space=sflag, size = 0x4, scoped, tag = 'scoped memory for tpu_custom_call.1']
    #allocation5 [shape = 'u8[512]{0}', space=vmem, size = 0x400, scoped, tag = 'input window, operand 1, single buffered']
    #allocation6 [shape = 's32[1]{0}', space=sflag, size = 0x4, scoped, tag = 'scoped memory for tpu_custom_call.1']
    #allocation7 [shape = 'u8[512]{0}', space=vmem, size = 0x400, scoped, tag = 'input window, operand 2, single buffered']
    #allocation8 [shape = 'u8[32768]{0}', space=vmem, size = 0x8000, scoped, tag = 'input window, operand 3, single buffered']
    #allocation9 [shape = 's32[1]{0}', space=sflag, size = 0x4, scoped, tag = 'scoped memory for tpu_custom_call.1']
    #allocation10 [shape = 'u8[1024]{0}', space=vmem, size = 0x400, scoped, tag = 'input window, operand 4, single buffered']
    #allocation11 [shape = 'u8[16384]{0}', space=vmem, size = 0x4000, scoped, tag = 'input window, operand 5, single buffered']
    #allocation12 [shape = 's32[1]{0}', space=sflag, size = 0x4, scoped, tag = 'scoped memory for tpu_custom_call.1']
    #allocation13 [shape = 'u8[512]{0}', space=vmem, size = 0x400, scoped, tag = 'input window, operand 6, single buffered']
    #allocation14 [shape = 'u8[512]{0}', space=vmem, size = 0x400, scoped, tag = 'input window, operand 7, single buffered']
    #allocation15 [shape = 's32[1]{0}', space=sflag, size = 0x4, scoped, tag = 'scoped memory for tpu_custom_call.1']
    #allocation16 [shape = 'u8[512]{0}', space=vmem, size = 0x400, scoped, tag = 'input window, operand 8, single buffered']
    #allocation17 [shape = 'u8[32768]{0}', space=vmem, size = 0x8000, scoped, tag = 'input window, operand 9, single buffered']
    #allocation18 [shape = 's32[1]{0}', space=sflag, size = 0x4, scoped, tag = 'scoped memory for tpu_custom_call.1']
    #allocation19 [shape = 'u8[1024]{0}', space=vmem, size = 0x400, scoped, tag = 'input window, operand 10, single buffered']
    #allocation20 [shape = 'u8[65536]{0}', space=vmem, size = 0x10000, scoped, tag = 'input window, operand 11, single buffered']
    #allocation21 [shape = 's32[1]{0}', space=sflag, size = 0x4, scoped, tag = 'scoped memory for tpu_custom_call.1']
    #allocation22 [shape = 'u8[512]{0}', space=vmem, size = 0x400, scoped, tag = 'input window, operand 12, single buffered']
    #allocation23 [shape = 'u8[8192]{0}', space=vmem, size = 0x2000, scoped, tag = 'output window, operand 0, single buffered']
    %18 = vsyncpa [#allocation3], 0
    %19 = vsyncpa [#allocation6], 0
    %20 = vsyncpa [#allocation9], 0
    %21 = vsyncpa [#allocation12], 0
    %22 = vsyncpa [#allocation15], 0
    %23 = vsyncpa [#allocation18], 0
    %24 = vsyncpa [#allocation21], 0
    %25 = vsyncpa [#allocation4], 0
    // Predicated region
    $region2: #{tpu_custom_call.1} parent=1 // pred_check
      _
    $region3: #{tpu_custom_call.1} parent=1 // pred_check_branch
      %27 = sbr.rel (0) target = $region5
    $region4: #{tpu_custom_call.1} parent=1 // pred_region
      %s29 = ssub.s32 256, 256
      %30 = vsyncadd [#allocation3], %s29
      %s31 = sshll.u32 [#allocation2], 4
      %s32 = int_to_ptr.vmem [resolvable:$true] %s31
      %37 = dma.hbm_to_vmem [thread:$0]  %s0, 256, %s32, [#allocation3], 128, 128, 8
    $region5: #{tpu_custom_call.1} parent=1 // pred_fallthru
      _
    // Predicated region
    $region6: #{tpu_custom_call.1} parent=1 // pred_check
      _
    $region7: #{tpu_custom_call.1} parent=1 // pred_check_branch
      %39 = sbr.rel (0) target = $region9
    $region8: #{tpu_custom_call.1} parent=1 // pred_region
      %s41 = ssub.s32 16, 16
      %42 = vsyncadd [#allocation6], %s41
      %s44 = sshll.u32 [#allocation5], 4
      %s45 = int_to_ptr.vmem [resolvable:$true] %s44
      %47 = dma.hbm_to_vmem [thread:$0]  %s1, 16, %s45, [#allocation6]
    $region9: #{tpu_custom_call.1} parent=1 // pred_fallthru
      _
    // Predicated region
    $region10: #{tpu_custom_call.1} parent=1 // pred_check
      _
    $region11: #{tpu_custom_call.1} parent=1 // pred_check_branch
      %49 = sbr.rel (0) target = $region13
    $region12: #{tpu_custom_call.1} parent=1 // pred_region
      %s51 = ssub.s32 16, 16
      %52 = vsyncadd [#allocation6], %s51
      %s54 = sshll.u32 [#allocation7], 4
      %s55 = int_to_ptr.vmem [resolvable:$true] %s54
      %57 = dma.hbm_to_vmem [thread:$0]  %s2, 16, %s55, [#allocation6]
    $region13: #{tpu_custom_call.1} parent=1 // pred_fallthru
      _
    // Predicated region
    $region14: #{tpu_custom_call.1} parent=1 // pred_check
      _
    $region15: #{tpu_custom_call.1} parent=1 // pred_check_branch
      %59 = sbr.rel (0) target = $region17
    $region16: #{tpu_custom_call.1} parent=1 // pred_region
      %s61 = ssub.s32 1024, 1024
      %62 = vsyncadd [#allocation9], %s61
      %s63 = sshll.u32 [#allocation8], 4
      %s64 = int_to_ptr.vmem [resolvable:$true] %s63
      %69 = dma.hbm_to_vmem [thread:$0]  %s3, 1024, %s64, [#allocation9], 128, 128, 8
    $region17: #{tpu_custom_call.1} parent=1 // pred_fallthru
      _
    // Predicated region
    $region18: #{tpu_custom_call.1} parent=1 // pred_check
      _
    $region19: #{tpu_custom_call.1} parent=1 // pred_check_branch
      %71 = sbr.rel (0) target = $region21
    $region20: #{tpu_custom_call.1} parent=1 // pred_region
      %s73 = ssub.s32 32, 32
      %74 = vsyncadd [#allocation9], %s73
      %s76 = sshll.u32 [#allocation10], 4
      %s77 = int_to_ptr.vmem [resolvable:$true] %s76
      %79 = dma.hbm_to_vmem [thread:$0]  %s4, 32, %s77, [#allocation9]
    $region21: #{tpu_custom_call.1} parent=1 // pred_fallthru
      _
    // Predicated region
    $region22: #{tpu_custom_call.1} parent=1 // pred_check
      _
    $region23: #{tpu_custom_call.1} parent=1 // pred_check_branch
      %81 = sbr.rel (0) target = $region25
    $region24: #{tpu_custom_call.1} parent=1 // pred_region
      %s83 = ssub.s32 512, 512
      %84 = vsyncadd [#allocation12], %s83
      %s85 = sshll.u32 [#allocation11], 4
      %s86 = int_to_ptr.vmem [resolvable:$true] %s85
      %91 = dma.hbm_to_vmem [thread:$0]  %s5, 512, %s86, [#allocation12], 64, 64, 4
    $region25: #{tpu_custom_call.1} parent=1 // pred_fallthru
      _
    // Predicated region
    $region26: #{tpu_custom_call.1} parent=1 // pred_check
      _
    $region27: #{tpu_custom_call.1} parent=1 // pred_check_branch
      %93 = sbr.rel (0) target = $region29
    $region28: #{tpu_custom_call.1} parent=1 // pred_region
      %s95 = ssub.s32 16, 16
      %96 = vsyncadd [#allocation12], %s95
      %s98 = sshll.u32 [#allocation13], 4
      %s99 = int_to_ptr.vmem [resolvable:$true] %s98
      %101 = dma.hbm_to_vmem [thread:$0]  %s6, 16, %s99, [#allocation12]
    $region29: #{tpu_custom_call.1} parent=1 // pred_fallthru
      _
    // Predicated region
    $region30: #{tpu_custom_call.1} parent=1 // pred_check
      _
    $region31: #{tpu_custom_call.1} parent=1 // pred_check_branch
      %103 = sbr.rel (0) target = $region33
    $region32: #{tpu_custom_call.1} parent=1 // pred_region
      %s105 = ssub.s32 16, 16
      %106 = vsyncadd [#allocation15], %s105
      %s108 = sshll.u32 [#allocation14], 4
      %s109 = int_to_ptr.vmem [resolvable:$true] %s108
      %111 = dma.hbm_to_vmem [thread:$0]  %s7, 16, %s109, [#allocation15]
    $region33: #{tpu_custom_call.1} parent=1 // pred_fallthru
      _
    // Predicated region
    $region34: #{tpu_custom_call.1} parent=1 // pred_check
      _
    $region35: #{tpu_custom_call.1} parent=1 // pred_check_branch
      %113 = sbr.rel (0) target = $region37
    $region36: #{tpu_custom_call.1} parent=1 // pred_region
      %s115 = ssub.s32 16, 16
      %116 = vsyncadd [#allocation15], %s115
      %s118 = sshll.u32 [#allocation16], 4
      %s119 = int_to_ptr.vmem [resolvable:$true] %s118
      %121 = dma.hbm_to_vmem [thread:$0]  %s8, 16, %s119, [#allocation15]
    $region37: #{tpu_custom_call.1} parent=1 // pred_fallthru
      _
    // Predicated region
    $region38: #{tpu_custom_call.1} parent=1 // pred_check
      _
    $region39: #{tpu_custom_call.1} parent=1 // pred_check_branch
      %123 = sbr.rel (0) target = $region41
    $region40: #{tpu_custom_call.1} parent=1 // pred_region
      %s125 = ssub.s32 1024, 1024
      %126 = vsyncadd [#allocation18], %s125
      %s127 = sshll.u32 [#allocation17], 4
      %s128 = int_to_ptr.vmem [resolvable:$true] %s127
      %133 = dma.hbm_to_vmem [thread:$0]  %s9, 1024, %s128, [#allocation18], 128, 128, 8
    $region41: #{tpu_custom_call.1} parent=1 // pred_fallthru
      _
    // Predicated region
    $region42: #{tpu_custom_call.1} parent=1 // pred_check
      _
    $region43: #{tpu_custom_call.1} parent=1 // pred_check_branch
      %135 = sbr.rel (0) target = $region45
    $region44: #{tpu_custom_call.1} parent=1 // pred_region
      %s137 = ssub.s32 32, 32
      %138 = vsyncadd [#allocation18], %s137
      %s140 = sshll.u32 [#allocation19], 4
      %s141 = int_to_ptr.vmem [resolvable:$true] %s140
      %143 = dma.hbm_to_vmem [thread:$0]  %s10, 32, %s141, [#allocation18]
    $region45: #{tpu_custom_call.1} parent=1 // pred_fallthru
      _
    // Predicated region
    $region46: #{tpu_custom_call.1} parent=1 // pred_check
      _
    $region47: #{tpu_custom_call.1} parent=1 // pred_check_branch
      %145 = sbr.rel (0) target = $region49
    $region48: #{tpu_custom_call.1} parent=1 // pred_region
      %s147 = ssub.s32 2048, 2048
      %148 = vsyncadd [#allocation21], %s147
      %s149 = sshll.u32 [#allocation20], 4
      %s150 = int_to_ptr.vmem [resolvable:$true] %s149
      %155 = dma.hbm_to_vmem [thread:$0]  %s11, 2048, %s150, [#allocation21], 64, 64, 4
    $region49: #{tpu_custom_call.1} parent=1 // pred_fallthru
      _
    // Predicated region
    $region50: #{tpu_custom_call.1} parent=1 // pred_check
      _
    $region51: #{tpu_custom_call.1} parent=1 // pred_check_branch
      %157 = sbr.rel (0) target = $region53
    $region52: #{tpu_custom_call.1} parent=1 // pred_region
      %s159 = ssub.s32 16, 16
      %160 = vsyncadd [#allocation21], %s159
      %s162 = sshll.u32 [#allocation22], 4
      %s163 = int_to_ptr.vmem [resolvable:$true] %s162
      %165 = dma.hbm_to_vmem [thread:$0]  %s12, 16, %s163, [#allocation21]
    $region53: #{tpu_custom_call.1} parent=1 // pred_fallthru
      _
    // Predicated region
    $region54: #{tpu_custom_call.1} parent=1 // pred_check
      _
    $region55: #{tpu_custom_call.1} parent=1 // pred_check_branch
      %167 = sbr.rel (0) target = $region57
    $region56: #{tpu_custom_call.1} parent=1 // pred_region
      %168 = dma.done [#allocation3], 256
    $region57: #{tpu_custom_call.1} parent=1 // pred_fallthru
      _
    // Predicated region
    $region58: #{tpu_custom_call.1} parent=1 // pred_check
      _
    $region59: #{tpu_custom_call.1} parent=1 // pred_check_branch
      %170 = sbr.rel (0) target = $region61
    $region60: #{tpu_custom_call.1} parent=1 // pred_region
      %171 = dma.done [#allocation6], 16
    $region61: #{tpu_custom_call.1} parent=1 // pred_fallthru
      _
    // Predicated region
    $region62: #{tpu_custom_call.1} parent=1 // pred_check
      _
    $region63: #{tpu_custom_call.1} parent=1 // pred_check_branch
      %173 = sbr.rel (0) target = $region65
    $region64: #{tpu_custom_call.1} parent=1 // pred_region
      %174 = dma.done [#allocation6], 16
    $region65: #{tpu_custom_call.1} parent=1 // pred_fallthru
      _
    // Predicated region
    $region66: #{tpu_custom_call.1} parent=1 // pred_check
      _
    $region67: #{tpu_custom_call.1} parent=1 // pred_check_branch
      %176 = sbr.rel (0) target = $region69
    $region68: #{tpu_custom_call.1} parent=1 // pred_region
      %177 = dma.done [#allocation9], 1024
    $region69: #{tpu_custom_call.1} parent=1 // pred_fallthru
      _
    // Predicated region
    $region70: #{tpu_custom_call.1} parent=1 // pred_check
      _
    $region71: #{tpu_custom_call.1} parent=1 // pred_check_branch
      %179 = sbr.rel (0) target = $region73
    $region72: #{tpu_custom_call.1} parent=1 // pred_region
      %180 = dma.done [#allocation9], 32
    $region73: #{tpu_custom_call.1} parent=1 // pred_fallthru
      _
    // Predicated region
    $region74: #{tpu_custom_call.1} parent=1 // pred_check
      _
    $region75: #{tpu_custom_call.1} parent=1 // pred_check_branch
      %182 = sbr.rel (0) target = $region77
    $region76: #{tpu_custom_call.1} parent=1 // pred_region
      %183 = dma.done [#allocation12], 512
    $region77: #{tpu_custom_call.1} parent=1 // pred_fallthru
      _
    // Predicated region
    $region78: #{tpu_custom_call.1} parent=1 // pred_check
      _
    $region79: #{tpu_custom_call.1} parent=1 // pred_check_branch
      %185 = sbr.rel (0) target = $region81
    $region80: #{tpu_custom_call.1} parent=1 // pred_region
      %186 = dma.done [#allocation12], 16
    $region81: #{tpu_custom_call.1} parent=1 // pred_fallthru
      _
    // Predicated region
    $region82: #{tpu_custom_call.1} parent=1 // pred_check
      _
    $region83: #{tpu_custom_call.1} parent=1 // pred_check_branch
      %188 = sbr.rel (0) target = $region85
    $region84: #{tpu_custom_call.1} parent=1 // pred_region
      %189 = dma.done [#allocation15], 16
    $region85: #{tpu_custom_call.1} parent=1 // pred_fallthru
      _
    // Predicated region
    $region86: #{tpu_custom_call.1} parent=1 // pred_check
      _
    $region87: #{tpu_custom_call.1} parent=1 // pred_check_branch
      %191 = sbr.rel (0) target = $region89
    $region88: #{tpu_custom_call.1} parent=1 // pred_region
      %192 = dma.done [#allocation15], 16
    $region89: #{tpu_custom_call.1} parent=1 // pred_fallthru
      _
    // Predicated region
    $region90: #{tpu_custom_call.1} parent=1 // pred_check
      _
    $region91: #{tpu_custom_call.1} parent=1 // pred_check_branch
      %194 = sbr.rel (0) target = $region93
    $region92: #{tpu_custom_call.1} parent=1 // pred_region
      %195 = dma.done [#allocation18], 1024
    $region93: #{tpu_custom_call.1} parent=1 // pred_fallthru
      _
    // Predicated region
    $region94: #{tpu_custom_call.1} parent=1 // pred_check
      _
    $region95: #{tpu_custom_call.1} parent=1 // pred_check_branch
      %197 = sbr.rel (0) target = $region97
    $region96: #{tpu_custom_call.1} parent=1 // pred_region
      %198 = dma.done [#allocation18], 32
    $region97: #{tpu_custom_call.1} parent=1 // pred_fallthru
      _
    // Predicated region
    $region98: #{tpu_custom_call.1} parent=1 // pred_check
      _
    $region99: #{tpu_custom_call.1} parent=1 // pred_check_branch
      %200 = sbr.rel (0) target = $region101
    $region100: #{tpu_custom_call.1} parent=1 // pred_region
      %201 = dma.done [#allocation21], 2048
    $region101: #{tpu_custom_call.1} parent=1 // pred_fallthru
      _
    // Predicated region
    $region102: #{tpu_custom_call.1} parent=1 // pred_check
      _
    $region103: #{tpu_custom_call.1} parent=1 // pred_check_branch
      %203 = sbr.rel (0) target = $region105
    $region104: #{tpu_custom_call.1} parent=1 // pred_region
      %204 = dma.done [#allocation21], 16
    $region105: #{tpu_custom_call.1} parent=1 // pred_fallthru
      _
    %v206 = vld [vmem:[#allocation2] sm:$0xff]
    %v207 = vld [vmem:[#allocation2 + $0x8] sm:$0xff]
    %v208 = vld [vmem:[#allocation5] sm:$0x1]
    %v209 = vld [vmem:[#allocation7] sm:$0x1]
    %vm210 = vcmask 523264
    %v211 = vsel %vm210, %v206, 0.0
    %212 = vadd.xlane.f32.xlu0 %v211
    %v213 = vpop.xlane.xlu0 %212
    %v214 = vsel %vm210, %v207, 0.0
    %215 = vadd.xlane.f32.xlu0 %v214
    %v216 = vpop.xlane.xlu0 %215
    %v217 = vrcp.pop 64.0
    %v218 = vmul.f32 %v213, %v217
    %v219 = vmul.f32 %v216, %v217
    %v220 = vsub.f32 %v206, %v218
    %v221 = vsub.f32 %v207, %v219
    %v222 = vmul.f32 %v220, %v220
    %v223 = vmul.f32 %v221, %v221
    %v224 = vsel %vm210, %v222, 0.0
    %225 = vadd.xlane.f32.xlu0 %v224
    %v226 = vpop.xlane.xlu0 %225
    %v227 = vsel %vm210, %v223, 0.0
    %228 = vadd.xlane.f32.xlu0 %v227
    %v229 = vpop.xlane.xlu0 %228
    %v230 = vmul.f32 %v226, %v217
    %v231 = vmul.f32 %v229, %v217
    %v232 = vadd.f32 %v230, 1e-05
    %v233 = vadd.f32 %v231, 1e-05
    %v234 = vrsqrt.pop %v232
    %v235 = vrsqrt.pop %v233
    %v236 = vmul.f32 %v220, %v234
    %v237 = vmul.f32 %v221, %v235
    %v239 = vlaneseq
    %v240 = vshrl.u32 %v239, 7
    %v241 = vsub.s32 0, %v240
    %v242 = vrot.slane %v208, %v241
    %v244 = vmul.f32 %v236, %v242
    %v245 = vmul.f32 %v237, %v242
    %v247 = vlaneseq
    %v248 = vshrl.u32 %v247, 7
    %v249 = vsub.s32 0, %v248
    %v250 = vrot.slane %v209, %v249
    %v252 = vadd.f32 %v244, %v250
    %v253 = vadd.f32 %v245, %v250
    %v254 = vpack.c.bf16 %v253, %v252
    %v255 = vld [vmem:[#allocation8] sm:$0xff]
    %v256 = vld [vmem:[#allocation8 + $0x8] sm:$0xff]
    %v257 = vld [vmem:[#allocation8 + $0x10] sm:$0xff]
    %v258 = vld [vmem:[#allocation8 + $0x18] sm:$0xff]
    %v259 = vld [vmem:[#allocation8 + $0x20] sm:$0xff]
    %v260 = vld [vmem:[#allocation8 + $0x28] sm:$0xff]
    %v261 = vld [vmem:[#allocation8 + $0x30] sm:$0xff]
    %v262 = vld [vmem:[#allocation8 + $0x38] sm:$0xff]
    %v263 = vld [vmem:[#allocation10] sm:$0x3]
    %v265 = vlaneseq
    %v266 = vshrl.u32 %v265, 7
    %v267 = vsub.s32 0, %v266
    %v268 = vrot.slane %v263, %v267
    %v269 = vlaneseq
    %v270 = vshrl.u32 %v269, 7
    %v271 = vsub.s32 1, %v270
    %v272 = vrot.slane %v263, %v271
    %v283 = vunpack.c.l.b16 %v255
    %v284 = vunpack.c.h.b16 %v255
    %v285 = vunpack.c.l.b16 %v256
    %v286 = vunpack.c.h.b16 %v256
    %v287 = vunpack.c.l.b16 %v257
    %v288 = vunpack.c.h.b16 %v257
    %v289 = vunpack.c.l.b16 %v258
    %v290 = vunpack.c.h.b16 %v258
    %v291 = vunpack.c.l.b16 %v259
    %v292 = vunpack.c.h.b16 %v259
    %v293 = vunpack.c.l.b16 %v260
    %v294 = vunpack.c.h.b16 %v260
    %v295 = vunpack.c.l.b16 %v261
    %v296 = vunpack.c.h.b16 %v261
    %v297 = vunpack.c.l.b16 %v262
    %v298 = vunpack.c.h.b16 %v262
    %v299 = vpack.c.b16 %v285, %v283
    %v300 = vpack.c.b16 %v286, %v284
    %v301 = vpack.c.b16 %v289, %v287
    %v302 = vpack.c.b16 %v290, %v288
    %v303 = vpack.c.b16 %v293, %v291
    %v304 = vpack.c.b16 %v294, %v292
    %v305 = vpack.c.b16 %v297, %v295
    %v306 = vpack.c.b16 %v298, %v296
    %v316 = vsel %vm210, %v254, 0
    %318 = vmatprep.subr.bf16.mxu0 %v300
    %319 = vmatpush1.bf16.msra.mxu0 %v299
    %320 = vmatprep.subr.bf16.mxu0 %v302
    %321 = vmatpush1.bf16.msra.mxu0 %v301
    %322 = vmatprep.subr.bf16.mxu0 %v304
    %323 = vmatpush1.bf16.msra.mxu0 %v303
    %324 = vmatprep.subr.bf16.mxu0 %v306
    %325 = vmatpush1.bf16.msra.mxu0 %v305
    %326 = vmatprep.subr.bf16.mxu0 0
    %327 = vmatpush1.bf16.msra.mxu0 0
    %328 = vmatprep.subr.bf16.mxu0 0
    %329 = vmatpush1.bf16.msra.mxu0 0
    %330 = vmatprep.subr.bf16.mxu0 0
    %331 = vmatpush1.bf16.msra.mxu0 0
    %332 = vmatprep.subr.bf16.mxu0 0
    %333 = vmatpush1.bf16.msra.mxu0 0
    %334 = vmatprep.subr.bf16.mxu0 0
    %335 = vmatpush1.bf16.msra.mxu0 0
    %336 = vmatprep.subr.bf16.mxu0 0
    %337 = vmatpush1.bf16.msra.mxu0 0
    %338 = vmatprep.subr.bf16.mxu0 0
    %339 = vmatpush1.bf16.msra.mxu0 0
    %340 = vmatprep.subr.bf16.mxu0 0
    %341 = vmatpush1.bf16.msra.mxu0 0
    %342 = vmatprep.subr.bf16.mxu0 0
    %343 = vmatpush1.bf16.msra.mxu0 0
    %344 = vmatprep.subr.bf16.mxu0 0
    %345 = vmatpush1.bf16.msra.mxu0 0
    %346 = vmatprep.subr.bf16.mxu0 0
    %347 = vmatpush1.bf16.msra.mxu0 0
    %348 = vmatprep.subr.bf16.mxu0 0
    %349 = vmatpush1.bf16.msra.mxu0 0
    %350 = vmatprep.mubr.bf16.mxu0 0
    %351 = vmatmul.mubr.bf16.gmra.mrb[0].mxu0 %v316
    %v352 = vpop.f32.mrb[0].mxu0
    %v353 = vadd.f32 %v268, %v352
    %v354 = vpop.f32.mrb[0].mxu0
    %v355 = vadd.f32 %v272, %v354
    %v356 = vpop.f32.mrb[0].mxu0
    %v357 = vadd.f32 %v268, %v356
    %v358 = vpop.f32.mrb[0].mxu0
    %v359 = vadd.f32 %v272, %v358
    %360 = vdwg.mxu0
    %v361 = vmul.f32 %v353, 0.25
    %v362 = vmul.f32 %v357, 0.25
    %v363 = vpack.c.bf16 %v362, %v361
    %v365 = vunpack.c.l.b16 %v363
    %v366 = vunpack.c.h.b16 %v363
    %v367 = vpack.c.b16 %v365, %v365
    %v368 = vpack.c.b16 %v366, %v366
    %v369 = vpack.c.bf16 %v357, %v353
    %v371 = vunpack.c.l.b16 %v369
    %v372 = vunpack.c.h.b16 %v369
    %v373 = vpack.c.bf16 %v359, %v355
    %v375 = vunpack.c.l.b16 %v373
    %v376 = vunpack.c.h.b16 %v373
    %v377 = vpack.c.b16 %v375, %v375
    %v378 = vpack.c.b16 %v376, %v376
    %v379 = vlaneseq
    %v380 = vshrl.u32 %v379, 7
    %v381 = vlaneseq
    %v382 = vand.u32 %v381, 127
    %vm383 = vcmp.gt.s32.totalorder %v382, %v380
    %v384 = vsel %vm383, -1e+30, 0.0
    %v385 = vpack.c.b16 %v371, %v371
    %386 = vrot.lane.b32.xlu0 %v385, 64
    %v387 = vpop.permute.xlu0 %386
    %vm388 = vcmask 130048
    %v390 = vsel %vm388, %v367, 0
    %v393 = vsel %vm388, %v387, 0
    %395 = vmatprep.subr.bf16.mxu0 0
    %396 = vmatpush1.bf16.xpose.msra.mxu0 %v393
    %397 = vmatprep.subr.bf16.mxu0 0
    %398 = vmatpush1.bf16.xpose.msra.mxu0 0
    %399 = vmatprep.subr.bf16.mxu0 0
    %400 = vmatpush1.bf16.xpose.msra.mxu0 0
    %401 = vmatprep.subr.bf16.mxu0 0
    %402 = vmatpush1.bf16.xpose.msra.mxu0 0
    %403 = vmatprep.subr.bf16.mxu0 0
    %404 = vmatpush1.bf16.xpose.msra.mxu0 0
    %405 = vmatprep.subr.bf16.mxu0 0
    %406 = vmatpush1.bf16.xpose.msra.mxu0 0
    %407 = vmatprep.subr.bf16.mxu0 0
    %408 = vmatpush1.bf16.xpose.msra.mxu0 0
    %409 = vmatprep.subr.bf16.mxu0 0
    %410 = vmatpush1.bf16.xpose.msra.mxu0 0
    %411 = vmatprep.subr.bf16.mxu0 0
    %412 = vmatpush1.bf16.xpose.msra.mxu0 0
    %413 = vmatprep.subr.bf16.mxu0 0
    %414 = vmatpush1.bf16.xpose.msra.mxu0 0
    %415 = vmatprep.subr.bf16.mxu0 0
    %416 = vmatpush1.bf16.xpose.msra.mxu0 0
    %417 = vmatprep.subr.bf16.mxu0 0
    %418 = vmatpush1.bf16.xpose.msra.mxu0 0
    %419 = vmatprep.subr.bf16.mxu0 0
    %420 = vmatpush1.bf16.xpose.msra.mxu0 0
    %421 = vmatprep.subr.bf16.mxu0 0
    %422 = vmatpush1.bf16.xpose.msra.mxu0 0
    %423 = vmatprep.subr.bf16.mxu0 0
    %424 = vmatpush1.bf16.xpose.msra.mxu0 0
    %425 = vmatprep.subr.bf16.mxu0 0
    %426 = vmatpush1.bf16.xpose.msra.mxu0 0
    %427 = vmatprep.mubr.bf16.mxu0 0
    %428 = vmatmul.mubr.bf16.gmra.mrb[0].mxu0 %v390
    %v429 = vpop.f32.mrb[0].mxu0
    %v430 = vadd.f32 %v384, %v429
    %v431 = vpop.f32.mrb[0].mxu0
    %v432 = vpop.f32.mrb[0].mxu0
    %v433 = vpop.f32.mrb[0].mxu0
    %434 = vdwg.mxu0
    %v435 = vpack.c.b16 %v372, %v372
    %436 = vrot.lane.b32.xlu0 %v435, 64
    %v437 = vpop.permute.xlu0 %436
    %v439 = vsel %vm388, %v368, 0
    %v442 = vsel %vm388, %v437, 0
    %444 = vmatprep.subr.bf16.mxu0 0
    %445 = vmatpush1.bf16.xpose.msra.mxu0 %v442
    %446 = vmatprep.subr.bf16.mxu0 0
    %447 = vmatpush1.bf16.xpose.msra.mxu0 0
    %448 = vmatprep.subr.bf16.mxu0 0
    %449 = vmatpush1.bf16.xpose.msra.mxu0 0
    %450 = vmatprep.subr.bf16.mxu0 0
    %451 = vmatpush1.bf16.xpose.msra.mxu0 0
    %452 = vmatprep.subr.bf16.mxu0 0
    %453 = vmatpush1.bf16.xpose.msra.mxu0 0
    %454 = vmatprep.subr.bf16.mxu0 0
    %455 = vmatpush1.bf16.xpose.msra.mxu0 0
    %456 = vmatprep.subr.bf16.mxu0 0
    %457 = vmatpush1.bf16.xpose.msra.mxu0 0
    %458 = vmatprep.subr.bf16.mxu0 0
    %459 = vmatpush1.bf16.xpose.msra.mxu0 0
    %460 = vmatprep.subr.bf16.mxu0 0
    %461 = vmatpush1.bf16.xpose.msra.mxu0 0
    %462 = vmatprep.subr.bf16.mxu0 0
    %463 = vmatpush1.bf16.xpose.msra.mxu0 0
    %464 = vmatprep.subr.bf16.mxu0 0
    %465 = vmatpush1.bf16.xpose.msra.mxu0 0
    %466 = vmatprep.subr.bf16.mxu0 0
    %467 = vmatpush1.bf16.xpose.msra.mxu0 0
    %468 = vmatprep.subr.bf16.mxu0 0
    %469 = vmatpush1.bf16.xpose.msra.mxu0 0
    %470 = vmatprep.subr.bf16.mxu0 0
    %471 = vmatpush1.bf16.xpose.msra.mxu0 0
    %472 = vmatprep.subr.bf16.mxu0 0
    %473 = vmatpush1.bf16.xpose.msra.mxu0 0
    %474 = vmatprep.subr.bf16.mxu0 0
    %475 = vmatpush1.bf16.xpose.msra.mxu0 0
    %476 = vmatprep.mubr.bf16.mxu0 0
    %477 = vmatmul.mubr.bf16.gmra.mrb[0].mxu0 %v439
    %v478 = vpop.f32.mrb[0].mxu0
    %v479 = vadd.f32 %v384, %v478
    %v480 = vpop.f32.mrb[0].mxu0
    %v481 = vpop.f32.mrb[0].mxu0
    %v482 = vpop.f32.mrb[0].mxu0
    %483 = vdwg.mxu0
    %vm484 = vcmask 64512
    %v485 = vsel %vm484, %v430, -inf
    %486 = vmax.xlane.f32.xlu0 %v485
    %v487 = vpop.xlane.xlu0 %486
    %v488 = vsel %vm484, %v479, -inf
    %489 = vmax.xlane.f32.xlu0 %v488
    %v490 = vpop.xlane.xlu0 %489
    %v491 = vsub.f32 %v430, %v487
    %v492 = vsub.f32 %v479, %v490
    %v493 = vmul.f32 %v491, 1.442695
    %v494 = vpow.pop %v493
    %v495 = vmul.f32 %v492, 1.442695
    %v496 = vpow.pop %v495
    %v497 = vsel %vm484, %v494, 0.0
    %498 = vadd.xlane.f32.xlu0 %v497
    %v499 = vpop.xlane.xlu0 %498
    %v500 = vsel %vm484, %v496, 0.0
    %501 = vadd.xlane.f32.xlu0 %v500
    %v502 = vpop.xlane.xlu0 %501
    %v503 = vrcp.pop %v499
    %v504 = vrcp.pop %v502
    %v505 = vmul.f32 %v494, %v503
    %v506 = vmul.f32 %v496, %v504
    %v507 = vpack.c.bf16 %v505, %v505
    %v508 = vpack.c.bf16 %v506, %v506
    %v510 = vsel %vm484, %v507, 0
    %vm512 = vcmask 1043456
    %v514 = vsel %vm512, %v377, 0
    %516 = vmatprep.subr.bf16.mxu0 0
    %517 = vmatpush1.bf16.msra.mxu0 %v514
    %518 = vmatprep.subr.bf16.mxu0 0
    %519 = vmatpush1.bf16.msra.mxu0 0
    %520 = vmatprep.subr.bf16.mxu0 0
    %521 = vmatpush1.bf16.msra.mxu0 0
    %522 = vmatprep.subr.bf16.mxu0 0
    %523 = vmatpush1.bf16.msra.mxu0 0
    %524 = vmatprep.subr.bf16.mxu0 0
    %525 = vmatpush1.bf16.msra.mxu0 0
    %526 = vmatprep.subr.bf16.mxu0 0
    %527 = vmatpush1.bf16.msra.mxu0 0
    %528 = vmatprep.subr.bf16.mxu0 0
    %529 = vmatpush1.bf16.msra.mxu0 0
    %530 = vmatprep.subr.bf16.mxu0 0
    %531 = vmatpush1.bf16.msra.mxu0 0
    %532 = vmatprep.subr.bf16.mxu0 0
    %533 = vmatpush1.bf16.msra.mxu0 0
    %534 = vmatprep.subr.bf16.mxu0 0
    %535 = vmatpush1.bf16.msra.mxu0 0
    %536 = vmatprep.subr.bf16.mxu0 0
    %537 = vmatpush1.bf16.msra.mxu0 0
    %538 = vmatprep.subr.bf16.mxu0 0
    %539 = vmatpush1.bf16.msra.mxu0 0
    %540 = vmatprep.subr.bf16.mxu0 0
    %541 = vmatpush1.bf16.msra.mxu0 0
    %542 = vmatprep.subr.bf16.mxu0 0
    %543 = vmatpush1.bf16.msra.mxu0 0
    %544 = vmatprep.subr.bf16.mxu0 0
    %545 = vmatpush1.bf16.msra.mxu0 0
    %546 = vmatprep.subr.bf16.mxu0 0
    %547 = vmatpush1.bf16.msra.mxu0 0
    %548 = vmatprep.mubr.bf16.mxu0 0
    %549 = vmatmul.mubr.bf16.gmra.mrb[0].mxu0 %v510
    %v550 = vpop.f32.mrb[0].mxu0
    %v551 = vadd.f32 0.0, %v550
    %v552 = vpop.f32.mrb[0].mxu0
    %v553 = vpop.f32.mrb[0].mxu0
    %v554 = vpop.f32.mrb[0].mxu0
    %555 = vdwg.mxu0
    %v557 = vsel %vm484, %v508, 0
    %v560 = vsel %vm512, %v378, 0
    %562 = vmatprep.subr.bf16.mxu0 0
    %563 = vmatpush1.bf16.msra.mxu0 %v560
    %564 = vmatprep.subr.bf16.mxu0 0
    %565 = vmatpush1.bf16.msra.mxu0 0
    %566 = vmatprep.subr.bf16.mxu0 0
    %567 = vmatpush1.bf16.msra.mxu0 0
    %568 = vmatprep.subr.bf16.mxu0 0
    %569 = vmatpush1.bf16.msra.mxu0 0
    %570 = vmatprep.subr.bf16.mxu0 0
    %571 = vmatpush1.bf16.msra.mxu0 0
    %572 = vmatprep.subr.bf16.mxu0 0
    %573 = vmatpush1.bf16.msra.mxu0 0
    %574 = vmatprep.subr.bf16.mxu0 0
    %575 = vmatpush1.bf16.msra.mxu0 0
    %576 = vmatprep.subr.bf16.mxu0 0
    %577 = vmatpush1.bf16.msra.mxu0 0
    %578 = vmatprep.subr.bf16.mxu0 0
    %579 = vmatpush1.bf16.msra.mxu0 0
    %580 = vmatprep.subr.bf16.mxu0 0
    %581 = vmatpush1.bf16.msra.mxu0 0
    %582 = vmatprep.subr.bf16.mxu0 0
    %583 = vmatpush1.bf16.msra.mxu0 0
    %584 = vmatprep.subr.bf16.mxu0 0
    %585 = vmatpush1.bf16.msra.mxu0 0
    %586 = vmatprep.subr.bf16.mxu0 0
    %587 = vmatpush1.bf16.msra.mxu0 0
    %588 = vmatprep.subr.bf16.mxu0 0
    %589 = vmatpush1.bf16.msra.mxu0 0
    %590 = vmatprep.subr.bf16.mxu0 0
    %591 = vmatpush1.bf16.msra.mxu0 0
    %592 = vmatprep.subr.bf16.mxu0 0
    %593 = vmatpush1.bf16.msra.mxu0 0
    %594 = vmatprep.mubr.bf16.mxu0 0
    %595 = vmatmul.mubr.bf16.gmra.mrb[0].mxu0 %v557
    %v596 = vpop.f32.mrb[0].mxu0
    %v597 = vadd.f32 0.0, %v596
    %v598 = vpop.f32.mrb[0].mxu0
    %v599 = vpop.f32.mrb[0].mxu0
    %v600 = vpop.f32.mrb[0].mxu0
    %601 = vdwg.mxu0
    %602 = vrot.lane.b32.xlu0 %v367, 112
    %v603 = vpop.permute.xlu0 %602
    %604 = vrot.lane.b32.xlu0 %v385, 48
    %v605 = vpop.permute.xlu0 %604
    %v607 = vsel %vm388, %v603, 0
    %v610 = vsel %vm388, %v605, 0
    %612 = vmatprep.subr.bf16.mxu0 0
    %613 = vmatpush1.bf16.xpose.msra.mxu0 %v610
    %614 = vmatprep.subr.bf16.mxu0 0
    %615 = vmatpush1.bf16.xpose.msra.mxu0 0
    %616 = vmatprep.subr.bf16.mxu0 0
    %617 = vmatpush1.bf16.xpose.msra.mxu0 0
    %618 = vmatprep.subr.bf16.mxu0 0
    %619 = vmatpush1.bf16.xpose.msra.mxu0 0
    %620 = vmatprep.subr.bf16.mxu0 0
    %621 = vmatpush1.bf16.xpose.msra.mxu0 0
    %622 = vmatprep.subr.bf16.mxu0 0
    %623 = vmatpush1.bf16.xpose.msra.mxu0 0
    %624 = vmatprep.subr.bf16.mxu0 0
    %625 = vmatpush1.bf16.xpose.msra.mxu0 0
    %626 = vmatprep.subr.bf16.mxu0 0
    %627 = vmatpush1.bf16.xpose.msra.mxu0 0
    %628 = vmatprep.subr.bf16.mxu0 0
    %629 = vmatpush1.bf16.xpose.msra.mxu0 0
    %630 = vmatprep.subr.bf16.mxu0 0
    %631 = vmatpush1.bf16.xpose.msra.mxu0 0
    %632 = vmatprep.subr.bf16.mxu0 0
    %633 = vmatpush1.bf16.xpose.msra.mxu0 0
    %634 = vmatprep.subr.bf16.mxu0 0
    %635 = vmatpush1.bf16.xpose.msra.mxu0 0
    %636 = vmatprep.subr.bf16.mxu0 0
    %637 = vmatpush1.bf16.xpose.msra.mxu0 0
    %638 = vmatprep.subr.bf16.mxu0 0
    %639 = vmatpush1.bf16.xpose.msra.mxu0 0
    %640 = vmatprep.subr.bf16.mxu0 0
    %641 = vmatpush1.bf16.xpose.msra.mxu0 0
    %642 = vmatprep.subr.bf16.mxu0 0
    %643 = vmatpush1.bf16.xpose.msra.mxu0 0
    %644 = vmatprep.mubr.bf16.mxu0 0
    %645 = vmatmul.mubr.bf16.gmra.mrb[0].mxu0 %v607
    %v646 = vpop.f32.mrb[0].mxu0
    %v647 = vadd.f32 %v384, %v646
    %v648 = vpop.f32.mrb[0].mxu0
    %v649 = vpop.f32.mrb[0].mxu0
    %v650 = vpop.f32.mrb[0].mxu0
    %651 = vdwg.mxu0
    %652 = vrot.lane.b32.xlu0 %v368, 112
    %v653 = vpop.permute.xlu0 %652
    %654 = vrot.lane.b32.xlu0 %v435, 48
    %v655 = vpop.permute.xlu0 %654
    %v657 = vsel %vm388, %v653, 0
    %v660 = vsel %vm388, %v655, 0
    %662 = vmatprep.subr.bf16.mxu0 0
    %663 = vmatpush1.bf16.xpose.msra.mxu0 %v660
    %664 = vmatprep.subr.bf16.mxu0 0
    %665 = vmatpush1.bf16.xpose.msra.mxu0 0
    %666 = vmatprep.subr.bf16.mxu0 0
    %667 = vmatpush1.bf16.xpose.msra.mxu0 0
    %668 = vmatprep.subr.bf16.mxu0 0
    %669 = vmatpush1.bf16.xpose.msra.mxu0 0
    %670 = vmatprep.subr.bf16.mxu0 0
    %671 = vmatpush1.bf16.xpose.msra.mxu0 0
    %672 = vmatprep.subr.bf16.mxu0 0
    %673 = vmatpush1.bf16.xpose.msra.mxu0 0
    %674 = vmatprep.subr.bf16.mxu0 0
    %675 = vmatpush1.bf16.xpose.msra.mxu0 0
    %676 = vmatprep.subr.bf16.mxu0 0
    %677 = vmatpush1.bf16.xpose.msra.mxu0 0
    %678 = vmatprep.subr.bf16.mxu0 0
    %679 = vmatpush1.bf16.xpose.msra.mxu0 0
    %680 = vmatprep.subr.bf16.mxu0 0
    %681 = vmatpush1.bf16.xpose.msra.mxu0 0
    %682 = vmatprep.subr.bf16.mxu0 0
    %683 = vmatpush1.bf16.xpose.msra.mxu0 0
    %684 = vmatprep.subr.bf16.mxu0 0
    %685 = vmatpush1.bf16.xpose.msra.mxu0 0
    %686 = vmatprep.subr.bf16.mxu0 0
    %687 = vmatpush1.bf16.xpose.msra.mxu0 0
    %688 = vmatprep.subr.bf16.mxu0 0
    %689 = vmatpush1.bf16.xpose.msra.mxu0 0
    %690 = vmatprep.subr.bf16.mxu0 0
    %691 = vmatpush1.bf16.xpose.msra.mxu0 0
    %692 = vmatprep.subr.bf16.mxu0 0
    %693 = vmatpush1.bf16.xpose.msra.mxu0 0
    %694 = vmatprep.mubr.bf16.mxu0 0
    %695 = vmatmul.mubr.bf16.gmra.mrb[0].mxu0 %v657
    %v696 = vpop.f32.mrb[0].mxu0
    %v697 = vadd.f32 %v384, %v696
    %v698 = vpop.f32.mrb[0].mxu0
    %v699 = vpop.f32.mrb[0].mxu0
    %v700 = vpop.f32.mrb[0].mxu0
    %701 = vdwg.mxu0
    %v702 = vsel %vm484, %v647, -inf
    %703 = vmax.xlane.f32.xlu0 %v702
    %v704 = vpop.xlane.xlu0 %703
    %v705 = vsel %vm484, %v697, -inf
    %706 = vmax.xlane.f32.xlu0 %v705
    %v707 = vpop.xlane.xlu0 %706
    %v708 = vsub.f32 %v647, %v704
    %v709 = vsub.f32 %v697, %v707
    %v710 = vmul.f32 %v708, 1.442695
    %v711 = vpow.pop %v710
    %v712 = vmul.f32 %v709, 1.442695
    %v713 = vpow.pop %v712
    %v714 = vsel %vm484, %v711, 0.0
    %715 = vadd.xlane.f32.xlu0 %v714
    %v716 = vpop.xlane.xlu0 %715
    %v717 = vsel %vm484, %v713, 0.0
    %718 = vadd.xlane.f32.xlu0 %v717
    %v719 = vpop.xlane.xlu0 %718
    %v720 = vrcp.pop %v716
    %v721 = vrcp.pop %v719
    %v722 = vmul.f32 %v711, %v720
    %v723 = vmul.f32 %v713, %v721
    %v724 = vpack.c.bf16 %v722, %v722
    %v725 = vpack.c.bf16 %v723, %v723
    %726 = vrot.lane.b32.xlu0 %v377, 112
    %v727 = vpop.permute.xlu0 %726
    %v729 = vsel %vm484, %v724, 0
    %v732 = vsel %vm512, %v727, 0
    %734 = vmatprep.subr.bf16.mxu0 0
    %735 = vmatpush1.bf16.msra.mxu0 %v732
    %736 = vmatprep.subr.bf16.mxu0 0
    %737 = vmatpush1.bf16.msra.mxu0 0
    %738 = vmatprep.subr.bf16.mxu0 0
    %739 = vmatpush1.bf16.msra.mxu0 0
    %740 = vmatprep.subr.bf16.mxu0 0
    %741 = vmatpush1.bf16.msra.mxu0 0
    %742 = vmatprep.subr.bf16.mxu0 0
    %743 = vmatpush1.bf16.msra.mxu0 0
    %744 = vmatprep.subr.bf16.mxu0 0
    %745 = vmatpush1.bf16.msra.mxu0 0
    %746 = vmatprep.subr.bf16.mxu0 0
    %747 = vmatpush1.bf16.msra.mxu0 0
    %748 = vmatprep.subr.bf16.mxu0 0
    %749 = vmatpush1.bf16.msra.mxu0 0
    %750 = vmatprep.subr.bf16.mxu0 0
    %751 = vmatpush1.bf16.msra.mxu0 0
    %752 = vmatprep.subr.bf16.mxu0 0
    %753 = vmatpush1.bf16.msra.mxu0 0
    %754 = vmatprep.subr.bf16.mxu0 0
    %755 = vmatpush1.bf16.msra.mxu0 0
    %756 = vmatprep.subr.bf16.mxu0 0
    %757 = vmatpush1.bf16.msra.mxu0 0
    %758 = vmatprep.subr.bf16.mxu0 0
    %759 = vmatpush1.bf16.msra.mxu0 0
    %760 = vmatprep.subr.bf16.mxu0 0
    %761 = vmatpush1.bf16.msra.mxu0 0
    %762 = vmatprep.subr.bf16.mxu0 0
    %763 = vmatpush1.bf16.msra.mxu0 0
    %764 = vmatprep.subr.bf16.mxu0 0
    %765 = vmatpush1.bf16.msra.mxu0 0
    %766 = vmatprep.mubr.bf16.mxu0 0
    %767 = vmatmul.mubr.bf16.gmra.mrb[0].mxu0 %v729
    %v768 = vpop.f32.mrb[0].mxu0
    %v769 = vadd.f32 0.0, %v768
    %v770 = vpop.f32.mrb[0].mxu0
    %v771 = vpop.f32.mrb[0].mxu0
    %v772 = vpop.f32.mrb[0].mxu0
    %773 = vdwg.mxu0
    %774 = vrot.lane.b32.xlu0 %v378, 112
    %v775 = vpop.permute.xlu0 %774
    %v777 = vsel %vm484, %v725, 0
    %v780 = vsel %vm512, %v775, 0
    %782 = vmatprep.subr.bf16.mxu0 0
    %783 = vmatpush1.bf16.msra.mxu0 %v780
    %784 = vmatprep.subr.bf16.mxu0 0
    %785 = vmatpush1.bf16.msra.mxu0 0
    %786 = vmatprep.subr.bf16.mxu0 0
    %787 = vmatpush1.bf16.msra.mxu0 0
    %788 = vmatprep.subr.bf16.mxu0 0
    %789 = vmatpush1.bf16.msra.mxu0 0
    %790 = vmatprep.subr.bf16.mxu0 0
    %791 = vmatpush1.bf16.msra.mxu0 0
    %792 = vmatprep.subr.bf16.mxu0 0
    %793 = vmatpush1.bf16.msra.mxu0 0
    %794 = vmatprep.subr.bf16.mxu0 0
    %795 = vmatpush1.bf16.msra.mxu0 0
    %796 = vmatprep.subr.bf16.mxu0 0
    %797 = vmatpush1.bf16.msra.mxu0 0
    %798 = vmatprep.subr.bf16.mxu0 0
    %799 = vmatpush1.bf16.msra.mxu0 0
    %800 = vmatprep.subr.bf16.mxu0 0
    %801 = vmatpush1.bf16.msra.mxu0 0
    %802 = vmatprep.subr.bf16.mxu0 0
    %803 = vmatpush1.bf16.msra.mxu0 0
    %804 = vmatprep.subr.bf16.mxu0 0
    %805 = vmatpush1.bf16.msra.mxu0 0
    %806 = vmatprep.subr.bf16.mxu0 0
    %807 = vmatpush1.bf16.msra.mxu0 0
    %808 = vmatprep.subr.bf16.mxu0 0
    %809 = vmatpush1.bf16.msra.mxu0 0
    %810 = vmatprep.subr.bf16.mxu0 0
    %811 = vmatpush1.bf16.msra.mxu0 0
    %812 = vmatprep.subr.bf16.mxu0 0
    %813 = vmatpush1.bf16.msra.mxu0 0
    %814 = vmatprep.mubr.bf16.mxu0 0
    %815 = vmatmul.mubr.bf16.gmra.mrb[0].mxu0 %v777
    %v816 = vpop.f32.mrb[0].mxu0
    %v817 = vadd.f32 0.0, %v816
    %v818 = vpop.f32.mrb[0].mxu0
    %v819 = vpop.f32.mrb[0].mxu0
    %v820 = vpop.f32.mrb[0].mxu0
    %821 = vdwg.mxu0
    %822 = vrot.lane.b32.xlu0 %v367, 96
    %v823 = vpop.permute.xlu0 %822
    %824 = vrot.lane.b32.xlu0 %v385, 32
    %v825 = vpop.permute.xlu0 %824
    %v827 = vsel %vm388, %v823, 0
    %v830 = vsel %vm388, %v825, 0
    %832 = vmatprep.subr.bf16.mxu0 0
    %833 = vmatpush1.bf16.xpose.msra.mxu0 %v830
    %834 = vmatprep.subr.bf16.mxu0 0
    %835 = vmatpush1.bf16.xpose.msra.mxu0 0
    %836 = vmatprep.subr.bf16.mxu0 0
    %837 = vmatpush1.bf16.xpose.msra.mxu0 0
    %838 = vmatprep.subr.bf16.mxu0 0
    %839 = vmatpush1.bf16.xpose.msra.mxu0 0
    %840 = vmatprep.subr.bf16.mxu0 0
    %841 = vmatpush1.bf16.xpose.msra.mxu0 0
    %842 = vmatprep.subr.bf16.mxu0 0
    %843 = vmatpush1.bf16.xpose.msra.mxu0 0
    %844 = vmatprep.subr.bf16.mxu0 0
    %845 = vmatpush1.bf16.xpose.msra.mxu0 0
    %846 = vmatprep.subr.bf16.mxu0 0
    %847 = vmatpush1.bf16.xpose.msra.mxu0 0
    %848 = vmatprep.subr.bf16.mxu0 0
    %849 = vmatpush1.bf16.xpose.msra.mxu0 0
    %850 = vmatprep.subr.bf16.mxu0 0
    %851 = vmatpush1.bf16.xpose.msra.mxu0 0
    %852 = vmatprep.subr.bf16.mxu0 0
    %853 = vmatpush1.bf16.xpose.msra.mxu0 0
    %854 = vmatprep.subr.bf16.mxu0 0
    %855 = vmatpush1.bf16.xpose.msra.mxu0 0
    %856 = vmatprep.subr.bf16.mxu0 0
    %857 = vmatpush1.bf16.xpose.msra.mxu0 0
    %858 = vmatprep.subr.bf16.mxu0 0
    %859 = vmatpush1.bf16.xpose.msra.mxu0 0
    %860 = vmatprep.subr.bf16.mxu0 0
    %861 = vmatpush1.bf16.xpose.msra.mxu0 0
    %862 = vmatprep.subr.bf16.mxu0 0
    %863 = vmatpush1.bf16.xpose.msra.mxu0 0
    %864 = vmatprep.mubr.bf16.mxu0 0
    %865 = vmatmul.mubr.bf16.gmra.mrb[0].mxu0 %v827
    %v866 = vpop.f32.mrb[0].mxu0
    %v867 = vadd.f32 %v384, %v866
    %v868 = vpop.f32.mrb[0].mxu0
    %v869 = vpop.f32.mrb[0].mxu0
    %v870 = vpop.f32.mrb[0].mxu0
    %871 = vdwg.mxu0
    %872 = vrot.lane.b32.xlu0 %v368, 96
    %v873 = vpop.permute.xlu0 %872
    %874 = vrot.lane.b32.xlu0 %v435, 32
    %v875 = vpop.permute.xlu0 %874
    %v877 = vsel %vm388, %v873, 0
    %v880 = vsel %vm388, %v875, 0
    %882 = vmatprep.subr.bf16.mxu0 0
    %883 = vmatpush1.bf16.xpose.msra.mxu0 %v880
    %884 = vmatprep.subr.bf16.mxu0 0
    %885 = vmatpush1.bf16.xpose.msra.mxu0 0
    %886 = vmatprep.subr.bf16.mxu0 0
    %887 = vmatpush1.bf16.xpose.msra.mxu0 0
    %888 = vmatprep.subr.bf16.mxu0 0
    %889 = vmatpush1.bf16.xpose.msra.mxu0 0
    %890 = vmatprep.subr.bf16.mxu0 0
    %891 = vmatpush1.bf16.xpose.msra.mxu0 0
    %892 = vmatprep.subr.bf16.mxu0 0
    %893 = vmatpush1.bf16.xpose.msra.mxu0 0
    %894 = vmatprep.subr.bf16.mxu0 0
    %895 = vmatpush1.bf16.xpose.msra.mxu0 0
    %896 = vmatprep.subr.bf16.mxu0 0
    %897 = vmatpush1.bf16.xpose.msra.mxu0 0
    %898 = vmatprep.subr.bf16.mxu0 0
    %899 = vmatpush1.bf16.xpose.msra.mxu0 0
    %900 = vmatprep.subr.bf16.mxu0 0
    %901 = vmatpush1.bf16.xpose.msra.mxu0 0
    %902 = vmatprep.subr.bf16.mxu0 0
    %903 = vmatpush1.bf16.xpose.msra.mxu0 0
    %904 = vmatprep.subr.bf16.mxu0 0
    %905 = vmatpush1.bf16.xpose.msra.mxu0 0
    %906 = vmatprep.subr.bf16.mxu0 0
    %907 = vmatpush1.bf16.xpose.msra.mxu0 0
    %908 = vmatprep.subr.bf16.mxu0 0
    %909 = vmatpush1.bf16.xpose.msra.mxu0 0
    %910 = vmatprep.subr.bf16.mxu0 0
    %911 = vmatpush1.bf16.xpose.msra.mxu0 0
    %912 = vmatprep.subr.bf16.mxu0 0
    %913 = vmatpush1.bf16.xpose.msra.mxu0 0
    %914 = vmatprep.mubr.bf16.mxu0 0
    %915 = vmatmul.mubr.bf16.gmra.mrb[0].mxu0 %v877
    %v916 = vpop.f32.mrb[0].mxu0
    %v917 = vadd.f32 %v384, %v916
    %v918 = vpop.f32.mrb[0].mxu0
    %v919 = vpop.f32.mrb[0].mxu0
    %v920 = vpop.f32.mrb[0].mxu0
    %921 = vdwg.mxu0
    %v922 = vsel %vm484, %v867, -inf
    %923 = vmax.xlane.f32.xlu0 %v922
    %v924 = vpop.xlane.xlu0 %923
    %v925 = vsel %vm484, %v917, -inf
    %926 = vmax.xlane.f32.xlu0 %v925
    %v927 = vpop.xlane.xlu0 %926
    %v928 = vsub.f32 %v867, %v924
    %v929 = vsub.f32 %v917, %v927
    %v930 = vmul.f32 %v928, 1.442695
    %v931 = vpow.pop %v930
    %v932 = vmul.f32 %v929, 1.442695
    %v933 = vpow.pop %v932
    %v934 = vsel %vm484, %v931, 0.0
    %935 = vadd.xlane.f32.xlu0 %v934
    %v936 = vpop.xlane.xlu0 %935
    %v937 = vsel %vm484, %v933, 0.0
    %938 = vadd.xlane.f32.xlu0 %v937
    %v939 = vpop.xlane.xlu0 %938
    %v940 = vrcp.pop %v936
    %v941 = vrcp.pop %v939
    %v942 = vmul.f32 %v931, %v940
    %v943 = vmul.f32 %v933, %v941
    %v944 = vpack.c.bf16 %v942, %v942
    %v945 = vpack.c.bf16 %v943, %v943
    %946 = vrot.lane.b32.xlu0 %v377, 96
    %v947 = vpop.permute.xlu0 %946
    %v949 = vsel %vm484, %v944, 0
    %v952 = vsel %vm512, %v947, 0
    %954 = vmatprep.subr.bf16.mxu0 0
    %955 = vmatpush1.bf16.msra.mxu0 %v952
    %956 = vmatprep.subr.bf16.mxu0 0
    %957 = vmatpush1.bf16.msra.mxu0 0
    %958 = vmatprep.subr.bf16.mxu0 0
    %959 = vmatpush1.bf16.msra.mxu0 0
    %960 = vmatprep.subr.bf16.mxu0 0
    %961 = vmatpush1.bf16.msra.mxu0 0
    %962 = vmatprep.subr.bf16.mxu0 0
    %963 = vmatpush1.bf16.msra.mxu0 0
    %964 = vmatprep.subr.bf16.mxu0 0
    %965 = vmatpush1.bf16.msra.mxu0 0
    %966 = vmatprep.subr.bf16.mxu0 0
    %967 = vmatpush1.bf16.msra.mxu0 0
    %968 = vmatprep.subr.bf16.mxu0 0
    %969 = vmatpush1.bf16.msra.mxu0 0
    %970 = vmatprep.subr.bf16.mxu0 0
    %971 = vmatpush1.bf16.msra.mxu0 0
    %972 = vmatprep.subr.bf16.mxu0 0
    %973 = vmatpush1.bf16.msra.mxu0 0
    %974 = vmatprep.subr.bf16.mxu0 0
    %975 = vmatpush1.bf16.msra.mxu0 0
    %976 = vmatprep.subr.bf16.mxu0 0
    %977 = vmatpush1.bf16.msra.mxu0 0
    %978 = vmatprep.subr.bf16.mxu0 0
    %979 = vmatpush1.bf16.msra.mxu0 0
    %980 = vmatprep.subr.bf16.mxu0 0
    %981 = vmatpush1.bf16.msra.mxu0 0
    %982 = vmatprep.subr.bf16.mxu0 0
    %983 = vmatpush1.bf16.msra.mxu0 0
    %984 = vmatprep.subr.bf16.mxu0 0
    %985 = vmatpush1.bf16.msra.mxu0 0
    %986 = vmatprep.mubr.bf16.mxu0 0
    %987 = vmatmul.mubr.bf16.gmra.mrb[0].mxu0 %v949
    %v988 = vpop.f32.mrb[0].mxu0
    %v989 = vadd.f32 0.0, %v988
    %v990 = vpop.f32.mrb[0].mxu0
    %v991 = vpop.f32.mrb[0].mxu0
    %v992 = vpop.f32.mrb[0].mxu0
    %993 = vdwg.mxu0
    %994 = vrot.lane.b32.xlu0 %v378, 96
    %v995 = vpop.permute.xlu0 %994
    %v997 = vsel %vm484, %v945, 0
    %v1000 = vsel %vm512, %v995, 0
    %1002 = vmatprep.subr.bf16.mxu0 0
    %1003 = vmatpush1.bf16.msra.mxu0 %v1000
    %1004 = vmatprep.subr.bf16.mxu0 0
    %1005 = vmatpush1.bf16.msra.mxu0 0
    %1006 = vmatprep.subr.bf16.mxu0 0
    %1007 = vmatpush1.bf16.msra.mxu0 0
    %1008 = vmatprep.subr.bf16.mxu0 0
    %1009 = vmatpush1.bf16.msra.mxu0 0
    %1010 = vmatprep.subr.bf16.mxu0 0
    %1011 = vmatpush1.bf16.msra.mxu0 0
    %1012 = vmatprep.subr.bf16.mxu0 0
    %1013 = vmatpush1.bf16.msra.mxu0 0
    %1014 = vmatprep.subr.bf16.mxu0 0
    %1015 = vmatpush1.bf16.msra.mxu0 0
    %1016 = vmatprep.subr.bf16.mxu0 0
    %1017 = vmatpush1.bf16.msra.mxu0 0
    %1018 = vmatprep.subr.bf16.mxu0 0
    %1019 = vmatpush1.bf16.msra.mxu0 0
    %1020 = vmatprep.subr.bf16.mxu0 0
    %1021 = vmatpush1.bf16.msra.mxu0 0
    %1022 = vmatprep.subr.bf16.mxu0 0
    %1023 = vmatpush1.bf16.msra.mxu0 0
    %1024 = vmatprep.subr.bf16.mxu0 0
    %1025 = vmatpush1.bf16.msra.mxu0 0
    %1026 = vmatprep.subr.bf16.mxu0 0
    %1027 = vmatpush1.bf16.msra.mxu0 0
    %1028 = vmatprep.subr.bf16.mxu0 0
    %1029 = vmatpush1.bf16.msra.mxu0 0
    %1030 = vmatprep.subr.bf16.mxu0 0
    %1031 = vmatpush1.bf16.msra.mxu0 0
    %1032 = vmatprep.subr.bf16.mxu0 0
    %1033 = vmatpush1.bf16.msra.mxu0 0
    %1034 = vmatprep.mubr.bf16.mxu0 0
    %1035 = vmatmul.mubr.bf16.gmra.mrb[0].mxu0 %v997
    %v1036 = vpop.f32.mrb[0].mxu0
    %v1037 = vadd.f32 0.0, %v1036
    %v1038 = vpop.f32.mrb[0].mxu0
    %v1039 = vpop.f32.mrb[0].mxu0
    %v1040 = vpop.f32.mrb[0].mxu0
    %1041 = vdwg.mxu0
    %1042 = vrot.lane.b32.xlu0 %v367, 80
    %v1043 = vpop.permute.xlu0 %1042
    %1044 = vrot.lane.b32.xlu0 %v385, 16
    %v1045 = vpop.permute.xlu0 %1044
    %v1047 = vsel %vm388, %v1043, 0
    %v1050 = vsel %vm388, %v1045, 0
    %1052 = vmatprep.subr.bf16.mxu0 0
    %1053 = vmatpush1.bf16.xpose.msra.mxu0 %v1050
    %1054 = vmatprep.subr.bf16.mxu0 0
    %1055 = vmatpush1.bf16.xpose.msra.mxu0 0
    %1056 = vmatprep.subr.bf16.mxu0 0
    %1057 = vmatpush1.bf16.xpose.msra.mxu0 0
    %1058 = vmatprep.subr.bf16.mxu0 0
    %1059 = vmatpush1.bf16.xpose.msra.mxu0 0
    %1060 = vmatprep.subr.bf16.mxu0 0
    %1061 = vmatpush1.bf16.xpose.msra.mxu0 0
    %1062 = vmatprep.subr.bf16.mxu0 0
    %1063 = vmatpush1.bf16.xpose.msra.mxu0 0
    %1064 = vmatprep.subr.bf16.mxu0 0
    %1065 = vmatpush1.bf16.xpose.msra.mxu0 0
    %1066 = vmatprep.subr.bf16.mxu0 0
    %1067 = vmatpush1.bf16.xpose.msra.mxu0 0
    %1068 = vmatprep.subr.bf16.mxu0 0
    %1069 = vmatpush1.bf16.xpose.msra.mxu0 0
    %1070 = vmatprep.subr.bf16.mxu0 0
    %1071 = vmatpush1.bf16.xpose.msra.mxu0 0
    %1072 = vmatprep.subr.bf16.mxu0 0
    %1073 = vmatpush1.bf16.xpose.msra.mxu0 0
    %1074 = vmatprep.subr.bf16.mxu0 0
    %1075 = vmatpush1.bf16.xpose.msra.mxu0 0
    %1076 = vmatprep.subr.bf16.mxu0 0
    %1077 = vmatpush1.bf16.xpose.msra.mxu0 0
    %1078 = vmatprep.subr.bf16.mxu0 0
    %1079 = vmatpush1.bf16.xpose.msra.mxu0 0
    %1080 = vmatprep.subr.bf16.mxu0 0
    %1081 = vmatpush1.bf16.xpose.msra.mxu0 0
    %1082 = vmatprep.subr.bf16.mxu0 0
    %1083 = vmatpush1.bf16.xpose.msra.mxu0 0
    %1084 = vmatprep.mubr.bf16.mxu0 0
    %1085 = vmatmul.mubr.bf16.gmra.mrb[0].mxu0 %v1047
    %v1086 = vpop.f32.mrb[0].mxu0
    %v1087 = vadd.f32 %v384, %v1086
    %v1088 = vpop.f32.mrb[0].mxu0
    %v1089 = vpop.f32.mrb[0].mxu0
    %v1090 = vpop.f32.mrb[0].mxu0
    %1091 = vdwg.mxu0
    %1092 = vrot.lane.b32.xlu0 %v368, 80
    %v1093 = vpop.permute.xlu0 %1092
    %1094 = vrot.lane.b32.xlu0 %v435, 16
    %v1095 = vpop.permute.xlu0 %1094
    %v1097 = vsel %vm388, %v1093, 0
    %v1100 = vsel %vm388, %v1095, 0
    %1102 = vmatprep.subr.bf16.mxu0 0
    %1103 = vmatpush1.bf16.xpose.msra.mxu0 %v1100
    %1104 = vmatprep.subr.bf16.mxu0 0
    %1105 = vmatpush1.bf16.xpose.msra.mxu0 0
    %1106 = vmatprep.subr.bf16.mxu0 0
    %1107 = vmatpush1.bf16.xpose.msra.mxu0 0
    %1108 = vmatprep.subr.bf16.mxu0 0
    %1109 = vmatpush1.bf16.xpose.msra.mxu0 0
    %1110 = vmatprep.subr.bf16.mxu0 0
    %1111 = vmatpush1.bf16.xpose.msra.mxu0 0
    %1112 = vmatprep.subr.bf16.mxu0 0
    %1113 = vmatpush1.bf16.xpose.msra.mxu0 0
    %1114 = vmatprep.subr.bf16.mxu0 0
    %1115 = vmatpush1.bf16.xpose.msra.mxu0 0
    %1116 = vmatprep.subr.bf16.mxu0 0
    %1117 = vmatpush1.bf16.xpose.msra.mxu0 0
    %1118 = vmatprep.subr.bf16.mxu0 0
    %1119 = vmatpush1.bf16.xpose.msra.mxu0 0
    %1120 = vmatprep.subr.bf16.mxu0 0
    %1121 = vmatpush1.bf16.xpose.msra.mxu0 0
    %1122 = vmatprep.subr.bf16.mxu0 0
    %1123 = vmatpush1.bf16.xpose.msra.mxu0 0
    %1124 = vmatprep.subr.bf16.mxu0 0
    %1125 = vmatpush1.bf16.xpose.msra.mxu0 0
    %1126 = vmatprep.subr.bf16.mxu0 0
    %1127 = vmatpush1.bf16.xpose.msra.mxu0 0
    %1128 = vmatprep.subr.bf16.mxu0 0
    %1129 = vmatpush1.bf16.xpose.msra.mxu0 0
    %1130 = vmatprep.subr.bf16.mxu0 0
    %1131 = vmatpush1.bf16.xpose.msra.mxu0 0
    %1132 = vmatprep.subr.bf16.mxu0 0
    %1133 = vmatpush1.bf16.xpose.msra.mxu0 0
    %1134 = vmatprep.mubr.bf16.mxu0 0
    %1135 = vmatmul.mubr.bf16.gmra.mrb[0].mxu0 %v1097
    %v1136 = vpop.f32.mrb[0].mxu0
    %v1137 = vadd.f32 %v384, %v1136
    %v1138 = vpop.f32.mrb[0].mxu0
    %v1139 = vpop.f32.mrb[0].mxu0
    %v1140 = vpop.f32.mrb[0].mxu0
    %1141 = vdwg.mxu0
    %v1142 = vsel %vm484, %v1087, -inf
    %1143 = vmax.xlane.f32.xlu0 %v1142
    %v1144 = vpop.xlane.xlu0 %1143
    %v1145 = vsel %vm484, %v1137, -inf
    %1146 = vmax.xlane.f32.xlu0 %v1145
    %v1147 = vpop.xlane.xlu0 %1146
    %v1148 = vsub.f32 %v1087, %v1144
    %v1149 = vsub.f32 %v1137, %v1147
    %v1150 = vmul.f32 %v1148, 1.442695
    %v1151 = vpow.pop %v1150
    %v1152 = vmul.f32 %v1149, 1.442695
    %v1153 = vpow.pop %v1152
    %v1154 = vsel %vm484, %v1151, 0.0
    %1155 = vadd.xlane.f32.xlu0 %v1154
    %v1156 = vpop.xlane.xlu0 %1155
    %v1157 = vsel %vm484, %v1153, 0.0
    %1158 = vadd.xlane.f32.xlu0 %v1157
    %v1159 = vpop.xlane.xlu0 %1158
    %v1160 = vrcp.pop %v1156
    %v1161 = vrcp.pop %v1159
    %v1162 = vmul.f32 %v1151, %v1160
    %v1163 = vmul.f32 %v1153, %v1161
    %v1164 = vpack.c.bf16 %v1162, %v1162
    %v1165 = vpack.c.bf16 %v1163, %v1163
    %1166 = vrot.lane.b32.xlu0 %v377, 80
    %v1167 = vpop.permute.xlu0 %1166
    %v1169 = vsel %vm484, %v1164, 0
    %v1172 = vsel %vm512, %v1167, 0
    %1174 = vmatprep.subr.bf16.mxu0 0
    %1175 = vmatpush1.bf16.msra.mxu0 %v1172
    %1176 = vmatprep.subr.bf16.mxu0 0
    %1177 = vmatpush1.bf16.msra.mxu0 0
    %1178 = vmatprep.subr.bf16.mxu0 0
    %1179 = vmatpush1.bf16.msra.mxu0 0
    %1180 = vmatprep.subr.bf16.mxu0 0
    %1181 = vmatpush1.bf16.msra.mxu0 0
    %1182 = vmatprep.subr.bf16.mxu0 0
    %1183 = vmatpush1.bf16.msra.mxu0 0
    %1184 = vmatprep.subr.bf16.mxu0 0
    %1185 = vmatpush1.bf16.msra.mxu0 0
    %1186 = vmatprep.subr.bf16.mxu0 0
    %1187 = vmatpush1.bf16.msra.mxu0 0
    %1188 = vmatprep.subr.bf16.mxu0 0
    %1189 = vmatpush1.bf16.msra.mxu0 0
    %1190 = vmatprep.subr.bf16.mxu0 0
    %1191 = vmatpush1.bf16.msra.mxu0 0
    %1192 = vmatprep.subr.bf16.mxu0 0
    %1193 = vmatpush1.bf16.msra.mxu0 0
    %1194 = vmatprep.subr.bf16.mxu0 0
    %1195 = vmatpush1.bf16.msra.mxu0 0
    %1196 = vmatprep.subr.bf16.mxu0 0
    %1197 = vmatpush1.bf16.msra.mxu0 0
    %1198 = vmatprep.subr.bf16.mxu0 0
    %1199 = vmatpush1.bf16.msra.mxu0 0
    %1200 = vmatprep.subr.bf16.mxu0 0
    %1201 = vmatpush1.bf16.msra.mxu0 0
    %1202 = vmatprep.subr.bf16.mxu0 0
    %1203 = vmatpush1.bf16.msra.mxu0 0
    %1204 = vmatprep.subr.bf16.mxu0 0
    %1205 = vmatpush1.bf16.msra.mxu0 0
    %1206 = vmatprep.mubr.bf16.mxu0 0
    %1207 = vmatmul.mubr.bf16.gmra.mrb[0].mxu0 %v1169
    %v1208 = vpop.f32.mrb[0].mxu0
    %v1209 = vadd.f32 0.0, %v1208
    %v1210 = vpop.f32.mrb[0].mxu0
    %v1211 = vpop.f32.mrb[0].mxu0
    %v1212 = vpop.f32.mrb[0].mxu0
    %1213 = vdwg.mxu0
    %1214 = vrot.lane.b32.xlu0 %v378, 80
    %v1215 = vpop.permute.xlu0 %1214
    %v1217 = vsel %vm484, %v1165, 0
    %v1220 = vsel %vm512, %v1215, 0
    %1222 = vmatprep.subr.bf16.mxu0 0
    %1223 = vmatpush1.bf16.msra.mxu0 %v1220
    %1224 = vmatprep.subr.bf16.mxu0 0
    %1225 = vmatpush1.bf16.msra.mxu0 0
    %1226 = vmatprep.subr.bf16.mxu0 0
    %1227 = vmatpush1.bf16.msra.mxu0 0
    %1228 = vmatprep.subr.bf16.mxu0 0
    %1229 = vmatpush1.bf16.msra.mxu0 0
    %1230 = vmatprep.subr.bf16.mxu0 0
    %1231 = vmatpush1.bf16.msra.mxu0 0
    %1232 = vmatprep.subr.bf16.mxu0 0
    %1233 = vmatpush1.bf16.msra.mxu0 0
    %1234 = vmatprep.subr.bf16.mxu0 0
    %1235 = vmatpush1.bf16.msra.mxu0 0
    %1236 = vmatprep.subr.bf16.mxu0 0
    %1237 = vmatpush1.bf16.msra.mxu0 0
    %1238 = vmatprep.subr.bf16.mxu0 0
    %1239 = vmatpush1.bf16.msra.mxu0 0
    %1240 = vmatprep.subr.bf16.mxu0 0
    %1241 = vmatpush1.bf16.msra.mxu0 0
    %1242 = vmatprep.subr.bf16.mxu0 0
    %1243 = vmatpush1.bf16.msra.mxu0 0
    %1244 = vmatprep.subr.bf16.mxu0 0
    %1245 = vmatpush1.bf16.msra.mxu0 0
    %1246 = vmatprep.subr.bf16.mxu0 0
    %1247 = vmatpush1.bf16.msra.mxu0 0
    %1248 = vmatprep.subr.bf16.mxu0 0
    %1249 = vmatpush1.bf16.msra.mxu0 0
    %1250 = vmatprep.subr.bf16.mxu0 0
    %1251 = vmatpush1.bf16.msra.mxu0 0
    %1252 = vmatprep.subr.bf16.mxu0 0
    %1253 = vmatpush1.bf16.msra.mxu0 0
    %1254 = vmatprep.mubr.bf16.mxu0 0
    %1255 = vmatmul.mubr.bf16.gmra.mrb[0].mxu0 %v1217
    %v1256 = vpop.f32.mrb[0].mxu0
    %v1257 = vadd.f32 0.0, %v1256
    %v1258 = vpop.f32.mrb[0].mxu0
    %v1259 = vpop.f32.mrb[0].mxu0
    %v1260 = vpop.f32.mrb[0].mxu0
    %1261 = vdwg.mxu0
    %1264 = vrot.lane.b32.xlu0 %v769, 16
    %v1265 = vpop.permute.xlu0 %1264
    %1266 = vrot.lane.b32.xlu0 %v817, 16
    %v1267 = vpop.permute.xlu0 %1266
    %1272 = vrot.lane.b32.xlu0 %v989, 32
    %v1273 = vpop.permute.xlu0 %1272
    %1274 = vrot.lane.b32.xlu0 %v1037, 32
    %v1275 = vpop.permute.xlu0 %1274
    %1280 = vrot.lane.b32.xlu0 %v1209, 48
    %v1281 = vpop.permute.xlu0 %1280
    %1282 = vrot.lane.b32.xlu0 %v1257, 48
    %v1283 = vpop.permute.xlu0 %1282
    %v1286 = vsel %vm388, %v551, %v1265
    %v1287 = vsel %vm388, %v597, %v1267
    %vm1288 = vcmask 261120
    %v1289 = vsel %vm1288, %v1286, %v1273
    %v1290 = vsel %vm1288, %v1287, %v1275
    %vm1291 = vcmask 392192
    %v1292 = vsel %vm1291, %v1289, %v1281
    %v1293 = vsel %vm1291, %v1290, %v1283
    %v1294 = vpack.c.bf16 %v1293, %v1292
    %v1295 = vld [vmem:[#allocation11] sm:$0xf]
    %v1296 = vld [vmem:[#allocation11 + $0x4] sm:$0xf]
    %v1297 = vld [vmem:[#allocation11 + $0x8] sm:$0xf]
    %v1298 = vld [vmem:[#allocation11 + $0xc] sm:$0xf]
    %v1299 = vld [vmem:[#allocation11 + $0x10] sm:$0xf]
    %v1300 = vld [vmem:[#allocation11 + $0x14] sm:$0xf]
    %v1301 = vld [vmem:[#allocation11 + $0x18] sm:$0xf]
    %v1302 = vld [vmem:[#allocation11 + $0x1c] sm:$0xf]
    %v1311 = vunpack.c.l.b16 %v1295
    %v1312 = vunpack.c.l.b16 %v1296
    %v1313 = vunpack.c.l.b16 %v1297
    %v1314 = vunpack.c.l.b16 %v1298
    %v1315 = vunpack.c.l.b16 %v1299
    %v1316 = vunpack.c.l.b16 %v1300
    %v1317 = vunpack.c.l.b16 %v1301
    %v1318 = vunpack.c.l.b16 %v1302
    %v1319 = vpack.c.b16 %v1312, %v1311
    %v1320 = vpack.c.b16 %v1314, %v1313
    %v1321 = vpack.c.b16 %v1316, %v1315
    %v1322 = vpack.c.b16 %v1318, %v1317
    %v1328 = vsel %vm210, %v1294, 0
    %1330 = vmatprep.subr.bf16.mxu0 0
    %1331 = vmatpush1.bf16.msra.mxu0 %v1319
    %1332 = vmatprep.subr.bf16.mxu0 0
    %1333 = vmatpush1.bf16.msra.mxu0 %v1320
    %1334 = vmatprep.subr.bf16.mxu0 0
    %1335 = vmatpush1.bf16.msra.mxu0 %v1321
    %1336 = vmatprep.subr.bf16.mxu0 0
    %1337 = vmatpush1.bf16.msra.mxu0 %v1322
    %1338 = vmatprep.subr.bf16.mxu0 0
    %1339 = vmatpush1.bf16.msra.mxu0 0
    %1340 = vmatprep.subr.bf16.mxu0 0
    %1341 = vmatpush1.bf16.msra.mxu0 0
    %1342 = vmatprep.subr.bf16.mxu0 0
    %1343 = vmatpush1.bf16.msra.mxu0 0
    %1344 = vmatprep.subr.bf16.mxu0 0
    %1345 = vmatpush1.bf16.msra.mxu0 0
    %1346 = vmatprep.subr.bf16.mxu0 0
    %1347 = vmatpush1.bf16.msra.mxu0 0
    %1348 = vmatprep.subr.bf16.mxu0 0
    %1349 = vmatpush1.bf16.msra.mxu0 0
    %1350 = vmatprep.subr.bf16.mxu0 0
    %1351 = vmatpush1.bf16.msra.mxu0 0
    %1352 = vmatprep.subr.bf16.mxu0 0
    %1353 = vmatpush1.bf16.msra.mxu0 0
    %1354 = vmatprep.subr.bf16.mxu0 0
    %1355 = vmatpush1.bf16.msra.mxu0 0
    %1356 = vmatprep.subr.bf16.mxu0 0
    %1357 = vmatpush1.bf16.msra.mxu0 0
    %1358 = vmatprep.subr.bf16.mxu0 0
    %1359 = vmatpush1.bf16.msra.mxu0 0
    %1360 = vmatprep.subr.bf16.mxu0 0
    %1361 = vmatpush1.bf16.msra.mxu0 0
    %1362 = vmatprep.mubr.bf16.mxu0 0
    %1363 = vmatmul.mubr.bf16.gmra.mrb[0].mxu0 %v1328
    %v1364 = vpop.f32.mrb[0].mxu0
    %v1365 = vadd.f32 0.0, %v1364
    %v1366 = vpop.f32.mrb[0].mxu0
    %v1367 = vpop.f32.mrb[0].mxu0
    %v1368 = vadd.f32 0.0, %v1367
    %v1369 = vpop.f32.mrb[0].mxu0
    %1370 = vdwg.mxu0
    %v1371 = vadd.f32 %v206, %v1365
    %v1372 = vadd.f32 %v207, %v1368
    %v1373 = vld [vmem:[#allocation13] sm:$0x1]
    %v1375 = vlaneseq
    %v1376 = vshrl.u32 %v1375, 7
    %v1377 = vsub.s32 0, %v1376
    %v1378 = vrot.slane %v1373, %v1377
    %v1380 = vadd.f32 %v1371, %v1378
    %v1381 = vadd.f32 %v1372, %v1378
    %v1382 = vld [vmem:[#allocation14] sm:$0x1]
    %v1383 = vld [vmem:[#allocation16] sm:$0x1]
    %v1384 = vsel %vm210, %v1380, 0.0
    %1385 = vadd.xlane.f32.xlu0 %v1384
    %v1386 = vpop.xlane.xlu0 %1385
    %v1387 = vsel %vm210, %v1381, 0.0
    %1388 = vadd.xlane.f32.xlu0 %v1387
    %v1389 = vpop.xlane.xlu0 %1388
    %v1390 = vmul.f32 %v1386, %v217
    %v1391 = vmul.f32 %v1389, %v217
    %v1392 = vsub.f32 %v1380, %v1390
    %v1393 = vsub.f32 %v1381, %v1391
    %v1394 = vmul.f32 %v1392, %v1392
    %v1395 = vmul.f32 %v1393, %v1393
    %v1396 = vsel %vm210, %v1394, 0.0
    %1397 = vadd.xlane.f32.xlu0 %v1396
    %v1398 = vpop.xlane.xlu0 %1397
    %v1399 = vsel %vm210, %v1395, 0.0
    %1400 = vadd.xlane.f32.xlu0 %v1399
    %v1401 = vpop.xlane.xlu0 %1400
    %v1402 = vmul.f32 %v1398, %v217
    %v1403 = vmul.f32 %v1401, %v217
    %v1404 = vadd.f32 %v1402, 1e-05
    %v1405 = vadd.f32 %v1403, 1e-05
    %v1406 = vrsqrt.pop %v1404
    %v1407 = vrsqrt.pop %v1405
    %v1408 = vmul.f32 %v1392, %v1406
    %v1409 = vmul.f32 %v1393, %v1407
    %v1411 = vlaneseq
    %v1412 = vshrl.u32 %v1411, 7
    %v1413 = vsub.s32 0, %v1412
    %v1414 = vrot.slane %v1382, %v1413
    %v1416 = vmul.f32 %v1408, %v1414
    %v1417 = vmul.f32 %v1409, %v1414
    %v1419 = vlaneseq
    %v1420 = vshrl.u32 %v1419, 7
    %v1421 = vsub.s32 0, %v1420
    %v1422 = vrot.slane %v1383, %v1421
    %v1424 = vadd.f32 %v1416, %v1422
    %v1425 = vadd.f32 %v1417, %v1422
    %v1426 = vpack.c.bf16 %v1425, %v1424
    %v1427 = vld [vmem:[#allocation17] sm:$0xff]
    %v1428 = vld [vmem:[#allocation17 + $0x8] sm:$0xff]
    %v1429 = vld [vmem:[#allocation17 + $0x10] sm:$0xff]
    %v1430 = vld [vmem:[#allocation17 + $0x18] sm:$0xff]
    %v1431 = vld [vmem:[#allocation17 + $0x20] sm:$0xff]
    %v1432 = vld [vmem:[#allocation17 + $0x28] sm:$0xff]
    %v1433 = vld [vmem:[#allocation17 + $0x30] sm:$0xff]
    %v1434 = vld [vmem:[#allocation17 + $0x38] sm:$0xff]
    %v1435 = vld [vmem:[#allocation19] sm:$0x3]
    %v1437 = vlaneseq
    %v1438 = vshrl.u32 %v1437, 7
    %v1439 = vsub.s32 0, %v1438
    %v1440 = vrot.slane %v1435, %v1439
    %v1441 = vlaneseq
    %v1442 = vshrl.u32 %v1441, 7
    %v1443 = vsub.s32 1, %v1442
    %v1444 = vrot.slane %v1435, %v1443
    %v1455 = vunpack.c.l.b16 %v1427
    %v1456 = vunpack.c.h.b16 %v1427
    %v1457 = vunpack.c.l.b16 %v1428
    %v1458 = vunpack.c.h.b16 %v1428
    %v1459 = vunpack.c.l.b16 %v1429
    %v1460 = vunpack.c.h.b16 %v1429
    %v1461 = vunpack.c.l.b16 %v1430
    %v1462 = vunpack.c.h.b16 %v1430
    %v1463 = vunpack.c.l.b16 %v1431
    %v1464 = vunpack.c.h.b16 %v1431
    %v1465 = vunpack.c.l.b16 %v1432
    %v1466 = vunpack.c.h.b16 %v1432
    %v1467 = vunpack.c.l.b16 %v1433
    %v1468 = vunpack.c.h.b16 %v1433
    %v1469 = vunpack.c.l.b16 %v1434
    %v1470 = vunpack.c.h.b16 %v1434
    %v1471 = vpack.c.b16 %v1457, %v1455
    %v1472 = vpack.c.b16 %v1458, %v1456
    %v1473 = vpack.c.b16 %v1461, %v1459
    %v1474 = vpack.c.b16 %v1462, %v1460
    %v1475 = vpack.c.b16 %v1465, %v1463
    %v1476 = vpack.c.b16 %v1466, %v1464
    %v1477 = vpack.c.b16 %v1469, %v1467
    %v1478 = vpack.c.b16 %v1470, %v1468
    %v1488 = vsel %vm210, %v1426, 0
    %1490 = vmatprep.subr.bf16.mxu0 %v1472
    %1491 = vmatpush1.bf16.msra.mxu0 %v1471
    %1492 = vmatprep.subr.bf16.mxu0 %v1474
    %1493 = vmatpush1.bf16.msra.mxu0 %v1473
    %1494 = vmatprep.subr.bf16.mxu0 %v1476
    %1495 = vmatpush1.bf16.msra.mxu0 %v1475
    %1496 = vmatprep.subr.bf16.mxu0 %v1478
    %1497 = vmatpush1.bf16.msra.mxu0 %v1477
    %1498 = vmatprep.subr.bf16.mxu0 0
    %1499 = vmatpush1.bf16.msra.mxu0 0
    %1500 = vmatprep.subr.bf16.mxu0 0
    %1501 = vmatpush1.bf16.msra.mxu0 0
    %1502 = vmatprep.subr.bf16.mxu0 0
    %1503 = vmatpush1.bf16.msra.mxu0 0
    %1504 = vmatprep.subr.bf16.mxu0 0
    %1505 = vmatpush1.bf16.msra.mxu0 0
    %1506 = vmatprep.subr.bf16.mxu0 0
    %1507 = vmatpush1.bf16.msra.mxu0 0
    %1508 = vmatprep.subr.bf16.mxu0 0
    %1509 = vmatpush1.bf16.msra.mxu0 0
    %1510 = vmatprep.subr.bf16.mxu0 0
    %1511 = vmatpush1.bf16.msra.mxu0 0
    %1512 = vmatprep.subr.bf16.mxu0 0
    %1513 = vmatpush1.bf16.msra.mxu0 0
    %1514 = vmatprep.subr.bf16.mxu0 0
    %1515 = vmatpush1.bf16.msra.mxu0 0
    %1516 = vmatprep.subr.bf16.mxu0 0
    %1517 = vmatpush1.bf16.msra.mxu0 0
    %1518 = vmatprep.subr.bf16.mxu0 0
    %1519 = vmatpush1.bf16.msra.mxu0 0
    %1520 = vmatprep.subr.bf16.mxu0 0
    %1521 = vmatpush1.bf16.msra.mxu0 0
    %1522 = vmatprep.mubr.bf16.mxu0 0
    %1523 = vmatmul.mubr.bf16.gmra.mrb[0].mxu0 %v1488
    %v1524 = vpop.f32.mrb[0].mxu0
    %v1525 = vadd.f32 %v1440, %v1524
    %v1526 = vpop.f32.mrb[0].mxu0
    %v1527 = vadd.f32 %v1444, %v1526
    %v1528 = vpop.f32.mrb[0].mxu0
    %v1529 = vadd.f32 %v1440, %v1528
    %v1530 = vpop.f32.mrb[0].mxu0
    %v1531 = vadd.f32 %v1444, %v1530
    %1532 = vdwg.mxu0
    %v1533 = vmul.f32 %v1525, 1.702
    %v1534 = vmul.f32 %v1527, 1.702
    %v1535 = vmul.f32 %v1529, 1.702
    %v1536 = vmul.f32 %v1531, 1.702
    %v1537 = vxor.u32 %v1533, 2147483648
    %v1538 = vxor.u32 %v1534, 2147483648
    %v1539 = vxor.u32 %v1535, 2147483648
    %v1540 = vxor.u32 %v1536, 2147483648
    %v1541 = vmul.f32 %v1537, 1.442695
    %v1542 = vpow.pop %v1541
    %v1543 = vmul.f32 %v1538, 1.442695
    %v1544 = vpow.pop %v1543
    %v1545 = vmul.f32 %v1539, 1.442695
    %v1546 = vpow.pop %v1545
    %v1547 = vmul.f32 %v1540, 1.442695
    %v1548 = vpow.pop %v1547
    %v1549 = vadd.f32 %v1542, 1.0
    %v1550 = vadd.f32 %v1544, 1.0
    %v1551 = vadd.f32 %v1546, 1.0
    %v1552 = vadd.f32 %v1548, 1.0
    %v1553 = vrcp.pop %v1549
    %v1554 = vmul.f32 1.0, %v1553
    %v1555 = vrcp.pop %v1550
    %v1556 = vmul.f32 1.0, %v1555
    %v1557 = vrcp.pop %v1551
    %v1558 = vmul.f32 1.0, %v1557
    %v1559 = vrcp.pop %v1552
    %v1560 = vmul.f32 1.0, %v1559
    %v1561 = vmul.f32 %v1525, %v1554
    %v1562 = vmul.f32 %v1527, %v1556
    %v1563 = vmul.f32 %v1529, %v1558
    %v1564 = vmul.f32 %v1531, %v1560
    %v1565 = vpack.c.bf16 %v1563, %v1561
    %v1566 = vpack.c.bf16 %v1564, %v1562
    %v1567 = vld [vmem:[#allocation20] sm:$0xf]
    %v1568 = vld [vmem:[#allocation20 + $0x4] sm:$0xf]
    %v1569 = vld [vmem:[#allocation20 + $0x8] sm:$0xf]
    %v1570 = vld [vmem:[#allocation20 + $0xc] sm:$0xf]
    %v1571 = vld [vmem:[#allocation20 + $0x10] sm:$0xf]
    %v1572 = vld [vmem:[#allocation20 + $0x14] sm:$0xf]
    %v1573 = vld [vmem:[#allocation20 + $0x18] sm:$0xf]
    %v1574 = vld [vmem:[#allocation20 + $0x1c] sm:$0xf]
    %v1575 = vld [vmem:[#allocation20 + $0x20] sm:$0xf]
    %v1576 = vld [vmem:[#allocation20 + $0x24] sm:$0xf]
    %v1577 = vld [vmem:[#allocation20 + $0x28] sm:$0xf]
    %v1578 = vld [vmem:[#allocation20 + $0x2c] sm:$0xf]
    %v1579 = vld [vmem:[#allocation20 + $0x30] sm:$0xf]
    %v1580 = vld [vmem:[#allocation20 + $0x34] sm:$0xf]
    %v1581 = vld [vmem:[#allocation20 + $0x38] sm:$0xf]
    %v1582 = vld [vmem:[#allocation20 + $0x3c] sm:$0xf]
    %v1583 = vld [vmem:[#allocation20 + $0x40] sm:$0xf]
    %v1584 = vld [vmem:[#allocation20 + $0x44] sm:$0xf]
    %v1585 = vld [vmem:[#allocation20 + $0x48] sm:$0xf]
    %v1586 = vld [vmem:[#allocation20 + $0x4c] sm:$0xf]
    %v1587 = vld [vmem:[#allocation20 + $0x50] sm:$0xf]
    %v1588 = vld [vmem:[#allocation20 + $0x54] sm:$0xf]
    %v1589 = vld [vmem:[#allocation20 + $0x58] sm:$0xf]
    %v1590 = vld [vmem:[#allocation20 + $0x5c] sm:$0xf]
    %v1591 = vld [vmem:[#allocation20 + $0x60] sm:$0xf]
    %v1592 = vld [vmem:[#allocation20 + $0x64] sm:$0xf]
    %v1593 = vld [vmem:[#allocation20 + $0x68] sm:$0xf]
    %v1594 = vld [vmem:[#allocation20 + $0x6c] sm:$0xf]
    %v1595 = vld [vmem:[#allocation20 + $0x70] sm:$0xf]
    %v1596 = vld [vmem:[#allocation20 + $0x74] sm:$0xf]
    %v1597 = vld [vmem:[#allocation20 + $0x78] sm:$0xf]
    %v1598 = vld [vmem:[#allocation20 + $0x7c] sm:$0xf]
    %v1599 = vld [vmem:[#allocation22] sm:$0x1]
    %v1601 = vlaneseq
    %v1602 = vshrl.u32 %v1601, 7
    %v1603 = vsub.s32 0, %v1602
    %v1604 = vrot.slane %v1599, %v1603
    %v1638 = vunpack.c.l.b16 %v1567
    %v1639 = vunpack.c.l.b16 %v1568
    %v1640 = vunpack.c.l.b16 %v1569
    %v1641 = vunpack.c.l.b16 %v1570
    %v1642 = vunpack.c.l.b16 %v1571
    %v1643 = vunpack.c.l.b16 %v1572
    %v1644 = vunpack.c.l.b16 %v1573
    %v1645 = vunpack.c.l.b16 %v1574
    %v1646 = vunpack.c.l.b16 %v1575
    %v1647 = vunpack.c.l.b16 %v1576
    %v1648 = vunpack.c.l.b16 %v1577
    %v1649 = vunpack.c.l.b16 %v1578
    %v1650 = vunpack.c.l.b16 %v1579
    %v1651 = vunpack.c.l.b16 %v1580
    %v1652 = vunpack.c.l.b16 %v1581
    %v1653 = vunpack.c.l.b16 %v1582
    %v1654 = vunpack.c.l.b16 %v1583
    %v1655 = vunpack.c.l.b16 %v1584
    %v1656 = vunpack.c.l.b16 %v1585
    %v1657 = vunpack.c.l.b16 %v1586
    %v1658 = vunpack.c.l.b16 %v1587
    %v1659 = vunpack.c.l.b16 %v1588
    %v1660 = vunpack.c.l.b16 %v1589
    %v1661 = vunpack.c.l.b16 %v1590
    %v1662 = vunpack.c.l.b16 %v1591
    %v1663 = vunpack.c.l.b16 %v1592
    %v1664 = vunpack.c.l.b16 %v1593
    %v1665 = vunpack.c.l.b16 %v1594
    %v1666 = vunpack.c.l.b16 %v1595
    %v1667 = vunpack.c.l.b16 %v1596
    %v1668 = vunpack.c.l.b16 %v1597
    %v1669 = vunpack.c.l.b16 %v1598
    %v1670 = vpack.c.b16 %v1639, %v1638
    %v1671 = vpack.c.b16 %v1641, %v1640
    %v1672 = vpack.c.b16 %v1643, %v1642
    %v1673 = vpack.c.b16 %v1645, %v1644
    %v1674 = vpack.c.b16 %v1647, %v1646
    %v1675 = vpack.c.b16 %v1649, %v1648
    %v1676 = vpack.c.b16 %v1651, %v1650
    %v1677 = vpack.c.b16 %v1653, %v1652
    %v1678 = vpack.c.b16 %v1655, %v1654
    %v1679 = vpack.c.b16 %v1657, %v1656
    %v1680 = vpack.c.b16 %v1659, %v1658
    %v1681 = vpack.c.b16 %v1661, %v1660
    %v1682 = vpack.c.b16 %v1663, %v1662
    %v1683 = vpack.c.b16 %v1665, %v1664
    %v1684 = vpack.c.b16 %v1667, %v1666
    %v1685 = vpack.c.b16 %v1669, %v1668
    %1702 = vmatprep.subr.bf16.mxu0 0
    %1703 = vmatpush1.bf16.msra.mxu0 %v1670
    %1704 = vmatprep.subr.bf16.mxu0 0
    %1705 = vmatpush1.bf16.msra.mxu0 %v1671
    %1706 = vmatprep.subr.bf16.mxu0 0
    %1707 = vmatpush1.bf16.msra.mxu0 %v1672
    %1708 = vmatprep.subr.bf16.mxu0 0
    %1709 = vmatpush1.bf16.msra.mxu0 %v1673
    %1710 = vmatprep.subr.bf16.mxu0 0
    %1711 = vmatpush1.bf16.msra.mxu0 %v1674
    %1712 = vmatprep.subr.bf16.mxu0 0
    %1713 = vmatpush1.bf16.msra.mxu0 %v1675
    %1714 = vmatprep.subr.bf16.mxu0 0
    %1715 = vmatpush1.bf16.msra.mxu0 %v1676
    %1716 = vmatprep.subr.bf16.mxu0 0
    %1717 = vmatpush1.bf16.msra.mxu0 %v1677
    %1718 = vmatprep.subr.bf16.mxu0 0
    %1719 = vmatpush1.bf16.msra.mxu0 %v1678
    %1720 = vmatprep.subr.bf16.mxu0 0
    %1721 = vmatpush1.bf16.msra.mxu0 %v1679
    %1722 = vmatprep.subr.bf16.mxu0 0
    %1723 = vmatpush1.bf16.msra.mxu0 %v1680
    %1724 = vmatprep.subr.bf16.mxu0 0
    %1725 = vmatpush1.bf16.msra.mxu0 %v1681
    %1726 = vmatprep.subr.bf16.mxu0 0
    %1727 = vmatpush1.bf16.msra.mxu0 %v1682
    %1728 = vmatprep.subr.bf16.mxu0 0
    %1729 = vmatpush1.bf16.msra.mxu0 %v1683
    %1730 = vmatprep.subr.bf16.mxu0 0
    %1731 = vmatpush1.bf16.msra.mxu0 %v1684
    %1732 = vmatprep.subr.bf16.mxu0 0
    %1733 = vmatpush1.bf16.msra.mxu0 %v1685
    %1734 = vmatprep.mubr.bf16.mxu0 %v1566
    %1735 = vmatmul.mubr.bf16.gmra.mrb[0].mxu0 %v1565
    %v1736 = vpop.f32.mrb[0].mxu0
    %v1737 = vadd.f32 %v1604, %v1736
    %v1738 = vpop.f32.mrb[0].mxu0
    %v1739 = vpop.f32.mrb[0].mxu0
    %v1740 = vadd.f32 %v1604, %v1739
    %v1741 = vpop.f32.mrb[0].mxu0
    %1742 = vdwg.mxu0
    %v1743 = vadd.f32 %v1380, %v1737
    %v1744 = vadd.f32 %v1381, %v1740
    %1745 = vst.msk [vmem:[#allocation23] sm:$0xff] %vm210, %v1743
    %1746 = vst.msk [vmem:[#allocation23 + $0x8] sm:$0xff] %vm210, %v1744
    // Predicated region
    $region106: #{tpu_custom_call.1} parent=1 // pred_check
      _
    $region107: #{tpu_custom_call.1} parent=1 // pred_check_branch
      %1748 = sbr.rel (0) target = $region109
    $region108: #{tpu_custom_call.1} parent=1 // pred_region
      %s1750 = ssub.s32 256, 256
      %1751 = vsyncadd [#allocation4], %s1750
      %s1752 = sshll.u32 [#allocation23], 4
      %s1753 = int_to_ptr.vmem [resolvable:$true] %s1752
      %1758 = dma.vmem_to_hbm [thread:$0]  %s1753, 256, %s13, [#allocation4], 128, 128, 8
    $region109: #{tpu_custom_call.1} parent=1 // pred_fallthru
      _
    // Predicated region
    $region110: #{tpu_custom_call.1} parent=1 // pred_check
      _
    $region111: #{tpu_custom_call.1} parent=1 // pred_check_branch
      %1760 = sbr.rel (0) target = $region113
    $region112: #{tpu_custom_call.1} parent=1 // pred_region
      %1761 = dma.done [#allocation4], 256
    $region113: #{tpu_custom_call.1} parent=1 // pred_fallthru
      _
    %1762 = vsyncpa [#allocation3], 1
    %1763 = vsyncpa [#allocation6], 1
    %1764 = vsyncpa [#allocation9], 1
    %1765 = vsyncpa [#allocation12], 1
    %1766 = vsyncpa [#allocation15], 1
    %1767 = vsyncpa [#allocation18], 1
    %1768 = vsyncpa [#allocation21], 1
    %1769 = vsyncpa [#allocation4], 1

</llo_original>
